<compile_context>
chip_gen: v7x
topology: tpu7x:2x2x1
jax: 0.10.0
libtpu: 0.0.40
codegen_flags: <defaults>
</compile_context>

<pallas_src>
import jax
import jax.numpy as jnp
from jax import lax
from jax.experimental import pallas as pl
from jax.experimental.pallas import tpu as pltpu

K = 25        # conv kernel size
PAD = 12      # "same" padding for stride 1
LANES = 128   # TPU vreg lane width
LOFF = 16     # aligned (multiple-of-8) left offset of the image interior in the scratch


def _round_up(x, m):
    return ((x + m - 1) // m) * m


def _conv_sigmoid_kernel(a_ref, b_ref, x_ref, o_ref, xp_ref):
    # a_ref : (W, K*Wpad) f32 banded weight matrix (VMEM)
    # b_ref : (1,)        f32 bias (SMEM)
    # x_ref : (H, W, NB)  input slab, batch on the lane axis (VMEM)
    # o_ref : (H, W, NB)  output slab (VMEM)
    # xp_ref: (Hp, Wpad, NB) f32 zero-padded image scratch (VMEM, persists across steps)
    H, W, NB = o_ref.shape
    Hp, Wpad, _ = xp_ref.shape

    # Zero only the PAD borders; the interior is fully overwritten below.  Done
    # every step (cheap, overlapped with MXU work) so the kernel is safe when the
    # "parallel" batch axis is sharded across TensorCores on multi-TC chips.
    xp_ref[:PAD, :, :] = jnp.zeros((PAD, Wpad, NB), jnp.float32)
    xp_ref[PAD + H:, :, :] = jnp.zeros((Hp - PAD - H, Wpad, NB), jnp.float32)
    xp_ref[PAD:PAD + H, :LOFF, :] = jnp.zeros((H, LOFF, NB), jnp.float32)
    xp_ref[PAD:PAD + H, LOFF + W:, :] = jnp.zeros((H, Wpad - LOFF - W, NB), jnp.float32)

    # Aligned interior copy (LOFF and Wpad are multiples of 8 -> unmasked stores).
    xp_ref[PAD:PAD + H, LOFF:LOFF + W, :] = x_ref[...].astype(jnp.float32)

    bias = b_ref[0]

    def row_body(h, carry):
        # Contiguous, 8-aligned (K*Wpad, NB) slab for output row h: padded rows [h, h+K).
        slab = xp_ref[pl.ds(h, K), :, :].reshape(K * Wpad, NB)
        row = jnp.dot(a_ref[...], slab,
                      preferred_element_type=jnp.float32,
                      precision=jax.lax.Precision.HIGHEST)       # (W, NB) on the MXU
        o_ref[h, :, :] = jax.nn.sigmoid(row + bias).astype(o_ref.dtype)
        return carry

    lax.fori_loop(0, H, row_body, 0)


def _banded_weight_matrix(weight, W, Wpad):
    """A[w, dy*Wpad + (LOFF - PAD) + w + dx] = weight[dy, dx]; shape (W, K*Wpad)."""
    w2d = weight.reshape(K, K).astype(jnp.float32)
    wi = jnp.arange(W)[:, None, None]                 # (W, 1, 1)
    dy = jnp.arange(K)[None, :, None]                 # (1, K, 1)
    dx = jnp.arange(K)[None, None, :]                 # (1, 1, K)
    cols = dy * Wpad + (LOFF - PAD) + wi + dx         # (W, K, K), unique per row
    rows = jnp.broadcast_to(wi, (W, K, K))
    vals = jnp.broadcast_to(w2d[None, :, :], (W, K, K))
    return jnp.zeros((W, K * Wpad), jnp.float32).at[rows, cols].set(vals)


def simple_conv_forward(x_nchw, weight, bias):
    """x_nchw: (N, 1, H, W); weight: (1, 1, K, K); bias: (1,)."""
    N, C, H, W = x_nchw.shape
    assert C == 1, "SimpleConv has a single input channel"
    Hp = H + 2 * PAD
    Wpad = _round_up(LOFF + W + PAD, 8)               # zero cols both sides, multiple of 8

    a_mat = _banded_weight_matrix(weight, W, Wpad)    # (W, K*Wpad) f32, built once

    # Lane-dense layout: (H, W, N) with batch on the 128-lane axis.  This targets
    # N >= 128 (full lane occupancy per batch block); for tiny N most lanes idle.
    # TODO(synk): add a W-on-lanes im2col variant for the N << 128 regime.
    x = jnp.transpose(x_nchw[:, 0, :, :], (1, 2, 0))  # (H, W, N)
    if N <= LANES:
        NB, Np = N, N                                  # single batch block (full last dim)
    else:
        NB = LANES
        Np = _round_up(N, LANES)
        x = jnp.pad(x, ((0, 0), (0, 0), (0, Np - N)))
    grid_b = Np // NB

    # TODO(synk): for large images, add halo'd H-band tiling (manual DMA of
    # (R+K-1, Wpad, NB) bands from a pl.ANY-space padded input) to bound per-block
    # VMEM on v7x (64 MiB) and give its second TensorCore a parallel axis when
    # grid_b == 1; also tile W / the banded matrix for very wide images.

    out = pl.pallas_call(
        _conv_sigmoid_kernel,
        out_shape=jax.ShapeDtypeStruct((H, W, Np), x_nchw.dtype),
        grid=(grid_b,),
        in_specs=[
            pl.BlockSpec((W, K * Wpad), lambda b: (0, 0)),          # banded weights (VMEM)
            pl.BlockSpec(memory_space=pltpu.MemorySpace.SMEM),      # bias
            pl.BlockSpec((H, W, NB), lambda b: (0, 0, b)),          # image slab
        ],
        out_specs=pl.BlockSpec((H, W, NB), lambda b: (0, 0, b)),
        scratch_shapes=[pltpu.VMEM((Hp, Wpad, NB), jnp.float32)],
        compiler_params=pltpu.CompilerParams(
            dimension_semantics=("parallel",)),
    )(a_mat, bias.astype(jnp.float32), x)

    out = out[:, :, :N]                                             # drop lane padding
    return jnp.transpose(out, (2, 0, 1))[:, None, :, :]             # back to NCHW


def _reference(x_nchw, weight, bias):
    y = lax.conv_general_dilated(
        x_nchw.astype(jnp.float32), weight.astype(jnp.float32),
        window_strides=(1, 1),
        padding=((PAD, PAD), (PAD, PAD)),
        dimension_numbers=("NCHW", "OIHW", "NCHW"),
        precision=lax.Precision.HIGHEST,
    ) + bias.reshape(1, 1, 1, 1)
    return jax.nn.sigmoid(y)


if __name__ == "__main__":
    key = jax.random.PRNGKey(0)
    kx, kw, kb = jax.random.split(key, 3)

    # Deterministic parameter init (Conv2d(1, 1, 25) shapes; PyTorch uses
    # U(-1/sqrt(fan_in), 1/sqrt(fan_in)) with fan_in = 1*25*25).
    bound = 1.0 / 25.0
    weight = jax.random.uniform(kw, (1, 1, K, K), jnp.float32, -bound, bound)
    bias = jax.random.uniform(kb, (1,), jnp.float32, -bound, bound)

    x = jax.random.normal(kx, (2, 1, 16, 16), jnp.float32)

    out = simple_conv_forward(x, weight, bias)
    out = jax.block_until_ready(out)

    ref = _reference(x, weight, bias)
    assert out.shape == (2, 1, 16, 16)
    assert jnp.allclose(out, ref, atol=2e-5, rtol=2e-5), "mismatch vs reference conv"

    print("KERNEL_OK")
</pallas_src>

<mosaic_0001>
module attributes {stable_mosaic.version = 11 : i64} {
  func.func @_conv_sigmoid_kernel(%arg0: i32, %arg1: memref<16x1200xf32, #tpu.memory_space<vmem>>, %arg2: memref<1xf32, #tpu.memory_space<smem>>, %arg3: memref<16x16x2xf32, #tpu.memory_space<vmem>>, %arg4: memref<16x16x2xf32, #tpu.memory_space<vmem>>, %arg5: memref<40x48x2xf32, #tpu.memory_space<vmem>>) attributes {dimension_semantics = [#tpu.dimension_semantics<parallel>], iteration_bounds = array<i64: 1>, scalar_prefetch = 0 : i64, scratch_operands = 1 : i64, tpu.core_type = #tpu.core_type<tc>, window_params = [{pipeline_mode = #tpu.pipeline_mode<synchronous>, transform_indices = @transform_0, window_bounds = array<i64: 16, 1200>}, {transform_indices = @transform_1, window_bounds = array<i64: 1>}, {transform_indices = @transform_2, window_bounds = array<i64: 16, 16, 2>}, {transform_indices = @transform_3, window_bounds = array<i64: 16, 16, 2>}]} {
    %cst = arith.constant 0.000000e+00 : f32
    %0 = vector.broadcast %cst : f32 to vector<12x48x2xf32>
    %c0 = arith.constant 0 : index
    %c0_0 = arith.constant 0 : index
    %c0_1 = arith.constant 0 : index
    %1 = vector.load %arg5[%c0, %c0_0, %c0_1] : memref<40x48x2xf32, #tpu.memory_space<vmem>>, vector<12x48x2xf32>
    tpu.vector_store %arg5[%c0, %c0_0, %c0_1], %0 {strides = array<i32>} : memref<40x48x2xf32, #tpu.memory_space<vmem>>, vector<12x48x2xf32>,
    %cst_2 = arith.constant 0.000000e+00 : f32
    %2 = vector.broadcast %cst_2 : f32 to vector<12x48x2xf32>
    %c28 = arith.constant 28 : index
    %c0_3 = arith.constant 0 : index
    %c0_4 = arith.constant 0 : index
    %3 = vector.load %arg5[%c28, %c0_3, %c0_4] : memref<40x48x2xf32, #tpu.memory_space<vmem>>, vector<12x48x2xf32>
    tpu.vector_store %arg5[%c28, %c0_3, %c0_4], %2 {strides = array<i32>} : memref<40x48x2xf32, #tpu.memory_space<vmem>>, vector<12x48x2xf32>,
    %cst_5 = arith.constant 0.000000e+00 : f32
    %4 = vector.broadcast %cst_5 : f32 to vector<16x16x2xf32>
    %c12 = arith.constant 12 : index
    %c0_6 = arith.constant 0 : index
    %c0_7 = arith.constant 0 : index
    %5 = vector.load %arg5[%c12, %c0_6, %c0_7] : memref<40x48x2xf32, #tpu.memory_space<vmem>>, vector<16x16x2xf32>
    tpu.vector_store %arg5[%c12, %c0_6, %c0_7], %4 {strides = array<i32>} : memref<40x48x2xf32, #tpu.memory_space<vmem>>, vector<16x16x2xf32>,
    %cst_8 = arith.constant 0.000000e+00 : f32
    %6 = vector.broadcast %cst_8 : f32 to vector<16x16x2xf32>
    %c12_9 = arith.constant 12 : index
    %c32 = arith.constant 32 : index
    %c0_10 = arith.constant 0 : index
    %7 = vector.load %arg5[%c12_9, %c32, %c0_10] : memref<40x48x2xf32, #tpu.memory_space<vmem>>, vector<16x16x2xf32>
    tpu.vector_store %arg5[%c12_9, %c32, %c0_10], %6 {strides = array<i32>} : memref<40x48x2xf32, #tpu.memory_space<vmem>>, vector<16x16x2xf32>,
    %c0_11 = arith.constant 0 : index
    %c0_12 = arith.constant 0 : index
    %c0_13 = arith.constant 0 : index
    %8 = vector.load %arg3[%c0_11, %c0_12, %c0_13] : memref<16x16x2xf32, #tpu.memory_space<vmem>>, vector<16x16x2xf32>
    %c12_14 = arith.constant 12 : index
    %c16 = arith.constant 16 : index
    %c0_15 = arith.constant 0 : index
    %9 = vector.load %arg5[%c12_14, %c16, %c0_15] : memref<40x48x2xf32, #tpu.memory_space<vmem>>, vector<16x16x2xf32>
    tpu.vector_store %arg5[%c12_14, %c16, %c0_15], %8 {strides = array<i32>} : memref<40x48x2xf32, #tpu.memory_space<vmem>>, vector<16x16x2xf32>,
    %c0_16 = arith.constant 0 : index
    %10 = memref.load %arg2[%c0_16] : memref<1xf32, #tpu.memory_space<smem>>
    %c0_i32 = arith.constant 0 : i32
    %c16_i32 = arith.constant 16 : i32
    %11 = arith.addi %c0_i32, %c16_i32 : i32
    %c1_i32 = arith.constant 1 : i32
    scf.for %arg6 = %c0_i32 to %11 step %c1_i32  : i32 {
      %12 = arith.index_cast %arg6 : i32 to index
      %c0_18 = arith.constant 0 : index
      %c0_19 = arith.constant 0 : index
      %13 = vector.load %arg5[%12, %c0_18, %c0_19] : memref<40x48x2xf32, #tpu.memory_space<vmem>>, vector<25x48x2xf32>
      %14 = vector.shape_cast %13 : vector<25x48x2xf32> to vector<1200x2xf32>
      %c0_20 = arith.constant 0 : index
      %c0_21 = arith.constant 0 : index
      %15 = vector.load %arg1[%c0_20, %c0_21] : memref<16x1200xf32, #tpu.memory_space<vmem>>, vector<16x1200xf32>
      %cst_22 = arith.constant dense<0.000000e+00> : vector<16x2xf32>
      %16 = tpu.matmul %15, %14, %cst_22 {dimension_numbers = #tpu.dot_dimension_numbers<[1], [0], [0], [1], [0, 0, 1, 1], [], []>, precision = #tpu.contract_precision<fp32>} : vector<16x1200xf32>, vector<1200x2xf32>, vector<16x2xf32> -> vector<16x2xf32>
      %17 = vector.broadcast %10 : f32 to vector<16x2xf32>
      %18 = arith.addf %16, %17 : vector<16x2xf32>
      %19 = arith.negf %18 : vector<16x2xf32>
      %20 = math.exp %19 : vector<16x2xf32>
      %cst_23 = arith.constant 1.000000e+00 : f32
      %21 = vector.broadcast %cst_23 : f32 to vector<16x2xf32>
      %22 = arith.addf %21, %20 : vector<16x2xf32>
      %23 = arith.divf %21, %22 : vector<16x2xf32>
      %24 = arith.index_cast %arg6 : i32 to index
      %c0_24 = arith.constant 0 : index
      %c0_25 = arith.constant 0 : index
      %25 = vector.load %arg4[%24, %c0_24, %c0_25] : memref<16x16x2xf32, #tpu.memory_space<vmem>>, vector<1x16x2xf32>
      %26 = vector.shape_cast %25 : vector<1x16x2xf32> to vector<16x2xf32>
      %27 = vector.shape_cast %23 : vector<16x2xf32> to vector<1x16x2xf32>
      tpu.vector_store %arg4[%24, %c0_24, %c0_25], %27 {strides = array<i32>} : memref<16x16x2xf32, #tpu.memory_space<vmem>>, vector<1x16x2xf32>,
    }
    %c16_i32_17 = arith.constant 16 : i32
    return
  }
  func.func @transform_0(%arg0: i32) -> (i32, i32) {
    %c0_i32 = arith.constant 0 : i32
    %c0_i32_0 = arith.constant 0 : i32
    %c0_i32_1 = arith.constant 0 : i32
    return %c0_i32, %c0_i32_0 : i32, i32
  }
  func.func @transform_1(%arg0: i32) -> i32 {
    %c0_i32 = arith.constant 0 : i32
    %c0_i32_0 = arith.constant 0 : i32
    return %c0_i32 : i32
  }
  func.func @transform_2(%arg0: i32) -> (i32, i32, i32) {
    %c0_i32 = arith.constant 0 : i32
    %c0_i32_0 = arith.constant 0 : i32
    %c0_i32_1 = arith.constant 0 : i32
    return %c0_i32, %c0_i32_0, %arg0 : i32, i32, i32
  }
  func.func @transform_3(%arg0: i32) -> (i32, i32, i32) {
    %c0_i32 = arith.constant 0 : i32
    %c0_i32_0 = arith.constant 0 : i32
    %c0_i32_1 = arith.constant 0 : i32
    return %c0_i32, %c0_i32_0, %arg0 : i32, i32, i32
  }
}

</mosaic_0001>

<llo_original>
// kernel: tpu_custom_call.1
$region0: #{tpu_custom_call.1}
  #allocation0 [shape = 'u32[]', space=smem, size = 0x4, offset = 0x4, fixed_abs, tag = 'smem constant byte address 0x4 - core index']
  #allocation1 [shape = 'u32[144,128]{1,0:T(1,128)}', space=vmem, size = 0x12000, scoped, tag = 'internal scratch']
  #allocation2 [shape = 'f32[40,48,2]{2,1,0:T(8,128)}', space=vmem, size = 0xf0000, scoped, tag = 'scratch operand']
  #allocation3 [shape = 'f32[1]{0:T(128)S(6)}', space=smem, size = 0x200, scoped, tag = 'scoped memory for tpu_custom_call.1']
  %s0 = inlined_call_operand.vmem [shape: f32[16,1200], index: 0, kind: input, shape index: {}]
  %s1 = inlined_call_operand.<no memory space> [shape: f32[1], index: 1, kind: input, shape index: {}]
  %s2 = inlined_call_operand.vmem [shape: f32[16,16,2], index: 2, kind: input, shape index: {}]
  %s3 = inlined_call_operand.vmem [shape: f32[16,16,2], index: 3, kind: output, shape index: {}]
  %s4 = sld [smem:[#allocation0]]
  $region29: #{tpu_custom_call.1} parent=0
    _
  %s6 = ssub.s32 1, %s4
  %s7 = scalar_select 0, %s6, %s4
  %8 = sst [smem:[#allocation3]] %s1
  // Predicated region
  $region2: #{tpu_custom_call.1} parent=0 // pred_check
    _
  $region3: #{tpu_custom_call.1} parent=0 // pred_check_branch
    %10 = sbr.rel (0) target = $region5
  $region4: #{tpu_custom_call.1} parent=0 // pred_region
    _
  $region5: #{tpu_custom_call.1} parent=0 // pred_fallthru
    _
  // Predicated region
  $region6: #{tpu_custom_call.1} parent=0 // pred_check
    _
  $region7: #{tpu_custom_call.1} parent=0 // pred_check_branch
    %12 = sbr.rel (0) target = $region9
  $region8: #{tpu_custom_call.1} parent=0 // pred_region
    _
  $region9: #{tpu_custom_call.1} parent=0 // pred_fallthru
    _
  // Predicated region
  $region10: #{tpu_custom_call.1} parent=0 // pred_check
    _
  $region11: #{tpu_custom_call.1} parent=0 // pred_check_branch
    %14 = sbr.rel (0) target = $region13
  $region12: #{tpu_custom_call.1} parent=0 // pred_region
    _
  $region13: #{tpu_custom_call.1} parent=0 // pred_fallthru
    _
  %vm15 = vcmask 15360
  %16 = vst.msk [vmem:[#allocation2] sm:$0xff] %vm15, 0.0
  %17 = vst.msk [vmem:[#allocation2 + $0x8] sm:$0xff] %vm15, 0.0
  %18 = vst.msk [vmem:[#allocation2 + $0x10] sm:$0xff] %vm15, 0.0
  %19 = vst.msk [vmem:[#allocation2 + $0x18] sm:$0xff] %vm15, 0.0
  %20 = vst.msk [vmem:[#allocation2 + $0x20] sm:$0xff] %vm15, 0.0
  %21 = vst.msk [vmem:[#allocation2 + $0x28] sm:$0xff] %vm15, 0.0
  %22 = vst.msk [vmem:[#allocation2 + $0x30] sm:$0xff] %vm15, 0.0
  %23 = vst.msk [vmem:[#allocation2 + $0x38] sm:$0xff] %vm15, 0.0
  %24 = vst.msk [vmem:[#allocation2 + $0x40] sm:$0xff] %vm15, 0.0
  %25 = vst.msk [vmem:[#allocation2 + $0x48] sm:$0xff] %vm15, 0.0
  %26 = vst.msk [vmem:[#allocation2 + $0x50] sm:$0xff] %vm15, 0.0
  %27 = vst.msk [vmem:[#allocation2 + $0x58] sm:$0xff] %vm15, 0.0
  %28 = vst.msk [vmem:[#allocation2 + $0x60] sm:$0xff] %vm15, 0.0
  %29 = vst.msk [vmem:[#allocation2 + $0x68] sm:$0xff] %vm15, 0.0
  %30 = vst.msk [vmem:[#allocation2 + $0x70] sm:$0xff] %vm15, 0.0
  %31 = vst.msk [vmem:[#allocation2 + $0x78] sm:$0xff] %vm15, 0.0
  %32 = vst.msk [vmem:[#allocation2 + $0x80] sm:$0xff] %vm15, 0.0
  %33 = vst.msk [vmem:[#allocation2 + $0x88] sm:$0xff] %vm15, 0.0
  %34 = vst.msk [vmem:[#allocation2 + $0x90] sm:$0xff] %vm15, 0.0
  %35 = vst.msk [vmem:[#allocation2 + $0x98] sm:$0xff] %vm15, 0.0
  %36 = vst.msk [vmem:[#allocation2 + $0xa0] sm:$0xff] %vm15, 0.0
  %37 = vst.msk [vmem:[#allocation2 + $0xa8] sm:$0xff] %vm15, 0.0
  %38 = vst.msk [vmem:[#allocation2 + $0xb0] sm:$0xff] %vm15, 0.0
  %39 = vst.msk [vmem:[#allocation2 + $0xb8] sm:$0xff] %vm15, 0.0
  %40 = vst.msk [vmem:[#allocation2 + $0xc0] sm:$0xff] %vm15, 0.0
  %41 = vst.msk [vmem:[#allocation2 + $0xc8] sm:$0xff] %vm15, 0.0
  %42 = vst.msk [vmem:[#allocation2 + $0xd0] sm:$0xff] %vm15, 0.0
  %43 = vst.msk [vmem:[#allocation2 + $0xd8] sm:$0xff] %vm15, 0.0
  %44 = vst.msk [vmem:[#allocation2 + $0xe0] sm:$0xff] %vm15, 0.0
  %45 = vst.msk [vmem:[#allocation2 + $0xe8] sm:$0xff] %vm15, 0.0
  %46 = vst.msk [vmem:[#allocation2 + $0xf0] sm:$0xff] %vm15, 0.0
  %47 = vst.msk [vmem:[#allocation2 + $0xf8] sm:$0xff] %vm15, 0.0
  %48 = vst.msk [vmem:[#allocation2 + $0x100] sm:$0xff] %vm15, 0.0
  %49 = vst.msk [vmem:[#allocation2 + $0x108] sm:$0xff] %vm15, 0.0
  %50 = vst.msk [vmem:[#allocation2 + $0x110] sm:$0xff] %vm15, 0.0
  %51 = vst.msk [vmem:[#allocation2 + $0x118] sm:$0xff] %vm15, 0.0
  %52 = vst.msk [vmem:[#allocation2 + $0x120] sm:$0xff] %vm15, 0.0
  %53 = vst.msk [vmem:[#allocation2 + $0x128] sm:$0xff] %vm15, 0.0
  %54 = vst.msk [vmem:[#allocation2 + $0x130] sm:$0xff] %vm15, 0.0
  %55 = vst.msk [vmem:[#allocation2 + $0x138] sm:$0xff] %vm15, 0.0
  %56 = vst.msk [vmem:[#allocation2 + $0x140] sm:$0xff] %vm15, 0.0
  %57 = vst.msk [vmem:[#allocation2 + $0x148] sm:$0xff] %vm15, 0.0
  %58 = vst.msk [vmem:[#allocation2 + $0x150] sm:$0xff] %vm15, 0.0
  %59 = vst.msk [vmem:[#allocation2 + $0x158] sm:$0xff] %vm15, 0.0
  %60 = vst.msk [vmem:[#allocation2 + $0x160] sm:$0xff] %vm15, 0.0
  %61 = vst.msk [vmem:[#allocation2 + $0x168] sm:$0xff] %vm15, 0.0
  %62 = vst.msk [vmem:[#allocation2 + $0x170] sm:$0xff] %vm15, 0.0
  %63 = vst.msk [vmem:[#allocation2 + $0x178] sm:$0xff] %vm15, 0.0
  %64 = vst.msk [vmem:[#allocation2 + $0x180] sm:$0xff] %vm15, 0.0
  %65 = vst.msk [vmem:[#allocation2 + $0x188] sm:$0xff] %vm15, 0.0
  %66 = vst.msk [vmem:[#allocation2 + $0x190] sm:$0xff] %vm15, 0.0
  %67 = vst.msk [vmem:[#allocation2 + $0x198] sm:$0xff] %vm15, 0.0
  %68 = vst.msk [vmem:[#allocation2 + $0x1a0] sm:$0xff] %vm15, 0.0
  %69 = vst.msk [vmem:[#allocation2 + $0x1a8] sm:$0xff] %vm15, 0.0
  %70 = vst.msk [vmem:[#allocation2 + $0x1b0] sm:$0xff] %vm15, 0.0
  %71 = vst.msk [vmem:[#allocation2 + $0x1b8] sm:$0xff] %vm15, 0.0
  %72 = vst.msk [vmem:[#allocation2 + $0x1c0] sm:$0xff] %vm15, 0.0
  %73 = vst.msk [vmem:[#allocation2 + $0x1c8] sm:$0xff] %vm15, 0.0
  %74 = vst.msk [vmem:[#allocation2 + $0x1d0] sm:$0xff] %vm15, 0.0
  %75 = vst.msk [vmem:[#allocation2 + $0x1d8] sm:$0xff] %vm15, 0.0
  %76 = vst.msk [vmem:[#allocation2 + $0x1e0] sm:$0xff] %vm15, 0.0
  %77 = vst.msk [vmem:[#allocation2 + $0x1e8] sm:$0xff] %vm15, 0.0
  %78 = vst.msk [vmem:[#allocation2 + $0x1f0] sm:$0xff] %vm15, 0.0
  %79 = vst.msk [vmem:[#allocation2 + $0x1f8] sm:$0xff] %vm15, 0.0
  %80 = vst.msk [vmem:[#allocation2 + $0x200] sm:$0xff] %vm15, 0.0
  %81 = vst.msk [vmem:[#allocation2 + $0x208] sm:$0xff] %vm15, 0.0
  %82 = vst.msk [vmem:[#allocation2 + $0x210] sm:$0xff] %vm15, 0.0
  %83 = vst.msk [vmem:[#allocation2 + $0x218] sm:$0xff] %vm15, 0.0
  %84 = vst.msk [vmem:[#allocation2 + $0x220] sm:$0xff] %vm15, 0.0
  %85 = vst.msk [vmem:[#allocation2 + $0x228] sm:$0xff] %vm15, 0.0
  %86 = vst.msk [vmem:[#allocation2 + $0x230] sm:$0xff] %vm15, 0.0
  %87 = vst.msk [vmem:[#allocation2 + $0x238] sm:$0xff] %vm15, 0.0
  %s88 = scalar_lea.vmem [#allocation2], 1344
  %89 = vst.msk [vmem:[%s88] sm:$0xff] %vm15, 0.0
  %90 = vst.msk [vmem:[%s88 + $0x8] sm:$0xff] %vm15, 0.0
  %91 = vst.msk [vmem:[%s88 + $0x10] sm:$0xff] %vm15, 0.0
  %92 = vst.msk [vmem:[%s88 + $0x18] sm:$0xff] %vm15, 0.0
  %93 = vst.msk [vmem:[%s88 + $0x20] sm:$0xff] %vm15, 0.0
  %94 = vst.msk [vmem:[%s88 + $0x28] sm:$0xff] %vm15, 0.0
  %95 = vst.msk [vmem:[%s88 + $0x30] sm:$0xff] %vm15, 0.0
  %96 = vst.msk [vmem:[%s88 + $0x38] sm:$0xff] %vm15, 0.0
  %97 = vst.msk [vmem:[%s88 + $0x40] sm:$0xff] %vm15, 0.0
  %98 = vst.msk [vmem:[%s88 + $0x48] sm:$0xff] %vm15, 0.0
  %99 = vst.msk [vmem:[%s88 + $0x50] sm:$0xff] %vm15, 0.0
  %100 = vst.msk [vmem:[%s88 + $0x58] sm:$0xff] %vm15, 0.0
  %101 = vst.msk [vmem:[%s88 + $0x60] sm:$0xff] %vm15, 0.0
  %102 = vst.msk [vmem:[%s88 + $0x68] sm:$0xff] %vm15, 0.0
  %103 = vst.msk [vmem:[%s88 + $0x70] sm:$0xff] %vm15, 0.0
  %104 = vst.msk [vmem:[%s88 + $0x78] sm:$0xff] %vm15, 0.0
  %105 = vst.msk [vmem:[%s88 + $0x80] sm:$0xff] %vm15, 0.0
  %106 = vst.msk [vmem:[%s88 + $0x88] sm:$0xff] %vm15, 0.0
  %107 = vst.msk [vmem:[%s88 + $0x90] sm:$0xff] %vm15, 0.0
  %108 = vst.msk [vmem:[%s88 + $0x98] sm:$0xff] %vm15, 0.0
  %109 = vst.msk [vmem:[%s88 + $0xa0] sm:$0xff] %vm15, 0.0
  %110 = vst.msk [vmem:[%s88 + $0xa8] sm:$0xff] %vm15, 0.0
  %111 = vst.msk [vmem:[%s88 + $0xb0] sm:$0xff] %vm15, 0.0
  %112 = vst.msk [vmem:[%s88 + $0xb8] sm:$0xff] %vm15, 0.0
  %113 = vst.msk [vmem:[%s88 + $0xc0] sm:$0xff] %vm15, 0.0
  %114 = vst.msk [vmem:[%s88 + $0xc8] sm:$0xff] %vm15, 0.0
  %115 = vst.msk [vmem:[%s88 + $0xd0] sm:$0xff] %vm15, 0.0
  %116 = vst.msk [vmem:[%s88 + $0xd8] sm:$0xff] %vm15, 0.0
  %117 = vst.msk [vmem:[%s88 + $0xe0] sm:$0xff] %vm15, 0.0
  %118 = vst.msk [vmem:[%s88 + $0xe8] sm:$0xff] %vm15, 0.0
  %119 = vst.msk [vmem:[%s88 + $0xf0] sm:$0xff] %vm15, 0.0
  %120 = vst.msk [vmem:[%s88 + $0xf8] sm:$0xff] %vm15, 0.0
  %121 = vst.msk [vmem:[%s88 + $0x100] sm:$0xff] %vm15, 0.0
  %122 = vst.msk [vmem:[%s88 + $0x108] sm:$0xff] %vm15, 0.0
  %123 = vst.msk [vmem:[%s88 + $0x110] sm:$0xff] %vm15, 0.0
  %124 = vst.msk [vmem:[%s88 + $0x118] sm:$0xff] %vm15, 0.0
  %125 = vst.msk [vmem:[%s88 + $0x120] sm:$0xff] %vm15, 0.0
  %126 = vst.msk [vmem:[%s88 + $0x128] sm:$0xff] %vm15, 0.0
  %127 = vst.msk [vmem:[%s88 + $0x130] sm:$0xff] %vm15, 0.0
  %128 = vst.msk [vmem:[%s88 + $0x138] sm:$0xff] %vm15, 0.0
  %129 = vst.msk [vmem:[%s88 + $0x140] sm:$0xff] %vm15, 0.0
  %130 = vst.msk [vmem:[%s88 + $0x148] sm:$0xff] %vm15, 0.0
  %131 = vst.msk [vmem:[%s88 + $0x150] sm:$0xff] %vm15, 0.0
  %132 = vst.msk [vmem:[%s88 + $0x158] sm:$0xff] %vm15, 0.0
  %133 = vst.msk [vmem:[%s88 + $0x160] sm:$0xff] %vm15, 0.0
  %134 = vst.msk [vmem:[%s88 + $0x168] sm:$0xff] %vm15, 0.0
  %135 = vst.msk [vmem:[%s88 + $0x170] sm:$0xff] %vm15, 0.0
  %136 = vst.msk [vmem:[%s88 + $0x178] sm:$0xff] %vm15, 0.0
  %137 = vst.msk [vmem:[%s88 + $0x180] sm:$0xff] %vm15, 0.0
  %138 = vst.msk [vmem:[%s88 + $0x188] sm:$0xff] %vm15, 0.0
  %139 = vst.msk [vmem:[%s88 + $0x190] sm:$0xff] %vm15, 0.0
  %140 = vst.msk [vmem:[%s88 + $0x198] sm:$0xff] %vm15, 0.0
  %141 = vst.msk [vmem:[%s88 + $0x1a0] sm:$0xff] %vm15, 0.0
  %142 = vst.msk [vmem:[%s88 + $0x1a8] sm:$0xff] %vm15, 0.0
  %143 = vst.msk [vmem:[%s88 + $0x1b0] sm:$0xff] %vm15, 0.0
  %144 = vst.msk [vmem:[%s88 + $0x1b8] sm:$0xff] %vm15, 0.0
  %145 = vst.msk [vmem:[%s88 + $0x1c0] sm:$0xff] %vm15, 0.0
  %146 = vst.msk [vmem:[%s88 + $0x1c8] sm:$0xff] %vm15, 0.0
  %147 = vst.msk [vmem:[%s88 + $0x1d0] sm:$0xff] %vm15, 0.0
  %148 = vst.msk [vmem:[%s88 + $0x1d8] sm:$0xff] %vm15, 0.0
  %149 = vst.msk [vmem:[%s88 + $0x1e0] sm:$0xff] %vm15, 0.0
  %150 = vst.msk [vmem:[%s88 + $0x1e8] sm:$0xff] %vm15, 0.0
  %151 = vst.msk [vmem:[%s88 + $0x1f0] sm:$0xff] %vm15, 0.0
  %152 = vst.msk [vmem:[%s88 + $0x1f8] sm:$0xff] %vm15, 0.0
  %153 = vst.msk [vmem:[%s88 + $0x200] sm:$0xff] %vm15, 0.0
  %154 = vst.msk [vmem:[%s88 + $0x208] sm:$0xff] %vm15, 0.0
  %155 = vst.msk [vmem:[%s88 + $0x210] sm:$0xff] %vm15, 0.0
  %156 = vst.msk [vmem:[%s88 + $0x218] sm:$0xff] %vm15, 0.0
  %157 = vst.msk [vmem:[%s88 + $0x220] sm:$0xff] %vm15, 0.0
  %158 = vst.msk [vmem:[%s88 + $0x228] sm:$0xff] %vm15, 0.0
  %159 = vst.msk [vmem:[%s88 + $0x230] sm:$0xff] %vm15, 0.0
  %160 = vst.msk [vmem:[%s88 + $0x238] sm:$0xff] %vm15, 0.0
  %s161 = scalar_lea.vmem [#allocation2], 576
  %162 = vst.msk [vmem:[%s161] sm:$0xff] %vm15, 0.0
  %163 = vst.msk [vmem:[%s161 + $0x8] sm:$0xff] %vm15, 0.0
  %164 = vst.msk [vmem:[%s161 + $0x30] sm:$0xff] %vm15, 0.0
  %165 = vst.msk [vmem:[%s161 + $0x38] sm:$0xff] %vm15, 0.0
  %166 = vst.msk [vmem:[%s161 + $0x60] sm:$0xff] %vm15, 0.0
  %167 = vst.msk [vmem:[%s161 + $0x68] sm:$0xff] %vm15, 0.0
  %168 = vst.msk [vmem:[%s161 + $0x90] sm:$0xff] %vm15, 0.0
  %169 = vst.msk [vmem:[%s161 + $0x98] sm:$0xff] %vm15, 0.0
  %170 = vst.msk [vmem:[%s161 + $0xc0] sm:$0xff] %vm15, 0.0
  %171 = vst.msk [vmem:[%s161 + $0xc8] sm:$0xff] %vm15, 0.0
  %172 = vst.msk [vmem:[%s161 + $0xf0] sm:$0xff] %vm15, 0.0
  %173 = vst.msk [vmem:[%s161 + $0xf8] sm:$0xff] %vm15, 0.0
  %174 = vst.msk [vmem:[%s161 + $0x120] sm:$0xff] %vm15, 0.0
  %175 = vst.msk [vmem:[%s161 + $0x128] sm:$0xff] %vm15, 0.0
  %176 = vst.msk [vmem:[%s161 + $0x150] sm:$0xff] %vm15, 0.0
  %177 = vst.msk [vmem:[%s161 + $0x158] sm:$0xff] %vm15, 0.0
  %178 = vst.msk [vmem:[%s161 + $0x180] sm:$0xff] %vm15, 0.0
  %179 = vst.msk [vmem:[%s161 + $0x188] sm:$0xff] %vm15, 0.0
  %180 = vst.msk [vmem:[%s161 + $0x1b0] sm:$0xff] %vm15, 0.0
  %181 = vst.msk [vmem:[%s161 + $0x1b8] sm:$0xff] %vm15, 0.0
  %182 = vst.msk [vmem:[%s161 + $0x1e0] sm:$0xff] %vm15, 0.0
  %183 = vst.msk [vmem:[%s161 + $0x1e8] sm:$0xff] %vm15, 0.0
  %184 = vst.msk [vmem:[%s161 + $0x210] sm:$0xff] %vm15, 0.0
  %185 = vst.msk [vmem:[%s161 + $0x218] sm:$0xff] %vm15, 0.0
  %186 = vst.msk [vmem:[%s161 + $0x240] sm:$0xff] %vm15, 0.0
  %187 = vst.msk [vmem:[%s161 + $0x248] sm:$0xff] %vm15, 0.0
  %188 = vst.msk [vmem:[%s161 + $0x270] sm:$0xff] %vm15, 0.0
  %189 = vst.msk [vmem:[%s161 + $0x278] sm:$0xff] %vm15, 0.0
  %190 = vst.msk [vmem:[%s161 + $0x2a0] sm:$0xff] %vm15, 0.0
  %191 = vst.msk [vmem:[%s161 + $0x2a8] sm:$0xff] %vm15, 0.0
  %192 = vst.msk [vmem:[%s161 + $0x2d0] sm:$0xff] %vm15, 0.0
  %193 = vst.msk [vmem:[%s161 + $0x2d8] sm:$0xff] %vm15, 0.0
  %194 = vst.msk [vmem:[%s161 + $0x20] sm:$0xff] %vm15, 0.0
  %195 = vst.msk [vmem:[%s161 + $0x28] sm:$0xff] %vm15, 0.0
  %196 = vst.msk [vmem:[%s161 + $0x50] sm:$0xff] %vm15, 0.0
  %197 = vst.msk [vmem:[%s161 + $0x58] sm:$0xff] %vm15, 0.0
  %198 = vst.msk [vmem:[%s161 + $0x80] sm:$0xff] %vm15, 0.0
  %199 = vst.msk [vmem:[%s161 + $0x88] sm:$0xff] %vm15, 0.0
  %200 = vst.msk [vmem:[%s161 + $0xb0] sm:$0xff] %vm15, 0.0
  %201 = vst.msk [vmem:[%s161 + $0xb8] sm:$0xff] %vm15, 0.0
  %202 = vst.msk [vmem:[%s161 + $0xe0] sm:$0xff] %vm15, 0.0
  %203 = vst.msk [vmem:[%s161 + $0xe8] sm:$0xff] %vm15, 0.0
  %204 = vst.msk [vmem:[%s161 + $0x110] sm:$0xff] %vm15, 0.0
  %205 = vst.msk [vmem:[%s161 + $0x118] sm:$0xff] %vm15, 0.0
  %206 = vst.msk [vmem:[%s161 + $0x140] sm:$0xff] %vm15, 0.0
  %207 = vst.msk [vmem:[%s161 + $0x148] sm:$0xff] %vm15, 0.0
  %208 = vst.msk [vmem:[%s161 + $0x170] sm:$0xff] %vm15, 0.0
  %209 = vst.msk [vmem:[%s161 + $0x178] sm:$0xff] %vm15, 0.0
  %210 = vst.msk [vmem:[%s161 + $0x1a0] sm:$0xff] %vm15, 0.0
  %211 = vst.msk [vmem:[%s161 + $0x1a8] sm:$0xff] %vm15, 0.0
  %212 = vst.msk [vmem:[%s161 + $0x1d0] sm:$0xff] %vm15, 0.0
  %213 = vst.msk [vmem:[%s161 + $0x1d8] sm:$0xff] %vm15, 0.0
  %214 = vst.msk [vmem:[%s161 + $0x200] sm:$0xff] %vm15, 0.0
  %215 = vst.msk [vmem:[%s161 + $0x208] sm:$0xff] %vm15, 0.0
  %216 = vst.msk [vmem:[%s161 + $0x230] sm:$0xff] %vm15, 0.0
  %217 = vst.msk [vmem:[%s161 + $0x238] sm:$0xff] %vm15, 0.0
  %218 = vst.msk [vmem:[%s161 + $0x260] sm:$0xff] %vm15, 0.0
  %219 = vst.msk [vmem:[%s161 + $0x268] sm:$0xff] %vm15, 0.0
  %220 = vst.msk [vmem:[%s161 + $0x290] sm:$0xff] %vm15, 0.0
  %221 = vst.msk [vmem:[%s161 + $0x298] sm:$0xff] %vm15, 0.0
  %222 = vst.msk [vmem:[%s161 + $0x2c0] sm:$0xff] %vm15, 0.0
  %223 = vst.msk [vmem:[%s161 + $0x2c8] sm:$0xff] %vm15, 0.0
  %224 = vst.msk [vmem:[%s161 + $0x2f0] sm:$0xff] %vm15, 0.0
  %225 = vst.msk [vmem:[%s161 + $0x2f8] sm:$0xff] %vm15, 0.0
  %v226 = vld [vmem:[%s2] sm:$0xff]
  %v227 = vld [vmem:[%s2 + $0x8] sm:$0xff]
  %v228 = vld [vmem:[%s2 + $0x10] sm:$0xff]
  %v229 = vld [vmem:[%s2 + $0x18] sm:$0xff]
  %v230 = vld [vmem:[%s2 + $0x20] sm:$0xff]
  %v231 = vld [vmem:[%s2 + $0x28] sm:$0xff]
  %v232 = vld [vmem:[%s2 + $0x30] sm:$0xff]
  %v233 = vld [vmem:[%s2 + $0x38] sm:$0xff]
  %v234 = vld [vmem:[%s2 + $0x40] sm:$0xff]
  %v235 = vld [vmem:[%s2 + $0x48] sm:$0xff]
  %v236 = vld [vmem:[%s2 + $0x50] sm:$0xff]
  %v237 = vld [vmem:[%s2 + $0x58] sm:$0xff]
  %v238 = vld [vmem:[%s2 + $0x60] sm:$0xff]
  %v239 = vld [vmem:[%s2 + $0x68] sm:$0xff]
  %v240 = vld [vmem:[%s2 + $0x70] sm:$0xff]
  %v241 = vld [vmem:[%s2 + $0x78] sm:$0xff]
  %v242 = vld [vmem:[%s2 + $0x80] sm:$0xff]
  %v243 = vld [vmem:[%s2 + $0x88] sm:$0xff]
  %v244 = vld [vmem:[%s2 + $0x90] sm:$0xff]
  %v245 = vld [vmem:[%s2 + $0x98] sm:$0xff]
  %v246 = vld [vmem:[%s2 + $0xa0] sm:$0xff]
  %v247 = vld [vmem:[%s2 + $0xa8] sm:$0xff]
  %v248 = vld [vmem:[%s2 + $0xb0] sm:$0xff]
  %v249 = vld [vmem:[%s2 + $0xb8] sm:$0xff]
  %v250 = vld [vmem:[%s2 + $0xc0] sm:$0xff]
  %v251 = vld [vmem:[%s2 + $0xc8] sm:$0xff]
  %v252 = vld [vmem:[%s2 + $0xd0] sm:$0xff]
  %v253 = vld [vmem:[%s2 + $0xd8] sm:$0xff]
  %v254 = vld [vmem:[%s2 + $0xe0] sm:$0xff]
  %v255 = vld [vmem:[%s2 + $0xe8] sm:$0xff]
  %v256 = vld [vmem:[%s2 + $0xf0] sm:$0xff]
  %v257 = vld [vmem:[%s2 + $0xf8] sm:$0xff]
  %258 = vst.msk [vmem:[%s161 + $0x10] sm:$0xff] %vm15, %v226
  %259 = vst.msk [vmem:[%s161 + $0x18] sm:$0xff] %vm15, %v227
  %260 = vst.msk [vmem:[%s161 + $0x40] sm:$0xff] %vm15, %v228
  %261 = vst.msk [vmem:[%s161 + $0x48] sm:$0xff] %vm15, %v229
  %262 = vst.msk [vmem:[%s161 + $0x70] sm:$0xff] %vm15, %v230
  %263 = vst.msk [vmem:[%s161 + $0x78] sm:$0xff] %vm15, %v231
  %264 = vst.msk [vmem:[%s161 + $0xa0] sm:$0xff] %vm15, %v232
  %265 = vst.msk [vmem:[%s161 + $0xa8] sm:$0xff] %vm15, %v233
  %266 = vst.msk [vmem:[%s161 + $0xd0] sm:$0xff] %vm15, %v234
  %267 = vst.msk [vmem:[%s161 + $0xd8] sm:$0xff] %vm15, %v235
  %268 = vst.msk [vmem:[%s161 + $0x100] sm:$0xff] %vm15, %v236
  %269 = vst.msk [vmem:[%s161 + $0x108] sm:$0xff] %vm15, %v237
  %270 = vst.msk [vmem:[%s161 + $0x130] sm:$0xff] %vm15, %v238
  %271 = vst.msk [vmem:[%s161 + $0x138] sm:$0xff] %vm15, %v239
  %272 = vst.msk [vmem:[%s161 + $0x160] sm:$0xff] %vm15, %v240
  %273 = vst.msk [vmem:[%s161 + $0x168] sm:$0xff] %vm15, %v241
  %274 = vst.msk [vmem:[%s161 + $0x190] sm:$0xff] %vm15, %v242
  %275 = vst.msk [vmem:[%s161 + $0x198] sm:$0xff] %vm15, %v243
  %276 = vst.msk [vmem:[%s161 + $0x1c0] sm:$0xff] %vm15, %v244
  %277 = vst.msk [vmem:[%s161 + $0x1c8] sm:$0xff] %vm15, %v245
  %278 = vst.msk [vmem:[%s161 + $0x1f0] sm:$0xff] %vm15, %v246
  %279 = vst.msk [vmem:[%s161 + $0x1f8] sm:$0xff] %vm15, %v247
  %280 = vst.msk [vmem:[%s161 + $0x220] sm:$0xff] %vm15, %v248
  %281 = vst.msk [vmem:[%s161 + $0x228] sm:$0xff] %vm15, %v249
  %282 = vst.msk [vmem:[%s161 + $0x250] sm:$0xff] %vm15, %v250
  %283 = vst.msk [vmem:[%s161 + $0x258] sm:$0xff] %vm15, %v251
  %284 = vst.msk [vmem:[%s161 + $0x280] sm:$0xff] %vm15, %v252
  %285 = vst.msk [vmem:[%s161 + $0x288] sm:$0xff] %vm15, %v253
  %286 = vst.msk [vmem:[%s161 + $0x2b0] sm:$0xff] %vm15, %v254
  %287 = vst.msk [vmem:[%s161 + $0x2b8] sm:$0xff] %vm15, %v255
  %288 = vst.msk [vmem:[%s161 + $0x2e0] sm:$0xff] %vm15, %v256
  %289 = vst.msk [vmem:[%s161 + $0x2e8] sm:$0xff] %vm15, %v257
  %s290 = sld [smem:[#allocation3]]
  loop: start=0, step=1, limit=16
  $region14: #{tpu_custom_call.1} parent=0 // loop_pre_header
    _
  $region15: #{tpu_custom_call.1} parent=0 // loop_header
    %s292 = sphi 0, %s296
    %p293 = scmp.ge.s32.totalorder %s292, 16
  $region16: #{tpu_custom_call.1} parent=0 // loop_header_branch
    %295 = sbr.rel (%p293) target = $region20
  $region17: #{tpu_custom_call.1} parent=0 // loop_body
    %s297 = smul.u32 %s292, 48
    %s298 = scalar_lea.vmem [#allocation2], %s297
    %v299 = vld [vmem:[%s298] sm:$0xff]
    %v300 = vld [vmem:[%s298 + $0x8] sm:$0xff]
    %v301 = vld [vmem:[%s298 + $0x10] sm:$0xff]
    %v302 = vld [vmem:[%s298 + $0x18] sm:$0xff]
    %v303 = vld [vmem:[%s298 + $0x20] sm:$0xff]
    %v304 = vld [vmem:[%s298 + $0x28] sm:$0xff]
    %v305 = vld [vmem:[%s298 + $0x30] sm:$0xff]
    %v306 = vld [vmem:[%s298 + $0x38] sm:$0xff]
    %v307 = vld [vmem:[%s298 + $0x40] sm:$0xff]
    %v308 = vld [vmem:[%s298 + $0x48] sm:$0xff]
    %v309 = vld [vmem:[%s298 + $0x50] sm:$0xff]
    %v310 = vld [vmem:[%s298 + $0x58] sm:$0xff]
    %v311 = vld [vmem:[%s298 + $0x60] sm:$0xff]
    %v312 = vld [vmem:[%s298 + $0x68] sm:$0xff]
    %v313 = vld [vmem:[%s298 + $0x70] sm:$0xff]
    %v314 = vld [vmem:[%s298 + $0x78] sm:$0xff]
    %v315 = vld [vmem:[%s298 + $0x80] sm:$0xff]
    %v316 = vld [vmem:[%s298 + $0x88] sm:$0xff]
    %v317 = vld [vmem:[%s298 + $0x90] sm:$0xff]
    %v318 = vld [vmem:[%s298 + $0x98] sm:$0xff]
    %v319 = vld [vmem:[%s298 + $0xa0] sm:$0xff]
    %v320 = vld [vmem:[%s298 + $0xa8] sm:$0xff]
    %v321 = vld [vmem:[%s298 + $0xb0] sm:$0xff]
    %v322 = vld [vmem:[%s298 + $0xb8] sm:$0xff]
    %v323 = vld [vmem:[%s298 + $0xc0] sm:$0xff]
    %v324 = vld [vmem:[%s298 + $0xc8] sm:$0xff]
    %v325 = vld [vmem:[%s298 + $0xd0] sm:$0xff]
    %v326 = vld [vmem:[%s298 + $0xd8] sm:$0xff]
    %v327 = vld [vmem:[%s298 + $0xe0] sm:$0xff]
    %v328 = vld [vmem:[%s298 + $0xe8] sm:$0xff]
    %v329 = vld [vmem:[%s298 + $0xf0] sm:$0xff]
    %v330 = vld [vmem:[%s298 + $0xf8] sm:$0xff]
    %v331 = vld [vmem:[%s298 + $0x100] sm:$0xff]
    %v332 = vld [vmem:[%s298 + $0x108] sm:$0xff]
    %v333 = vld [vmem:[%s298 + $0x110] sm:$0xff]
    %v334 = vld [vmem:[%s298 + $0x118] sm:$0xff]
    %v335 = vld [vmem:[%s298 + $0x120] sm:$0xff]
    %v336 = vld [vmem:[%s298 + $0x128] sm:$0xff]
    %v337 = vld [vmem:[%s298 + $0x130] sm:$0xff]
    %v338 = vld [vmem:[%s298 + $0x138] sm:$0xff]
    %v339 = vld [vmem:[%s298 + $0x140] sm:$0xff]
    %v340 = vld [vmem:[%s298 + $0x148] sm:$0xff]
    %v341 = vld [vmem:[%s298 + $0x150] sm:$0xff]
    %v342 = vld [vmem:[%s298 + $0x158] sm:$0xff]
    %v343 = vld [vmem:[%s298 + $0x160] sm:$0xff]
    %v344 = vld [vmem:[%s298 + $0x168] sm:$0xff]
    %v345 = vld [vmem:[%s298 + $0x170] sm:$0xff]
    %v346 = vld [vmem:[%s298 + $0x178] sm:$0xff]
    %v347 = vld [vmem:[%s298 + $0x180] sm:$0xff]
    %v348 = vld [vmem:[%s298 + $0x188] sm:$0xff]
    %v349 = vld [vmem:[%s298 + $0x190] sm:$0xff]
    %v350 = vld [vmem:[%s298 + $0x198] sm:$0xff]
    %v351 = vld [vmem:[%s298 + $0x1a0] sm:$0xff]
    %v352 = vld [vmem:[%s298 + $0x1a8] sm:$0xff]
    %v353 = vld [vmem:[%s298 + $0x1b0] sm:$0xff]
    %v354 = vld [vmem:[%s298 + $0x1b8] sm:$0xff]
    %v355 = vld [vmem:[%s298 + $0x1c0] sm:$0xff]
    %v356 = vld [vmem:[%s298 + $0x1c8] sm:$0xff]
    %v357 = vld [vmem:[%s298 + $0x1d0] sm:$0xff]
    %v358 = vld [vmem:[%s298 + $0x1d8] sm:$0xff]
    %v359 = vld [vmem:[%s298 + $0x1e0] sm:$0xff]
    %v360 = vld [vmem:[%s298 + $0x1e8] sm:$0xff]
    %v361 = vld [vmem:[%s298 + $0x1f0] sm:$0xff]
    %v362 = vld [vmem:[%s298 + $0x1f8] sm:$0xff]
    %v363 = vld [vmem:[%s298 + $0x200] sm:$0xff]
    %v364 = vld [vmem:[%s298 + $0x208] sm:$0xff]
    %v365 = vld [vmem:[%s298 + $0x210] sm:$0xff]
    %v366 = vld [vmem:[%s298 + $0x218] sm:$0xff]
    %v367 = vld [vmem:[%s298 + $0x220] sm:$0xff]
    %v368 = vld [vmem:[%s298 + $0x228] sm:$0xff]
    %v369 = vld [vmem:[%s298 + $0x230] sm:$0xff]
    %v370 = vld [vmem:[%s298 + $0x238] sm:$0xff]
    %v371 = vld [vmem:[%s298 + $0x240] sm:$0xff]
    %v372 = vld [vmem:[%s298 + $0x248] sm:$0xff]
    %v373 = vld [vmem:[%s298 + $0x250] sm:$0xff]
    %v374 = vld [vmem:[%s298 + $0x258] sm:$0xff]
    %v375 = vld [vmem:[%s298 + $0x260] sm:$0xff]
    %v376 = vld [vmem:[%s298 + $0x268] sm:$0xff]
    %v377 = vld [vmem:[%s298 + $0x270] sm:$0xff]
    %v378 = vld [vmem:[%s298 + $0x278] sm:$0xff]
    %v379 = vld [vmem:[%s298 + $0x280] sm:$0xff]
    %v380 = vld [vmem:[%s298 + $0x288] sm:$0xff]
    %v381 = vld [vmem:[%s298 + $0x290] sm:$0xff]
    %v382 = vld [vmem:[%s298 + $0x298] sm:$0xff]
    %v383 = vld [vmem:[%s298 + $0x2a0] sm:$0xff]
    %v384 = vld [vmem:[%s298 + $0x2a8] sm:$0xff]
    %v385 = vld [vmem:[%s298 + $0x2b0] sm:$0xff]
    %v386 = vld [vmem:[%s298 + $0x2b8] sm:$0xff]
    %v387 = vld [vmem:[%s298 + $0x2c0] sm:$0xff]
    %v388 = vld [vmem:[%s298 + $0x2c8] sm:$0xff]
    %v389 = vld [vmem:[%s298 + $0x2d0] sm:$0xff]
    %v390 = vld [vmem:[%s298 + $0x2d8] sm:$0xff]
    %v391 = vld [vmem:[%s298 + $0x2e0] sm:$0xff]
    %v392 = vld [vmem:[%s298 + $0x2e8] sm:$0xff]
    %v393 = vld [vmem:[%s298 + $0x2f0] sm:$0xff]
    %v394 = vld [vmem:[%s298 + $0x2f8] sm:$0xff]
    %v395 = vld [vmem:[%s298 + $0x300] sm:$0xff]
    %v396 = vld [vmem:[%s298 + $0x308] sm:$0xff]
    %v397 = vld [vmem:[%s298 + $0x310] sm:$0xff]
    %v398 = vld [vmem:[%s298 + $0x318] sm:$0xff]
    %v399 = vld [vmem:[%s298 + $0x320] sm:$0xff]
    %v400 = vld [vmem:[%s298 + $0x328] sm:$0xff]
    %v401 = vld [vmem:[%s298 + $0x330] sm:$0xff]
    %v402 = vld [vmem:[%s298 + $0x338] sm:$0xff]
    %v403 = vld [vmem:[%s298 + $0x340] sm:$0xff]
    %v404 = vld [vmem:[%s298 + $0x348] sm:$0xff]
    %v405 = vld [vmem:[%s298 + $0x350] sm:$0xff]
    %v406 = vld [vmem:[%s298 + $0x358] sm:$0xff]
    %v407 = vld [vmem:[%s298 + $0x360] sm:$0xff]
    %v408 = vld [vmem:[%s298 + $0x368] sm:$0xff]
    %v409 = vld [vmem:[%s298 + $0x370] sm:$0xff]
    %v410 = vld [vmem:[%s298 + $0x378] sm:$0xff]
    %v411 = vld [vmem:[%s298 + $0x380] sm:$0xff]
    %v412 = vld [vmem:[%s298 + $0x388] sm:$0xff]
    %v413 = vld [vmem:[%s298 + $0x390] sm:$0xff]
    %v414 = vld [vmem:[%s298 + $0x398] sm:$0xff]
    %v415 = vld [vmem:[%s298 + $0x3a0] sm:$0xff]
    %v416 = vld [vmem:[%s298 + $0x3a8] sm:$0xff]
    %v417 = vld [vmem:[%s298 + $0x3b0] sm:$0xff]
    %v418 = vld [vmem:[%s298 + $0x3b8] sm:$0xff]
    %v419 = vld [vmem:[%s298 + $0x3c0] sm:$0xff]
    %v420 = vld [vmem:[%s298 + $0x3c8] sm:$0xff]
    %v421 = vld [vmem:[%s298 + $0x3d0] sm:$0xff]
    %v422 = vld [vmem:[%s298 + $0x3d8] sm:$0xff]
    %v423 = vld [vmem:[%s298 + $0x3e0] sm:$0xff]
    %v424 = vld [vmem:[%s298 + $0x3e8] sm:$0xff]
    %v425 = vld [vmem:[%s298 + $0x3f0] sm:$0xff]
    %v426 = vld [vmem:[%s298 + $0x3f8] sm:$0xff]
    %v427 = vld [vmem:[%s298 + $0x400] sm:$0xff]
    %v428 = vld [vmem:[%s298 + $0x408] sm:$0xff]
    %v429 = vld [vmem:[%s298 + $0x410] sm:$0xff]
    %v430 = vld [vmem:[%s298 + $0x418] sm:$0xff]
    %v431 = vld [vmem:[%s298 + $0x420] sm:$0xff]
    %v432 = vld [vmem:[%s298 + $0x428] sm:$0xff]
    %v433 = vld [vmem:[%s298 + $0x430] sm:$0xff]
    %v434 = vld [vmem:[%s298 + $0x438] sm:$0xff]
    %v435 = vld [vmem:[%s298 + $0x440] sm:$0xff]
    %v436 = vld [vmem:[%s298 + $0x448] sm:$0xff]
    %v437 = vld [vmem:[%s298 + $0x450] sm:$0xff]
    %v438 = vld [vmem:[%s298 + $0x458] sm:$0xff]
    %v439 = vld [vmem:[%s298 + $0x460] sm:$0xff]
    %v440 = vld [vmem:[%s298 + $0x468] sm:$0xff]
    %v441 = vld [vmem:[%s298 + $0x470] sm:$0xff]
    %v442 = vld [vmem:[%s298 + $0x478] sm:$0xff]
    %v443 = vld [vmem:[%s298 + $0x480] sm:$0xff]
    %v444 = vld [vmem:[%s298 + $0x488] sm:$0xff]
    %v445 = vld [vmem:[%s298 + $0x490] sm:$0xff]
    %v446 = vld [vmem:[%s298 + $0x498] sm:$0xff]
    %v447 = vld [vmem:[%s298 + $0x4a0] sm:$0xff]
    %v448 = vld [vmem:[%s298 + $0x4a8] sm:$0xff]
    %v449 = vld [vmem:[%s0] sm:$0xff]
    %v450 = vld [vmem:[%s0 + $0x8] sm:$0xff]
    %v451 = vld [vmem:[%s0 + $0x10] sm:$0xff]
    %v452 = vld [vmem:[%s0 + $0x18] sm:$0xff]
    %v453 = vld [vmem:[%s0 + $0x20] sm:$0xff]
    %v454 = vld [vmem:[%s0 + $0x28] sm:$0xff]
    %v455 = vld [vmem:[%s0 + $0x30] sm:$0xff]
    %v456 = vld [vmem:[%s0 + $0x38] sm:$0xff]
    %v457 = vld [vmem:[%s0 + $0x40] sm:$0xff]
    %v458 = vld [vmem:[%s0 + $0x48] sm:$0xff]
    %v459 = vld [vmem:[%s0 + $0x50] sm:$0xff]
    %v460 = vld [vmem:[%s0 + $0x58] sm:$0xff]
    %v461 = vld [vmem:[%s0 + $0x60] sm:$0xff]
    %v462 = vld [vmem:[%s0 + $0x68] sm:$0xff]
    %v463 = vld [vmem:[%s0 + $0x70] sm:$0xff]
    %v464 = vld [vmem:[%s0 + $0x78] sm:$0xff]
    %v465 = vld [vmem:[%s0 + $0x80] sm:$0xff]
    %v466 = vld [vmem:[%s0 + $0x88] sm:$0xff]
    %v467 = vld [vmem:[%s0 + $0x90] sm:$0xff]
    %v468 = vld [vmem:[%s0 + $0x98] sm:$0xff]
    %v469 = vstv %s290
    %vm470 = vcmask 392192
    %v472 = vsel %vm470, %v458, 0
    %v475 = vsel %vm470, %v468, 0
    %477 = vmatprep.subr.mxu0 0.0
    %v478 = vand.u32 %v299, 4294901760
    %479 = vmatpush1.msra.mxu0 %v478
    %480 = vmatprep.subr.mxu0 0.0
    %v481 = vand.u32 %v300, 4294901760
    %482 = vmatpush1.msra.mxu0 %v481
    %483 = vmatprep.subr.mxu0 0.0
    %v484 = vand.u32 %v301, 4294901760
    %485 = vmatpush1.msra.mxu0 %v484
    %486 = vmatprep.subr.mxu0 0.0
    %v487 = vand.u32 %v302, 4294901760
    %488 = vmatpush1.msra.mxu0 %v487
    %489 = vmatprep.subr.mxu0 0.0
    %v490 = vand.u32 %v303, 4294901760
    %491 = vmatpush1.msra.mxu0 %v490
    %492 = vmatprep.subr.mxu0 0.0
    %v493 = vand.u32 %v304, 4294901760
    %494 = vmatpush1.msra.mxu0 %v493
    %495 = vmatprep.subr.mxu0 0.0
    %v496 = vand.u32 %v305, 4294901760
    %497 = vmatpush1.msra.mxu0 %v496
    %498 = vmatprep.subr.mxu0 0.0
    %v499 = vand.u32 %v306, 4294901760
    %500 = vmatpush1.msra.mxu0 %v499
    %501 = vmatprep.subr.mxu0 0.0
    %v502 = vand.u32 %v307, 4294901760
    %503 = vmatpush1.msra.mxu0 %v502
    %504 = vmatprep.subr.mxu0 0.0
    %v505 = vand.u32 %v308, 4294901760
    %506 = vmatpush1.msra.mxu0 %v505
    %507 = vmatprep.subr.mxu0 0.0
    %v508 = vand.u32 %v309, 4294901760
    %509 = vmatpush1.msra.mxu0 %v508
    %510 = vmatprep.subr.mxu0 0.0
    %v511 = vand.u32 %v310, 4294901760
    %512 = vmatpush1.msra.mxu0 %v511
    %513 = vmatprep.subr.mxu0 0.0
    %v514 = vand.u32 %v311, 4294901760
    %515 = vmatpush1.msra.mxu0 %v514
    %516 = vmatprep.subr.mxu0 0.0
    %v517 = vand.u32 %v312, 4294901760
    %518 = vmatpush1.msra.mxu0 %v517
    %519 = vmatprep.subr.mxu0 0.0
    %v520 = vand.u32 %v313, 4294901760
    %521 = vmatpush1.msra.mxu0 %v520
    %522 = vmatprep.subr.mxu0 0.0
    %v523 = vand.u32 %v314, 4294901760
    %524 = vmatpush1.msra.mxu0 %v523
    %525 = vmatprep.subr.mxu0 0.0
    %v526 = vand.u32 %v315, 4294901760
    %527 = vmatpush1.msra.mxu0 %v526
    %528 = vmatprep.subr.mxu0 0.0
    %v529 = vand.u32 %v316, 4294901760
    %530 = vmatpush1.msra.mxu0 %v529
    %531 = vmatprep.subr.mxu0 0.0
    %v532 = vand.u32 %v317, 4294901760
    %533 = vmatpush1.msra.mxu0 %v532
    %534 = vmatprep.subr.mxu0 0.0
    %v535 = vand.u32 %v318, 4294901760
    %536 = vmatpush1.msra.mxu0 %v535
    %537 = vmatprep.subr.mxu0 0.0
    %v538 = vand.u32 %v319, 4294901760
    %539 = vmatpush1.msra.mxu0 %v538
    %540 = vmatprep.subr.mxu0 0.0
    %v541 = vand.u32 %v320, 4294901760
    %542 = vmatpush1.msra.mxu0 %v541
    %543 = vmatprep.subr.mxu0 0.0
    %v544 = vand.u32 %v321, 4294901760
    %545 = vmatpush1.msra.mxu0 %v544
    %546 = vmatprep.subr.mxu0 0.0
    %v547 = vand.u32 %v322, 4294901760
    %548 = vmatpush1.msra.mxu0 %v547
    %549 = vmatprep.subr.mxu0 0.0
    %v550 = vand.u32 %v323, 4294901760
    %551 = vmatpush1.msra.mxu0 %v550
    %552 = vmatprep.subr.mxu0 0.0
    %v553 = vand.u32 %v324, 4294901760
    %554 = vmatpush1.msra.mxu0 %v553
    %555 = vmatprep.subr.mxu0 0.0
    %v556 = vand.u32 %v325, 4294901760
    %557 = vmatpush1.msra.mxu0 %v556
    %558 = vmatprep.subr.mxu0 0.0
    %v559 = vand.u32 %v326, 4294901760
    %560 = vmatpush1.msra.mxu0 %v559
    %561 = vmatprep.subr.mxu0 0.0
    %v562 = vand.u32 %v327, 4294901760
    %563 = vmatpush1.msra.mxu0 %v562
    %564 = vmatprep.subr.mxu0 0.0
    %v565 = vand.u32 %v328, 4294901760
    %566 = vmatpush1.msra.mxu0 %v565
    %567 = vmatprep.subr.mxu0 0.0
    %v568 = vand.u32 %v329, 4294901760
    %569 = vmatpush1.msra.mxu0 %v568
    %570 = vmatprep.subr.mxu0 0.0
    %v571 = vand.u32 %v330, 4294901760
    %572 = vmatpush1.msra.mxu0 %v571
    %v573 = vand.u32 %v450, 4294901760
    %v574 = vsub.f32 %v450, %v573
    %v575 = vand.u32 %v574, 4294901760
    %v576 = vsub.f32 %v574, %v575
    %v577 = vand.u32 %v576, 4294901760
    %578 = vmatprep.mubr.f32.mxu0 %v577
    %v579 = vand.u32 %v449, 4294901760
    %v580 = vsub.f32 %v449, %v579
    %v581 = vand.u32 %v580, 4294901760
    %v582 = vsub.f32 %v580, %v581
    %v583 = vand.u32 %v582, 4294901760
    %584 = vmatmul.mubr.f32.gmra.mrb[0].mxu0 %v583
    %v585 = vpop.f32.mrb[0].mxu0
    %v586 = vadd.f32 %v469, %v585
    %v587 = vpop.f32.mrb[0].mxu0
    %v588 = vand.u32 %v460, 4294901760
    %v589 = vsub.f32 %v460, %v588
    %v590 = vand.u32 %v589, 4294901760
    %v591 = vsub.f32 %v589, %v590
    %v592 = vand.u32 %v591, 4294901760
    %593 = vmatprep.mubr.f32.mxu0 %v592
    %v594 = vand.u32 %v459, 4294901760
    %v595 = vsub.f32 %v459, %v594
    %v596 = vand.u32 %v595, 4294901760
    %v597 = vsub.f32 %v595, %v596
    %v598 = vand.u32 %v597, 4294901760
    %599 = vmatmul.mubr.f32.gmra.mrb[0].mxu0 %v598
    %v600 = vpop.f32.mrb[0].mxu0
    %v601 = vadd.f32 %v469, %v600
    %v602 = vpop.f32.mrb[0].mxu0
    %603 = vdwg.mxu0
    %604 = vmatprep.subr.mxu0 0.0
    %v605 = vand.u32 %v299, 4294901760
    %v606 = vsub.f32 %v299, %v605
    %v607 = vand.u32 %v606, 4294901760
    %v608 = vsub.f32 %v606, %v607
    %v609 = vand.u32 %v608, 4294901760
    %610 = vmatpush1.msra.mxu0 %v609
    %611 = vmatprep.subr.mxu0 0.0
    %v612 = vand.u32 %v300, 4294901760
    %v613 = vsub.f32 %v300, %v612
    %v614 = vand.u32 %v613, 4294901760
    %v615 = vsub.f32 %v613, %v614
    %v616 = vand.u32 %v615, 4294901760
    %617 = vmatpush1.msra.mxu0 %v616
    %618 = vmatprep.subr.mxu0 0.0
    %v619 = vand.u32 %v301, 4294901760
    %v620 = vsub.f32 %v301, %v619
    %v621 = vand.u32 %v620, 4294901760
    %v622 = vsub.f32 %v620, %v621
    %v623 = vand.u32 %v622, 4294901760
    %624 = vmatpush1.msra.mxu0 %v623
    %625 = vmatprep.subr.mxu0 0.0
    %v626 = vand.u32 %v302, 4294901760
    %v627 = vsub.f32 %v302, %v626
    %v628 = vand.u32 %v627, 4294901760
    %v629 = vsub.f32 %v627, %v628
    %v630 = vand.u32 %v629, 4294901760
    %631 = vmatpush1.msra.mxu0 %v630
    %632 = vmatprep.subr.mxu0 0.0
    %v633 = vand.u32 %v303, 4294901760
    %v634 = vsub.f32 %v303, %v633
    %v635 = vand.u32 %v634, 4294901760
    %v636 = vsub.f32 %v634, %v635
    %v637 = vand.u32 %v636, 4294901760
    %638 = vmatpush1.msra.mxu0 %v637
    %639 = vmatprep.subr.mxu0 0.0
    %v640 = vand.u32 %v304, 4294901760
    %v641 = vsub.f32 %v304, %v640
    %v642 = vand.u32 %v641, 4294901760
    %v643 = vsub.f32 %v641, %v642
    %v644 = vand.u32 %v643, 4294901760
    %645 = vmatpush1.msra.mxu0 %v644
    %646 = vmatprep.subr.mxu0 0.0
    %v647 = vand.u32 %v305, 4294901760
    %v648 = vsub.f32 %v305, %v647
    %v649 = vand.u32 %v648, 4294901760
    %v650 = vsub.f32 %v648, %v649
    %v651 = vand.u32 %v650, 4294901760
    %652 = vmatpush1.msra.mxu0 %v651
    %653 = vmatprep.subr.mxu0 0.0
    %v654 = vand.u32 %v306, 4294901760
    %v655 = vsub.f32 %v306, %v654
    %v656 = vand.u32 %v655, 4294901760
    %v657 = vsub.f32 %v655, %v656
    %v658 = vand.u32 %v657, 4294901760
    %659 = vmatpush1.msra.mxu0 %v658
    %660 = vmatprep.subr.mxu0 0.0
    %v661 = vand.u32 %v307, 4294901760
    %v662 = vsub.f32 %v307, %v661
    %v663 = vand.u32 %v662, 4294901760
    %v664 = vsub.f32 %v662, %v663
    %v665 = vand.u32 %v664, 4294901760
    %666 = vmatpush1.msra.mxu0 %v665
    %667 = vmatprep.subr.mxu0 0.0
    %v668 = vand.u32 %v308, 4294901760
    %v669 = vsub.f32 %v308, %v668
    %v670 = vand.u32 %v669, 4294901760
    %v671 = vsub.f32 %v669, %v670
    %v672 = vand.u32 %v671, 4294901760
    %673 = vmatpush1.msra.mxu0 %v672
    %674 = vmatprep.subr.mxu0 0.0
    %v675 = vand.u32 %v309, 4294901760
    %v676 = vsub.f32 %v309, %v675
    %v677 = vand.u32 %v676, 4294901760
    %v678 = vsub.f32 %v676, %v677
    %v679 = vand.u32 %v678, 4294901760
    %680 = vmatpush1.msra.mxu0 %v679
    %681 = vmatprep.subr.mxu0 0.0
    %v682 = vand.u32 %v310, 4294901760
    %v683 = vsub.f32 %v310, %v682
    %v684 = vand.u32 %v683, 4294901760
    %v685 = vsub.f32 %v683, %v684
    %v686 = vand.u32 %v685, 4294901760
    %687 = vmatpush1.msra.mxu0 %v686
    %688 = vmatprep.subr.mxu0 0.0
    %v689 = vand.u32 %v311, 4294901760
    %v690 = vsub.f32 %v311, %v689
    %v691 = vand.u32 %v690, 4294901760
    %v692 = vsub.f32 %v690, %v691
    %v693 = vand.u32 %v692, 4294901760
    %694 = vmatpush1.msra.mxu0 %v693
    %695 = vmatprep.subr.mxu0 0.0
    %v696 = vand.u32 %v312, 4294901760
    %v697 = vsub.f32 %v312, %v696
    %v698 = vand.u32 %v697, 4294901760
    %v699 = vsub.f32 %v697, %v698
    %v700 = vand.u32 %v699, 4294901760
    %701 = vmatpush1.msra.mxu0 %v700
    %702 = vmatprep.subr.mxu0 0.0
    %v703 = vand.u32 %v313, 4294901760
    %v704 = vsub.f32 %v313, %v703
    %v705 = vand.u32 %v704, 4294901760
    %v706 = vsub.f32 %v704, %v705
    %v707 = vand.u32 %v706, 4294901760
    %708 = vmatpush1.msra.mxu0 %v707
    %709 = vmatprep.subr.mxu0 0.0
    %v710 = vand.u32 %v314, 4294901760
    %v711 = vsub.f32 %v314, %v710
    %v712 = vand.u32 %v711, 4294901760
    %v713 = vsub.f32 %v711, %v712
    %v714 = vand.u32 %v713, 4294901760
    %715 = vmatpush1.msra.mxu0 %v714
    %716 = vmatprep.subr.mxu0 0.0
    %v717 = vand.u32 %v315, 4294901760
    %v718 = vsub.f32 %v315, %v717
    %v719 = vand.u32 %v718, 4294901760
    %v720 = vsub.f32 %v718, %v719
    %v721 = vand.u32 %v720, 4294901760
    %722 = vmatpush1.msra.mxu0 %v721
    %723 = vmatprep.subr.mxu0 0.0
    %v724 = vand.u32 %v316, 4294901760
    %v725 = vsub.f32 %v316, %v724
    %v726 = vand.u32 %v725, 4294901760
    %v727 = vsub.f32 %v725, %v726
    %v728 = vand.u32 %v727, 4294901760
    %729 = vmatpush1.msra.mxu0 %v728
    %730 = vmatprep.subr.mxu0 0.0
    %v731 = vand.u32 %v317, 4294901760
    %v732 = vsub.f32 %v317, %v731
    %v733 = vand.u32 %v732, 4294901760
    %v734 = vsub.f32 %v732, %v733
    %v735 = vand.u32 %v734, 4294901760
    %736 = vmatpush1.msra.mxu0 %v735
    %737 = vmatprep.subr.mxu0 0.0
    %v738 = vand.u32 %v318, 4294901760
    %v739 = vsub.f32 %v318, %v738
    %v740 = vand.u32 %v739, 4294901760
    %v741 = vsub.f32 %v739, %v740
    %v742 = vand.u32 %v741, 4294901760
    %743 = vmatpush1.msra.mxu0 %v742
    %744 = vmatprep.subr.mxu0 0.0
    %v745 = vand.u32 %v319, 4294901760
    %v746 = vsub.f32 %v319, %v745
    %v747 = vand.u32 %v746, 4294901760
    %v748 = vsub.f32 %v746, %v747
    %v749 = vand.u32 %v748, 4294901760
    %750 = vmatpush1.msra.mxu0 %v749
    %751 = vmatprep.subr.mxu0 0.0
    %v752 = vand.u32 %v320, 4294901760
    %v753 = vsub.f32 %v320, %v752
    %v754 = vand.u32 %v753, 4294901760
    %v755 = vsub.f32 %v753, %v754
    %v756 = vand.u32 %v755, 4294901760
    %757 = vmatpush1.msra.mxu0 %v756
    %758 = vmatprep.subr.mxu0 0.0
    %v759 = vand.u32 %v321, 4294901760
    %v760 = vsub.f32 %v321, %v759
    %v761 = vand.u32 %v760, 4294901760
    %v762 = vsub.f32 %v760, %v761
    %v763 = vand.u32 %v762, 4294901760
    %764 = vmatpush1.msra.mxu0 %v763
    %765 = vmatprep.subr.mxu0 0.0
    %v766 = vand.u32 %v322, 4294901760
    %v767 = vsub.f32 %v322, %v766
    %v768 = vand.u32 %v767, 4294901760
    %v769 = vsub.f32 %v767, %v768
    %v770 = vand.u32 %v769, 4294901760
    %771 = vmatpush1.msra.mxu0 %v770
    %772 = vmatprep.subr.mxu0 0.0
    %v773 = vand.u32 %v323, 4294901760
    %v774 = vsub.f32 %v323, %v773
    %v775 = vand.u32 %v774, 4294901760
    %v776 = vsub.f32 %v774, %v775
    %v777 = vand.u32 %v776, 4294901760
    %778 = vmatpush1.msra.mxu0 %v777
    %779 = vmatprep.subr.mxu0 0.0
    %v780 = vand.u32 %v324, 4294901760
    %v781 = vsub.f32 %v324, %v780
    %v782 = vand.u32 %v781, 4294901760
    %v783 = vsub.f32 %v781, %v782
    %v784 = vand.u32 %v783, 4294901760
    %785 = vmatpush1.msra.mxu0 %v784
    %786 = vmatprep.subr.mxu0 0.0
    %v787 = vand.u32 %v325, 4294901760
    %v788 = vsub.f32 %v325, %v787
    %v789 = vand.u32 %v788, 4294901760
    %v790 = vsub.f32 %v788, %v789
    %v791 = vand.u32 %v790, 4294901760
    %792 = vmatpush1.msra.mxu0 %v791
    %793 = vmatprep.subr.mxu0 0.0
    %v794 = vand.u32 %v326, 4294901760
    %v795 = vsub.f32 %v326, %v794
    %v796 = vand.u32 %v795, 4294901760
    %v797 = vsub.f32 %v795, %v796
    %v798 = vand.u32 %v797, 4294901760
    %799 = vmatpush1.msra.mxu0 %v798
    %800 = vmatprep.subr.mxu0 0.0
    %v801 = vand.u32 %v327, 4294901760
    %v802 = vsub.f32 %v327, %v801
    %v803 = vand.u32 %v802, 4294901760
    %v804 = vsub.f32 %v802, %v803
    %v805 = vand.u32 %v804, 4294901760
    %806 = vmatpush1.msra.mxu0 %v805
    %807 = vmatprep.subr.mxu0 0.0
    %v808 = vand.u32 %v328, 4294901760
    %v809 = vsub.f32 %v328, %v808
    %v810 = vand.u32 %v809, 4294901760
    %v811 = vsub.f32 %v809, %v810
    %v812 = vand.u32 %v811, 4294901760
    %813 = vmatpush1.msra.mxu0 %v812
    %814 = vmatprep.subr.mxu0 0.0
    %v815 = vand.u32 %v329, 4294901760
    %v816 = vsub.f32 %v329, %v815
    %v817 = vand.u32 %v816, 4294901760
    %v818 = vsub.f32 %v816, %v817
    %v819 = vand.u32 %v818, 4294901760
    %820 = vmatpush1.msra.mxu0 %v819
    %821 = vmatprep.subr.mxu0 0.0
    %v822 = vand.u32 %v330, 4294901760
    %v823 = vsub.f32 %v330, %v822
    %v824 = vand.u32 %v823, 4294901760
    %v825 = vsub.f32 %v823, %v824
    %v826 = vand.u32 %v825, 4294901760
    %827 = vmatpush1.msra.mxu0 %v826
    %v828 = vand.u32 %v450, 4294901760
    %829 = vmatprep.mubr.f32.mxu0 %v828
    %v830 = vand.u32 %v449, 4294901760
    %831 = vmatmul.mubr.f32.gmra.mrb[0].mxu0 %v830
    %v832 = vpop.f32.mrb[0].mxu0
    %v833 = vadd.f32 %v586, %v832
    %v834 = vpop.f32.mrb[0].mxu0
    %v835 = vand.u32 %v460, 4294901760
    %836 = vmatprep.mubr.f32.mxu0 %v835
    %v837 = vand.u32 %v459, 4294901760
    %838 = vmatmul.mubr.f32.gmra.mrb[0].mxu0 %v837
    %v839 = vpop.f32.mrb[0].mxu0
    %v840 = vadd.f32 %v601, %v839
    %v841 = vpop.f32.mrb[0].mxu0
    %842 = vdwg.mxu0
    %843 = vmatprep.subr.mxu0 0.0
    %v844 = vand.u32 %v299, 4294901760
    %v845 = vsub.f32 %v299, %v844
    %846 = vmatpush1.msra.mxu0 %v845
    %847 = vmatprep.subr.mxu0 0.0
    %v848 = vand.u32 %v300, 4294901760
    %v849 = vsub.f32 %v300, %v848
    %850 = vmatpush1.msra.mxu0 %v849
    %851 = vmatprep.subr.mxu0 0.0
    %v852 = vand.u32 %v301, 4294901760
    %v853 = vsub.f32 %v301, %v852
    %854 = vmatpush1.msra.mxu0 %v853
    %855 = vmatprep.subr.mxu0 0.0
    %v856 = vand.u32 %v302, 4294901760
    %v857 = vsub.f32 %v302, %v856
    %858 = vmatpush1.msra.mxu0 %v857
    %859 = vmatprep.subr.mxu0 0.0
    %v860 = vand.u32 %v303, 4294901760
    %v861 = vsub.f32 %v303, %v860
    %862 = vmatpush1.msra.mxu0 %v861
    %863 = vmatprep.subr.mxu0 0.0
    %v864 = vand.u32 %v304, 4294901760
    %v865 = vsub.f32 %v304, %v864
    %866 = vmatpush1.msra.mxu0 %v865
    %867 = vmatprep.subr.mxu0 0.0
    %v868 = vand.u32 %v305, 4294901760
    %v869 = vsub.f32 %v305, %v868
    %870 = vmatpush1.msra.mxu0 %v869
    %871 = vmatprep.subr.mxu0 0.0
    %v872 = vand.u32 %v306, 4294901760
    %v873 = vsub.f32 %v306, %v872
    %874 = vmatpush1.msra.mxu0 %v873
    %875 = vmatprep.subr.mxu0 0.0
    %v876 = vand.u32 %v307, 4294901760
    %v877 = vsub.f32 %v307, %v876
    %878 = vmatpush1.msra.mxu0 %v877
    %879 = vmatprep.subr.mxu0 0.0
    %v880 = vand.u32 %v308, 4294901760
    %v881 = vsub.f32 %v308, %v880
    %882 = vmatpush1.msra.mxu0 %v881
    %883 = vmatprep.subr.mxu0 0.0
    %v884 = vand.u32 %v309, 4294901760
    %v885 = vsub.f32 %v309, %v884
    %886 = vmatpush1.msra.mxu0 %v885
    %887 = vmatprep.subr.mxu0 0.0
    %v888 = vand.u32 %v310, 4294901760
    %v889 = vsub.f32 %v310, %v888
    %890 = vmatpush1.msra.mxu0 %v889
    %891 = vmatprep.subr.mxu0 0.0
    %v892 = vand.u32 %v311, 4294901760
    %v893 = vsub.f32 %v311, %v892
    %894 = vmatpush1.msra.mxu0 %v893
    %895 = vmatprep.subr.mxu0 0.0
    %v896 = vand.u32 %v312, 4294901760
    %v897 = vsub.f32 %v312, %v896
    %898 = vmatpush1.msra.mxu0 %v897
    %899 = vmatprep.subr.mxu0 0.0
    %v900 = vand.u32 %v313, 4294901760
    %v901 = vsub.f32 %v313, %v900
    %902 = vmatpush1.msra.mxu0 %v901
    %903 = vmatprep.subr.mxu0 0.0
    %v904 = vand.u32 %v314, 4294901760
    %v905 = vsub.f32 %v314, %v904
    %906 = vmatpush1.msra.mxu0 %v905
    %907 = vmatprep.subr.mxu0 0.0
    %v908 = vand.u32 %v315, 4294901760
    %v909 = vsub.f32 %v315, %v908
    %910 = vmatpush1.msra.mxu0 %v909
    %911 = vmatprep.subr.mxu0 0.0
    %v912 = vand.u32 %v316, 4294901760
    %v913 = vsub.f32 %v316, %v912
    %914 = vmatpush1.msra.mxu0 %v913
    %915 = vmatprep.subr.mxu0 0.0
    %v916 = vand.u32 %v317, 4294901760
    %v917 = vsub.f32 %v317, %v916
    %918 = vmatpush1.msra.mxu0 %v917
    %919 = vmatprep.subr.mxu0 0.0
    %v920 = vand.u32 %v318, 4294901760
    %v921 = vsub.f32 %v318, %v920
    %922 = vmatpush1.msra.mxu0 %v921
    %923 = vmatprep.subr.mxu0 0.0
    %v924 = vand.u32 %v319, 4294901760
    %v925 = vsub.f32 %v319, %v924
    %926 = vmatpush1.msra.mxu0 %v925
    %927 = vmatprep.subr.mxu0 0.0
    %v928 = vand.u32 %v320, 4294901760
    %v929 = vsub.f32 %v320, %v928
    %930 = vmatpush1.msra.mxu0 %v929
    %931 = vmatprep.subr.mxu0 0.0
    %v932 = vand.u32 %v321, 4294901760
    %v933 = vsub.f32 %v321, %v932
    %934 = vmatpush1.msra.mxu0 %v933
    %935 = vmatprep.subr.mxu0 0.0
    %v936 = vand.u32 %v322, 4294901760
    %v937 = vsub.f32 %v322, %v936
    %938 = vmatpush1.msra.mxu0 %v937
    %939 = vmatprep.subr.mxu0 0.0
    %v940 = vand.u32 %v323, 4294901760
    %v941 = vsub.f32 %v323, %v940
    %942 = vmatpush1.msra.mxu0 %v941
    %943 = vmatprep.subr.mxu0 0.0
    %v944 = vand.u32 %v324, 4294901760
    %v945 = vsub.f32 %v324, %v944
    %946 = vmatpush1.msra.mxu0 %v945
    %947 = vmatprep.subr.mxu0 0.0
    %v948 = vand.u32 %v325, 4294901760
    %v949 = vsub.f32 %v325, %v948
    %950 = vmatpush1.msra.mxu0 %v949
    %951 = vmatprep.subr.mxu0 0.0
    %v952 = vand.u32 %v326, 4294901760
    %v953 = vsub.f32 %v326, %v952
    %954 = vmatpush1.msra.mxu0 %v953
    %955 = vmatprep.subr.mxu0 0.0
    %v956 = vand.u32 %v327, 4294901760
    %v957 = vsub.f32 %v327, %v956
    %958 = vmatpush1.msra.mxu0 %v957
    %959 = vmatprep.subr.mxu0 0.0
    %v960 = vand.u32 %v328, 4294901760
    %v961 = vsub.f32 %v328, %v960
    %962 = vmatpush1.msra.mxu0 %v961
    %963 = vmatprep.subr.mxu0 0.0
    %v964 = vand.u32 %v329, 4294901760
    %v965 = vsub.f32 %v329, %v964
    %966 = vmatpush1.msra.mxu0 %v965
    %967 = vmatprep.subr.mxu0 0.0
    %v968 = vand.u32 %v330, 4294901760
    %v969 = vsub.f32 %v330, %v968
    %970 = vmatpush1.msra.mxu0 %v969
    %v971 = vand.u32 %v450, 4294901760
    %v972 = vsub.f32 %v450, %v971
    %973 = vmatprep.mubr.f32.mxu0 %v972
    %v974 = vand.u32 %v449, 4294901760
    %v975 = vsub.f32 %v449, %v974
    %976 = vmatmul.mubr.f32.gmra.mrb[0].mxu0 %v975
    %v977 = vpop.f32.mrb[0].mxu0
    %v978 = vadd.f32 %v833, %v977
    %v979 = vpop.f32.mrb[0].mxu0
    %v980 = vand.u32 %v460, 4294901760
    %v981 = vsub.f32 %v460, %v980
    %982 = vmatprep.mubr.f32.mxu0 %v981
    %v983 = vand.u32 %v459, 4294901760
    %v984 = vsub.f32 %v459, %v983
    %985 = vmatmul.mubr.f32.gmra.mrb[0].mxu0 %v984
    %v986 = vpop.f32.mrb[0].mxu0
    %v987 = vadd.f32 %v840, %v986
    %v988 = vpop.f32.mrb[0].mxu0
    %989 = vdwg.mxu0
    %990 = vmatprep.subr.mxu0 0.0
    %v991 = vand.u32 %v299, 4294901760
    %992 = vmatpush1.msra.mxu0 %v991
    %993 = vmatprep.subr.mxu0 0.0
    %v994 = vand.u32 %v300, 4294901760
    %995 = vmatpush1.msra.mxu0 %v994
    %996 = vmatprep.subr.mxu0 0.0
    %v997 = vand.u32 %v301, 4294901760
    %998 = vmatpush1.msra.mxu0 %v997
    %999 = vmatprep.subr.mxu0 0.0
    %v1000 = vand.u32 %v302, 4294901760
    %1001 = vmatpush1.msra.mxu0 %v1000
    %1002 = vmatprep.subr.mxu0 0.0
    %v1003 = vand.u32 %v303, 4294901760
    %1004 = vmatpush1.msra.mxu0 %v1003
    %1005 = vmatprep.subr.mxu0 0.0
    %v1006 = vand.u32 %v304, 4294901760
    %1007 = vmatpush1.msra.mxu0 %v1006
    %1008 = vmatprep.subr.mxu0 0.0
    %v1009 = vand.u32 %v305, 4294901760
    %1010 = vmatpush1.msra.mxu0 %v1009
    %1011 = vmatprep.subr.mxu0 0.0
    %v1012 = vand.u32 %v306, 4294901760
    %1013 = vmatpush1.msra.mxu0 %v1012
    %1014 = vmatprep.subr.mxu0 0.0
    %v1015 = vand.u32 %v307, 4294901760
    %1016 = vmatpush1.msra.mxu0 %v1015
    %1017 = vmatprep.subr.mxu0 0.0
    %v1018 = vand.u32 %v308, 4294901760
    %1019 = vmatpush1.msra.mxu0 %v1018
    %1020 = vmatprep.subr.mxu0 0.0
    %v1021 = vand.u32 %v309, 4294901760
    %1022 = vmatpush1.msra.mxu0 %v1021
    %1023 = vmatprep.subr.mxu0 0.0
    %v1024 = vand.u32 %v310, 4294901760
    %1025 = vmatpush1.msra.mxu0 %v1024
    %1026 = vmatprep.subr.mxu0 0.0
    %v1027 = vand.u32 %v311, 4294901760
    %1028 = vmatpush1.msra.mxu0 %v1027
    %1029 = vmatprep.subr.mxu0 0.0
    %v1030 = vand.u32 %v312, 4294901760
    %1031 = vmatpush1.msra.mxu0 %v1030
    %1032 = vmatprep.subr.mxu0 0.0
    %v1033 = vand.u32 %v313, 4294901760
    %1034 = vmatpush1.msra.mxu0 %v1033
    %1035 = vmatprep.subr.mxu0 0.0
    %v1036 = vand.u32 %v314, 4294901760
    %1037 = vmatpush1.msra.mxu0 %v1036
    %1038 = vmatprep.subr.mxu0 0.0
    %v1039 = vand.u32 %v315, 4294901760
    %1040 = vmatpush1.msra.mxu0 %v1039
    %1041 = vmatprep.subr.mxu0 0.0
    %v1042 = vand.u32 %v316, 4294901760
    %1043 = vmatpush1.msra.mxu0 %v1042
    %1044 = vmatprep.subr.mxu0 0.0
    %v1045 = vand.u32 %v317, 4294901760
    %1046 = vmatpush1.msra.mxu0 %v1045
    %1047 = vmatprep.subr.mxu0 0.0
    %v1048 = vand.u32 %v318, 4294901760
    %1049 = vmatpush1.msra.mxu0 %v1048
    %1050 = vmatprep.subr.mxu0 0.0
    %v1051 = vand.u32 %v319, 4294901760
    %1052 = vmatpush1.msra.mxu0 %v1051
    %1053 = vmatprep.subr.mxu0 0.0
    %v1054 = vand.u32 %v320, 4294901760
    %1055 = vmatpush1.msra.mxu0 %v1054
    %1056 = vmatprep.subr.mxu0 0.0
    %v1057 = vand.u32 %v321, 4294901760
    %1058 = vmatpush1.msra.mxu0 %v1057
    %1059 = vmatprep.subr.mxu0 0.0
    %v1060 = vand.u32 %v322, 4294901760
    %1061 = vmatpush1.msra.mxu0 %v1060
    %1062 = vmatprep.subr.mxu0 0.0
    %v1063 = vand.u32 %v323, 4294901760
    %1064 = vmatpush1.msra.mxu0 %v1063
    %1065 = vmatprep.subr.mxu0 0.0
    %v1066 = vand.u32 %v324, 4294901760
    %1067 = vmatpush1.msra.mxu0 %v1066
    %1068 = vmatprep.subr.mxu0 0.0
    %v1069 = vand.u32 %v325, 4294901760
    %1070 = vmatpush1.msra.mxu0 %v1069
    %1071 = vmatprep.subr.mxu0 0.0
    %v1072 = vand.u32 %v326, 4294901760
    %1073 = vmatpush1.msra.mxu0 %v1072
    %1074 = vmatprep.subr.mxu0 0.0
    %v1075 = vand.u32 %v327, 4294901760
    %1076 = vmatpush1.msra.mxu0 %v1075
    %1077 = vmatprep.subr.mxu0 0.0
    %v1078 = vand.u32 %v328, 4294901760
    %1079 = vmatpush1.msra.mxu0 %v1078
    %1080 = vmatprep.subr.mxu0 0.0
    %v1081 = vand.u32 %v329, 4294901760
    %1082 = vmatpush1.msra.mxu0 %v1081
    %1083 = vmatprep.subr.mxu0 0.0
    %v1084 = vand.u32 %v330, 4294901760
    %1085 = vmatpush1.msra.mxu0 %v1084
    %v1086 = vand.u32 %v450, 4294901760
    %v1087 = vsub.f32 %v450, %v1086
    %v1088 = vand.u32 %v1087, 4294901760
    %1089 = vmatprep.mubr.f32.mxu0 %v1088
    %v1090 = vand.u32 %v449, 4294901760
    %v1091 = vsub.f32 %v449, %v1090
    %v1092 = vand.u32 %v1091, 4294901760
    %1093 = vmatmul.mubr.f32.gmra.mrb[0].mxu0 %v1092
    %v1094 = vpop.f32.mrb[0].mxu0
    %v1095 = vadd.f32 %v978, %v1094
    %v1096 = vpop.f32.mrb[0].mxu0
    %v1097 = vand.u32 %v460, 4294901760
    %v1098 = vsub.f32 %v460, %v1097
    %v1099 = vand.u32 %v1098, 4294901760
    %1100 = vmatprep.mubr.f32.mxu0 %v1099
    %v1101 = vand.u32 %v459, 4294901760
    %v1102 = vsub.f32 %v459, %v1101
    %v1103 = vand.u32 %v1102, 4294901760
    %1104 = vmatmul.mubr.f32.gmra.mrb[0].mxu0 %v1103
    %v1105 = vpop.f32.mrb[0].mxu0
    %v1106 = vadd.f32 %v987, %v1105
    %v1107 = vpop.f32.mrb[0].mxu0
    %1108 = vdwg.mxu0
    %1109 = vmatprep.subr.mxu0 0.0
    %v1110 = vand.u32 %v299, 4294901760
    %v1111 = vsub.f32 %v299, %v1110
    %v1112 = vand.u32 %v1111, 4294901760
    %1113 = vmatpush1.msra.mxu0 %v1112
    %1114 = vmatprep.subr.mxu0 0.0
    %v1115 = vand.u32 %v300, 4294901760
    %v1116 = vsub.f32 %v300, %v1115
    %v1117 = vand.u32 %v1116, 4294901760
    %1118 = vmatpush1.msra.mxu0 %v1117
    %1119 = vmatprep.subr.mxu0 0.0
    %v1120 = vand.u32 %v301, 4294901760
    %v1121 = vsub.f32 %v301, %v1120
    %v1122 = vand.u32 %v1121, 4294901760
    %1123 = vmatpush1.msra.mxu0 %v1122
    %1124 = vmatprep.subr.mxu0 0.0
    %v1125 = vand.u32 %v302, 4294901760
    %v1126 = vsub.f32 %v302, %v1125
    %v1127 = vand.u32 %v1126, 4294901760
    %1128 = vmatpush1.msra.mxu0 %v1127
    %1129 = vmatprep.subr.mxu0 0.0
    %v1130 = vand.u32 %v303, 4294901760
    %v1131 = vsub.f32 %v303, %v1130
    %v1132 = vand.u32 %v1131, 4294901760
    %1133 = vmatpush1.msra.mxu0 %v1132
    %1134 = vmatprep.subr.mxu0 0.0
    %v1135 = vand.u32 %v304, 4294901760
    %v1136 = vsub.f32 %v304, %v1135
    %v1137 = vand.u32 %v1136, 4294901760
    %1138 = vmatpush1.msra.mxu0 %v1137
    %1139 = vmatprep.subr.mxu0 0.0
    %v1140 = vand.u32 %v305, 4294901760
    %v1141 = vsub.f32 %v305, %v1140
    %v1142 = vand.u32 %v1141, 4294901760
    %1143 = vmatpush1.msra.mxu0 %v1142
    %1144 = vmatprep.subr.mxu0 0.0
    %v1145 = vand.u32 %v306, 4294901760
    %v1146 = vsub.f32 %v306, %v1145
    %v1147 = vand.u32 %v1146, 4294901760
    %1148 = vmatpush1.msra.mxu0 %v1147
    %1149 = vmatprep.subr.mxu0 0.0
    %v1150 = vand.u32 %v307, 4294901760
    %v1151 = vsub.f32 %v307, %v1150
    %v1152 = vand.u32 %v1151, 4294901760
    %1153 = vmatpush1.msra.mxu0 %v1152
    %1154 = vmatprep.subr.mxu0 0.0
    %v1155 = vand.u32 %v308, 4294901760
    %v1156 = vsub.f32 %v308, %v1155
    %v1157 = vand.u32 %v1156, 4294901760
    %1158 = vmatpush1.msra.mxu0 %v1157
    %1159 = vmatprep.subr.mxu0 0.0
    %v1160 = vand.u32 %v309, 4294901760
    %v1161 = vsub.f32 %v309, %v1160
    %v1162 = vand.u32 %v1161, 4294901760
    %1163 = vmatpush1.msra.mxu0 %v1162
    %1164 = vmatprep.subr.mxu0 0.0
    %v1165 = vand.u32 %v310, 4294901760
    %v1166 = vsub.f32 %v310, %v1165
    %v1167 = vand.u32 %v1166, 4294901760
    %1168 = vmatpush1.msra.mxu0 %v1167
    %1169 = vmatprep.subr.mxu0 0.0
    %v1170 = vand.u32 %v311, 4294901760
    %v1171 = vsub.f32 %v311, %v1170
    %v1172 = vand.u32 %v1171, 4294901760
    %1173 = vmatpush1.msra.mxu0 %v1172
    %1174 = vmatprep.subr.mxu0 0.0
    %v1175 = vand.u32 %v312, 4294901760
    %v1176 = vsub.f32 %v312, %v1175
    %v1177 = vand.u32 %v1176, 4294901760
    %1178 = vmatpush1.msra.mxu0 %v1177
    %1179 = vmatprep.subr.mxu0 0.0
    %v1180 = vand.u32 %v313, 4294901760
    %v1181 = vsub.f32 %v313, %v1180
    %v1182 = vand.u32 %v1181, 4294901760
    %1183 = vmatpush1.msra.mxu0 %v1182
    %1184 = vmatprep.subr.mxu0 0.0
    %v1185 = vand.u32 %v314, 4294901760
    %v1186 = vsub.f32 %v314, %v1185
    %v1187 = vand.u32 %v1186, 4294901760
    %1188 = vmatpush1.msra.mxu0 %v1187
    %1189 = vmatprep.subr.mxu0 0.0
    %v1190 = vand.u32 %v315, 4294901760
    %v1191 = vsub.f32 %v315, %v1190
    %v1192 = vand.u32 %v1191, 4294901760
    %1193 = vmatpush1.msra.mxu0 %v1192
    %1194 = vmatprep.subr.mxu0 0.0
    %v1195 = vand.u32 %v316, 4294901760
    %v1196 = vsub.f32 %v316, %v1195
    %v1197 = vand.u32 %v1196, 4294901760
    %1198 = vmatpush1.msra.mxu0 %v1197
    %1199 = vmatprep.subr.mxu0 0.0
    %v1200 = vand.u32 %v317, 4294901760
    %v1201 = vsub.f32 %v317, %v1200
    %v1202 = vand.u32 %v1201, 4294901760
    %1203 = vmatpush1.msra.mxu0 %v1202
    %1204 = vmatprep.subr.mxu0 0.0
    %v1205 = vand.u32 %v318, 4294901760
    %v1206 = vsub.f32 %v318, %v1205
    %v1207 = vand.u32 %v1206, 4294901760
    %1208 = vmatpush1.msra.mxu0 %v1207
    %1209 = vmatprep.subr.mxu0 0.0
    %v1210 = vand.u32 %v319, 4294901760
    %v1211 = vsub.f32 %v319, %v1210
    %v1212 = vand.u32 %v1211, 4294901760
    %1213 = vmatpush1.msra.mxu0 %v1212
    %1214 = vmatprep.subr.mxu0 0.0
    %v1215 = vand.u32 %v320, 4294901760
    %v1216 = vsub.f32 %v320, %v1215
    %v1217 = vand.u32 %v1216, 4294901760
    %1218 = vmatpush1.msra.mxu0 %v1217
    %1219 = vmatprep.subr.mxu0 0.0
    %v1220 = vand.u32 %v321, 4294901760
    %v1221 = vsub.f32 %v321, %v1220
    %v1222 = vand.u32 %v1221, 4294901760
    %1223 = vmatpush1.msra.mxu0 %v1222
    %1224 = vmatprep.subr.mxu0 0.0
    %v1225 = vand.u32 %v322, 4294901760
    %v1226 = vsub.f32 %v322, %v1225
    %v1227 = vand.u32 %v1226, 4294901760
    %1228 = vmatpush1.msra.mxu0 %v1227
    %1229 = vmatprep.subr.mxu0 0.0
    %v1230 = vand.u32 %v323, 4294901760
    %v1231 = vsub.f32 %v323, %v1230
    %v1232 = vand.u32 %v1231, 4294901760
    %1233 = vmatpush1.msra.mxu0 %v1232
    %1234 = vmatprep.subr.mxu0 0.0
    %v1235 = vand.u32 %v324, 4294901760
    %v1236 = vsub.f32 %v324, %v1235
    %v1237 = vand.u32 %v1236, 4294901760
    %1238 = vmatpush1.msra.mxu0 %v1237
    %1239 = vmatprep.subr.mxu0 0.0
    %v1240 = vand.u32 %v325, 4294901760
    %v1241 = vsub.f32 %v325, %v1240
    %v1242 = vand.u32 %v1241, 4294901760
    %1243 = vmatpush1.msra.mxu0 %v1242
    %1244 = vmatprep.subr.mxu0 0.0
    %v1245 = vand.u32 %v326, 4294901760
    %v1246 = vsub.f32 %v326, %v1245
    %v1247 = vand.u32 %v1246, 4294901760
    %1248 = vmatpush1.msra.mxu0 %v1247
    %1249 = vmatprep.subr.mxu0 0.0
    %v1250 = vand.u32 %v327, 4294901760
    %v1251 = vsub.f32 %v327, %v1250
    %v1252 = vand.u32 %v1251, 4294901760
    %1253 = vmatpush1.msra.mxu0 %v1252
    %1254 = vmatprep.subr.mxu0 0.0
    %v1255 = vand.u32 %v328, 4294901760
    %v1256 = vsub.f32 %v328, %v1255
    %v1257 = vand.u32 %v1256, 4294901760
    %1258 = vmatpush1.msra.mxu0 %v1257
    %1259 = vmatprep.subr.mxu0 0.0
    %v1260 = vand.u32 %v329, 4294901760
    %v1261 = vsub.f32 %v329, %v1260
    %v1262 = vand.u32 %v1261, 4294901760
    %1263 = vmatpush1.msra.mxu0 %v1262
    %1264 = vmatprep.subr.mxu0 0.0
    %v1265 = vand.u32 %v330, 4294901760
    %v1266 = vsub.f32 %v330, %v1265
    %v1267 = vand.u32 %v1266, 4294901760
    %1268 = vmatpush1.msra.mxu0 %v1267
    %v1269 = vand.u32 %v450, 4294901760
    %1270 = vmatprep.mubr.f32.mxu0 %v1269
    %v1271 = vand.u32 %v449, 4294901760
    %1272 = vmatmul.mubr.f32.gmra.mrb[0].mxu0 %v1271
    %v1273 = vpop.f32.mrb[0].mxu0
    %v1274 = vadd.f32 %v1095, %v1273
    %v1275 = vpop.f32.mrb[0].mxu0
    %v1276 = vand.u32 %v460, 4294901760
    %1277 = vmatprep.mubr.f32.mxu0 %v1276
    %v1278 = vand.u32 %v459, 4294901760
    %1279 = vmatmul.mubr.f32.gmra.mrb[0].mxu0 %v1278
    %v1280 = vpop.f32.mrb[0].mxu0
    %v1281 = vadd.f32 %v1106, %v1280
    %v1282 = vpop.f32.mrb[0].mxu0
    %1283 = vdwg.mxu0
    %1284 = vmatprep.subr.mxu0 0.0
    %v1285 = vand.u32 %v299, 4294901760
    %1286 = vmatpush1.msra.mxu0 %v1285
    %1287 = vmatprep.subr.mxu0 0.0
    %v1288 = vand.u32 %v300, 4294901760
    %1289 = vmatpush1.msra.mxu0 %v1288
    %1290 = vmatprep.subr.mxu0 0.0
    %v1291 = vand.u32 %v301, 4294901760
    %1292 = vmatpush1.msra.mxu0 %v1291
    %1293 = vmatprep.subr.mxu0 0.0
    %v1294 = vand.u32 %v302, 4294901760
    %1295 = vmatpush1.msra.mxu0 %v1294
    %1296 = vmatprep.subr.mxu0 0.0
    %v1297 = vand.u32 %v303, 4294901760
    %1298 = vmatpush1.msra.mxu0 %v1297
    %1299 = vmatprep.subr.mxu0 0.0
    %v1300 = vand.u32 %v304, 4294901760
    %1301 = vmatpush1.msra.mxu0 %v1300
    %1302 = vmatprep.subr.mxu0 0.0
    %v1303 = vand.u32 %v305, 4294901760
    %1304 = vmatpush1.msra.mxu0 %v1303
    %1305 = vmatprep.subr.mxu0 0.0
    %v1306 = vand.u32 %v306, 4294901760
    %1307 = vmatpush1.msra.mxu0 %v1306
    %1308 = vmatprep.subr.mxu0 0.0
    %v1309 = vand.u32 %v307, 4294901760
    %1310 = vmatpush1.msra.mxu0 %v1309
    %1311 = vmatprep.subr.mxu0 0.0
    %v1312 = vand.u32 %v308, 4294901760
    %1313 = vmatpush1.msra.mxu0 %v1312
    %1314 = vmatprep.subr.mxu0 0.0
    %v1315 = vand.u32 %v309, 4294901760
    %1316 = vmatpush1.msra.mxu0 %v1315
    %1317 = vmatprep.subr.mxu0 0.0
    %v1318 = vand.u32 %v310, 4294901760
    %1319 = vmatpush1.msra.mxu0 %v1318
    %1320 = vmatprep.subr.mxu0 0.0
    %v1321 = vand.u32 %v311, 4294901760
    %1322 = vmatpush1.msra.mxu0 %v1321
    %1323 = vmatprep.subr.mxu0 0.0
    %v1324 = vand.u32 %v312, 4294901760
    %1325 = vmatpush1.msra.mxu0 %v1324
    %1326 = vmatprep.subr.mxu0 0.0
    %v1327 = vand.u32 %v313, 4294901760
    %1328 = vmatpush1.msra.mxu0 %v1327
    %1329 = vmatprep.subr.mxu0 0.0
    %v1330 = vand.u32 %v314, 4294901760
    %1331 = vmatpush1.msra.mxu0 %v1330
    %1332 = vmatprep.subr.mxu0 0.0
    %v1333 = vand.u32 %v315, 4294901760
    %1334 = vmatpush1.msra.mxu0 %v1333
    %1335 = vmatprep.subr.mxu0 0.0
    %v1336 = vand.u32 %v316, 4294901760
    %1337 = vmatpush1.msra.mxu0 %v1336
    %1338 = vmatprep.subr.mxu0 0.0
    %v1339 = vand.u32 %v317, 4294901760
    %1340 = vmatpush1.msra.mxu0 %v1339
    %1341 = vmatprep.subr.mxu0 0.0
    %v1342 = vand.u32 %v318, 4294901760
    %1343 = vmatpush1.msra.mxu0 %v1342
    %1344 = vmatprep.subr.mxu0 0.0
    %v1345 = vand.u32 %v319, 4294901760
    %1346 = vmatpush1.msra.mxu0 %v1345
    %1347 = vmatprep.subr.mxu0 0.0
    %v1348 = vand.u32 %v320, 4294901760
    %1349 = vmatpush1.msra.mxu0 %v1348
    %1350 = vmatprep.subr.mxu0 0.0
    %v1351 = vand.u32 %v321, 4294901760
    %1352 = vmatpush1.msra.mxu0 %v1351
    %1353 = vmatprep.subr.mxu0 0.0
    %v1354 = vand.u32 %v322, 4294901760
    %1355 = vmatpush1.msra.mxu0 %v1354
    %1356 = vmatprep.subr.mxu0 0.0
    %v1357 = vand.u32 %v323, 4294901760
    %1358 = vmatpush1.msra.mxu0 %v1357
    %1359 = vmatprep.subr.mxu0 0.0
    %v1360 = vand.u32 %v324, 4294901760
    %1361 = vmatpush1.msra.mxu0 %v1360
    %1362 = vmatprep.subr.mxu0 0.0
    %v1363 = vand.u32 %v325, 4294901760
    %1364 = vmatpush1.msra.mxu0 %v1363
    %1365 = vmatprep.subr.mxu0 0.0
    %v1366 = vand.u32 %v326, 4294901760
    %1367 = vmatpush1.msra.mxu0 %v1366
    %1368 = vmatprep.subr.mxu0 0.0
    %v1369 = vand.u32 %v327, 4294901760
    %1370 = vmatpush1.msra.mxu0 %v1369
    %1371 = vmatprep.subr.mxu0 0.0
    %v1372 = vand.u32 %v328, 4294901760
    %1373 = vmatpush1.msra.mxu0 %v1372
    %1374 = vmatprep.subr.mxu0 0.0
    %v1375 = vand.u32 %v329, 4294901760
    %1376 = vmatpush1.msra.mxu0 %v1375
    %1377 = vmatprep.subr.mxu0 0.0
    %v1378 = vand.u32 %v330, 4294901760
    %1379 = vmatpush1.msra.mxu0 %v1378
    %v1380 = vand.u32 %v450, 4294901760
    %1381 = vmatprep.mubr.f32.mxu0 %v1380
    %v1382 = vand.u32 %v449, 4294901760
    %1383 = vmatmul.mubr.f32.gmra.mrb[0].mxu0 %v1382
    %v1384 = vpop.f32.mrb[0].mxu0
    %v1385 = vadd.f32 %v1274, %v1384
    %v1386 = vpop.f32.mrb[0].mxu0
    %v1387 = vand.u32 %v460, 4294901760
    %1388 = vmatprep.mubr.f32.mxu0 %v1387
    %v1389 = vand.u32 %v459, 4294901760
    %1390 = vmatmul.mubr.f32.gmra.mrb[0].mxu0 %v1389
    %v1391 = vpop.f32.mrb[0].mxu0
    %v1392 = vadd.f32 %v1281, %v1391
    %v1393 = vpop.f32.mrb[0].mxu0
    %1394 = vdwg.mxu0
    %1395 = vmatprep.subr.mxu0 0.0
    %v1396 = vand.u32 %v331, 4294901760
    %1397 = vmatpush1.msra.mxu0 %v1396
    %1398 = vmatprep.subr.mxu0 0.0
    %v1399 = vand.u32 %v332, 4294901760
    %1400 = vmatpush1.msra.mxu0 %v1399
    %1401 = vmatprep.subr.mxu0 0.0
    %v1402 = vand.u32 %v333, 4294901760
    %1403 = vmatpush1.msra.mxu0 %v1402
    %1404 = vmatprep.subr.mxu0 0.0
    %v1405 = vand.u32 %v334, 4294901760
    %1406 = vmatpush1.msra.mxu0 %v1405
    %1407 = vmatprep.subr.mxu0 0.0
    %v1408 = vand.u32 %v335, 4294901760
    %1409 = vmatpush1.msra.mxu0 %v1408
    %1410 = vmatprep.subr.mxu0 0.0
    %v1411 = vand.u32 %v336, 4294901760
    %1412 = vmatpush1.msra.mxu0 %v1411
    %1413 = vmatprep.subr.mxu0 0.0
    %v1414 = vand.u32 %v337, 4294901760
    %1415 = vmatpush1.msra.mxu0 %v1414
    %1416 = vmatprep.subr.mxu0 0.0
    %v1417 = vand.u32 %v338, 4294901760
    %1418 = vmatpush1.msra.mxu0 %v1417
    %1419 = vmatprep.subr.mxu0 0.0
    %v1420 = vand.u32 %v339, 4294901760
    %1421 = vmatpush1.msra.mxu0 %v1420
    %1422 = vmatprep.subr.mxu0 0.0
    %v1423 = vand.u32 %v340, 4294901760
    %1424 = vmatpush1.msra.mxu0 %v1423
    %1425 = vmatprep.subr.mxu0 0.0
    %v1426 = vand.u32 %v341, 4294901760
    %1427 = vmatpush1.msra.mxu0 %v1426
    %1428 = vmatprep.subr.mxu0 0.0
    %v1429 = vand.u32 %v342, 4294901760
    %1430 = vmatpush1.msra.mxu0 %v1429
    %1431 = vmatprep.subr.mxu0 0.0
    %v1432 = vand.u32 %v343, 4294901760
    %1433 = vmatpush1.msra.mxu0 %v1432
    %1434 = vmatprep.subr.mxu0 0.0
    %v1435 = vand.u32 %v344, 4294901760
    %1436 = vmatpush1.msra.mxu0 %v1435
    %1437 = vmatprep.subr.mxu0 0.0
    %v1438 = vand.u32 %v345, 4294901760
    %1439 = vmatpush1.msra.mxu0 %v1438
    %1440 = vmatprep.subr.mxu0 0.0
    %v1441 = vand.u32 %v346, 4294901760
    %1442 = vmatpush1.msra.mxu0 %v1441
    %1443 = vmatprep.subr.mxu0 0.0
    %v1444 = vand.u32 %v347, 4294901760
    %1445 = vmatpush1.msra.mxu0 %v1444
    %1446 = vmatprep.subr.mxu0 0.0
    %v1447 = vand.u32 %v348, 4294901760
    %1448 = vmatpush1.msra.mxu0 %v1447
    %1449 = vmatprep.subr.mxu0 0.0
    %v1450 = vand.u32 %v349, 4294901760
    %1451 = vmatpush1.msra.mxu0 %v1450
    %1452 = vmatprep.subr.mxu0 0.0
    %v1453 = vand.u32 %v350, 4294901760
    %1454 = vmatpush1.msra.mxu0 %v1453
    %1455 = vmatprep.subr.mxu0 0.0
    %v1456 = vand.u32 %v351, 4294901760
    %1457 = vmatpush1.msra.mxu0 %v1456
    %1458 = vmatprep.subr.mxu0 0.0
    %v1459 = vand.u32 %v352, 4294901760
    %1460 = vmatpush1.msra.mxu0 %v1459
    %1461 = vmatprep.subr.mxu0 0.0
    %v1462 = vand.u32 %v353, 4294901760
    %1463 = vmatpush1.msra.mxu0 %v1462
    %1464 = vmatprep.subr.mxu0 0.0
    %v1465 = vand.u32 %v354, 4294901760
    %1466 = vmatpush1.msra.mxu0 %v1465
    %1467 = vmatprep.subr.mxu0 0.0
    %v1468 = vand.u32 %v355, 4294901760
    %1469 = vmatpush1.msra.mxu0 %v1468
    %1470 = vmatprep.subr.mxu0 0.0
    %v1471 = vand.u32 %v356, 4294901760
    %1472 = vmatpush1.msra.mxu0 %v1471
    %1473 = vmatprep.subr.mxu0 0.0
    %v1474 = vand.u32 %v357, 4294901760
    %1475 = vmatpush1.msra.mxu0 %v1474
    %1476 = vmatprep.subr.mxu0 0.0
    %v1477 = vand.u32 %v358, 4294901760
    %1478 = vmatpush1.msra.mxu0 %v1477
    %1479 = vmatprep.subr.mxu0 0.0
    %v1480 = vand.u32 %v359, 4294901760
    %1481 = vmatpush1.msra.mxu0 %v1480
    %1482 = vmatprep.subr.mxu0 0.0
    %v1483 = vand.u32 %v360, 4294901760
    %1484 = vmatpush1.msra.mxu0 %v1483
    %1485 = vmatprep.subr.mxu0 0.0
    %v1486 = vand.u32 %v361, 4294901760
    %1487 = vmatpush1.msra.mxu0 %v1486
    %1488 = vmatprep.subr.mxu0 0.0
    %v1489 = vand.u32 %v362, 4294901760
    %1490 = vmatpush1.msra.mxu0 %v1489
    %v1491 = vand.u32 %v452, 4294901760
    %v1492 = vsub.f32 %v452, %v1491
    %v1493 = vand.u32 %v1492, 4294901760
    %v1494 = vsub.f32 %v1492, %v1493
    %v1495 = vand.u32 %v1494, 4294901760
    %1496 = vmatprep.mubr.f32.mxu0 %v1495
    %v1497 = vand.u32 %v451, 4294901760
    %v1498 = vsub.f32 %v451, %v1497
    %v1499 = vand.u32 %v1498, 4294901760
    %v1500 = vsub.f32 %v1498, %v1499
    %v1501 = vand.u32 %v1500, 4294901760
    %1502 = vmatmul.mubr.f32.gmra.mrb[0].mxu0 %v1501
    %v1503 = vpop.f32.mrb[0].mxu0
    %v1504 = vadd.f32 %v1385, %v1503
    %v1505 = vpop.f32.mrb[0].mxu0
    %v1506 = vand.u32 %v462, 4294901760
    %v1507 = vsub.f32 %v462, %v1506
    %v1508 = vand.u32 %v1507, 4294901760
    %v1509 = vsub.f32 %v1507, %v1508
    %v1510 = vand.u32 %v1509, 4294901760
    %1511 = vmatprep.mubr.f32.mxu0 %v1510
    %v1512 = vand.u32 %v461, 4294901760
    %v1513 = vsub.f32 %v461, %v1512
    %v1514 = vand.u32 %v1513, 4294901760
    %v1515 = vsub.f32 %v1513, %v1514
    %v1516 = vand.u32 %v1515, 4294901760
    %1517 = vmatmul.mubr.f32.gmra.mrb[0].mxu0 %v1516
    %v1518 = vpop.f32.mrb[0].mxu0
    %v1519 = vadd.f32 %v1392, %v1518
    %v1520 = vpop.f32.mrb[0].mxu0
    %1521 = vdwg.mxu0
    %1522 = vmatprep.subr.mxu0 0.0
    %v1523 = vand.u32 %v331, 4294901760
    %v1524 = vsub.f32 %v331, %v1523
    %v1525 = vand.u32 %v1524, 4294901760
    %v1526 = vsub.f32 %v1524, %v1525
    %v1527 = vand.u32 %v1526, 4294901760
    %1528 = vmatpush1.msra.mxu0 %v1527
    %1529 = vmatprep.subr.mxu0 0.0
    %v1530 = vand.u32 %v332, 4294901760
    %v1531 = vsub.f32 %v332, %v1530
    %v1532 = vand.u32 %v1531, 4294901760
    %v1533 = vsub.f32 %v1531, %v1532
    %v1534 = vand.u32 %v1533, 4294901760
    %1535 = vmatpush1.msra.mxu0 %v1534
    %1536 = vmatprep.subr.mxu0 0.0
    %v1537 = vand.u32 %v333, 4294901760
    %v1538 = vsub.f32 %v333, %v1537
    %v1539 = vand.u32 %v1538, 4294901760
    %v1540 = vsub.f32 %v1538, %v1539
    %v1541 = vand.u32 %v1540, 4294901760
    %1542 = vmatpush1.msra.mxu0 %v1541
    %1543 = vmatprep.subr.mxu0 0.0
    %v1544 = vand.u32 %v334, 4294901760
    %v1545 = vsub.f32 %v334, %v1544
    %v1546 = vand.u32 %v1545, 4294901760
    %v1547 = vsub.f32 %v1545, %v1546
    %v1548 = vand.u32 %v1547, 4294901760
    %1549 = vmatpush1.msra.mxu0 %v1548
    %1550 = vmatprep.subr.mxu0 0.0
    %v1551 = vand.u32 %v335, 4294901760
    %v1552 = vsub.f32 %v335, %v1551
    %v1553 = vand.u32 %v1552, 4294901760
    %v1554 = vsub.f32 %v1552, %v1553
    %v1555 = vand.u32 %v1554, 4294901760
    %1556 = vmatpush1.msra.mxu0 %v1555
    %1557 = vmatprep.subr.mxu0 0.0
    %v1558 = vand.u32 %v336, 4294901760
    %v1559 = vsub.f32 %v336, %v1558
    %v1560 = vand.u32 %v1559, 4294901760
    %v1561 = vsub.f32 %v1559, %v1560
    %v1562 = vand.u32 %v1561, 4294901760
    %1563 = vmatpush1.msra.mxu0 %v1562
    %1564 = vmatprep.subr.mxu0 0.0
    %v1565 = vand.u32 %v337, 4294901760
    %v1566 = vsub.f32 %v337, %v1565
    %v1567 = vand.u32 %v1566, 4294901760
    %v1568 = vsub.f32 %v1566, %v1567
    %v1569 = vand.u32 %v1568, 4294901760
    %1570 = vmatpush1.msra.mxu0 %v1569
    %1571 = vmatprep.subr.mxu0 0.0
    %v1572 = vand.u32 %v338, 4294901760
    %v1573 = vsub.f32 %v338, %v1572
    %v1574 = vand.u32 %v1573, 4294901760
    %v1575 = vsub.f32 %v1573, %v1574
    %v1576 = vand.u32 %v1575, 4294901760
    %1577 = vmatpush1.msra.mxu0 %v1576
    %1578 = vmatprep.subr.mxu0 0.0
    %v1579 = vand.u32 %v339, 4294901760
    %v1580 = vsub.f32 %v339, %v1579
    %v1581 = vand.u32 %v1580, 4294901760
    %v1582 = vsub.f32 %v1580, %v1581
    %v1583 = vand.u32 %v1582, 4294901760
    %1584 = vmatpush1.msra.mxu0 %v1583
    %1585 = vmatprep.subr.mxu0 0.0
    %v1586 = vand.u32 %v340, 4294901760
    %v1587 = vsub.f32 %v340, %v1586
    %v1588 = vand.u32 %v1587, 4294901760
    %v1589 = vsub.f32 %v1587, %v1588
    %v1590 = vand.u32 %v1589, 4294901760
    %1591 = vmatpush1.msra.mxu0 %v1590
    %1592 = vmatprep.subr.mxu0 0.0
    %v1593 = vand.u32 %v341, 4294901760
    %v1594 = vsub.f32 %v341, %v1593
    %v1595 = vand.u32 %v1594, 4294901760
    %v1596 = vsub.f32 %v1594, %v1595
    %v1597 = vand.u32 %v1596, 4294901760
    %1598 = vmatpush1.msra.mxu0 %v1597
    %1599 = vmatprep.subr.mxu0 0.0
    %v1600 = vand.u32 %v342, 4294901760
    %v1601 = vsub.f32 %v342, %v1600
    %v1602 = vand.u32 %v1601, 4294901760
    %v1603 = vsub.f32 %v1601, %v1602
    %v1604 = vand.u32 %v1603, 4294901760
    %1605 = vmatpush1.msra.mxu0 %v1604
    %1606 = vmatprep.subr.mxu0 0.0
    %v1607 = vand.u32 %v343, 4294901760
    %v1608 = vsub.f32 %v343, %v1607
    %v1609 = vand.u32 %v1608, 4294901760
    %v1610 = vsub.f32 %v1608, %v1609
    %v1611 = vand.u32 %v1610, 4294901760
    %1612 = vmatpush1.msra.mxu0 %v1611
    %1613 = vmatprep.subr.mxu0 0.0
    %v1614 = vand.u32 %v344, 4294901760
    %v1615 = vsub.f32 %v344, %v1614
    %v1616 = vand.u32 %v1615, 4294901760
    %v1617 = vsub.f32 %v1615, %v1616
    %v1618 = vand.u32 %v1617, 4294901760
    %1619 = vmatpush1.msra.mxu0 %v1618
    %1620 = vmatprep.subr.mxu0 0.0
    %v1621 = vand.u32 %v345, 4294901760
    %v1622 = vsub.f32 %v345, %v1621
    %v1623 = vand.u32 %v1622, 4294901760
    %v1624 = vsub.f32 %v1622, %v1623
    %v1625 = vand.u32 %v1624, 4294901760
    %1626 = vmatpush1.msra.mxu0 %v1625
    %1627 = vmatprep.subr.mxu0 0.0
    %v1628 = vand.u32 %v346, 4294901760
    %v1629 = vsub.f32 %v346, %v1628
    %v1630 = vand.u32 %v1629, 4294901760
    %v1631 = vsub.f32 %v1629, %v1630
    %v1632 = vand.u32 %v1631, 4294901760
    %1633 = vmatpush1.msra.mxu0 %v1632
    %1634 = vmatprep.subr.mxu0 0.0
    %v1635 = vand.u32 %v347, 4294901760
    %v1636 = vsub.f32 %v347, %v1635
    %v1637 = vand.u32 %v1636, 4294901760
    %v1638 = vsub.f32 %v1636, %v1637
    %v1639 = vand.u32 %v1638, 4294901760
    %1640 = vmatpush1.msra.mxu0 %v1639
    %1641 = vmatprep.subr.mxu0 0.0
    %v1642 = vand.u32 %v348, 4294901760
    %v1643 = vsub.f32 %v348, %v1642
    %v1644 = vand.u32 %v1643, 4294901760
    %v1645 = vsub.f32 %v1643, %v1644
    %v1646 = vand.u32 %v1645, 4294901760
    %1647 = vmatpush1.msra.mxu0 %v1646
    %1648 = vmatprep.subr.mxu0 0.0
    %v1649 = vand.u32 %v349, 4294901760
    %v1650 = vsub.f32 %v349, %v1649
    %v1651 = vand.u32 %v1650, 4294901760
    %v1652 = vsub.f32 %v1650, %v1651
    %v1653 = vand.u32 %v1652, 4294901760
    %1654 = vmatpush1.msra.mxu0 %v1653
    %1655 = vmatprep.subr.mxu0 0.0
    %v1656 = vand.u32 %v350, 4294901760
    %v1657 = vsub.f32 %v350, %v1656
    %v1658 = vand.u32 %v1657, 4294901760
    %v1659 = vsub.f32 %v1657, %v1658
    %v1660 = vand.u32 %v1659, 4294901760
    %1661 = vmatpush1.msra.mxu0 %v1660
    %1662 = vmatprep.subr.mxu0 0.0
    %v1663 = vand.u32 %v351, 4294901760
    %v1664 = vsub.f32 %v351, %v1663
    %v1665 = vand.u32 %v1664, 4294901760
    %v1666 = vsub.f32 %v1664, %v1665
    %v1667 = vand.u32 %v1666, 4294901760
    %1668 = vmatpush1.msra.mxu0 %v1667
    %1669 = vmatprep.subr.mxu0 0.0
    %v1670 = vand.u32 %v352, 4294901760
    %v1671 = vsub.f32 %v352, %v1670
    %v1672 = vand.u32 %v1671, 4294901760
    %v1673 = vsub.f32 %v1671, %v1672
    %v1674 = vand.u32 %v1673, 4294901760
    %1675 = vmatpush1.msra.mxu0 %v1674
    %1676 = vmatprep.subr.mxu0 0.0
    %v1677 = vand.u32 %v353, 4294901760
    %v1678 = vsub.f32 %v353, %v1677
    %v1679 = vand.u32 %v1678, 4294901760
    %v1680 = vsub.f32 %v1678, %v1679
    %v1681 = vand.u32 %v1680, 4294901760
    %1682 = vmatpush1.msra.mxu0 %v1681
    %1683 = vmatprep.subr.mxu0 0.0
    %v1684 = vand.u32 %v354, 4294901760
    %v1685 = vsub.f32 %v354, %v1684
    %v1686 = vand.u32 %v1685, 4294901760
    %v1687 = vsub.f32 %v1685, %v1686
    %v1688 = vand.u32 %v1687, 4294901760
    %1689 = vmatpush1.msra.mxu0 %v1688
    %1690 = vmatprep.subr.mxu0 0.0
    %v1691 = vand.u32 %v355, 4294901760
    %v1692 = vsub.f32 %v355, %v1691
    %v1693 = vand.u32 %v1692, 4294901760
    %v1694 = vsub.f32 %v1692, %v1693
    %v1695 = vand.u32 %v1694, 4294901760
    %1696 = vmatpush1.msra.mxu0 %v1695
    %1697 = vmatprep.subr.mxu0 0.0
    %v1698 = vand.u32 %v356, 4294901760
    %v1699 = vsub.f32 %v356, %v1698
    %v1700 = vand.u32 %v1699, 4294901760
    %v1701 = vsub.f32 %v1699, %v1700
    %v1702 = vand.u32 %v1701, 4294901760
    %1703 = vmatpush1.msra.mxu0 %v1702
    %1704 = vmatprep.subr.mxu0 0.0
    %v1705 = vand.u32 %v357, 4294901760
    %v1706 = vsub.f32 %v357, %v1705
    %v1707 = vand.u32 %v1706, 4294901760
    %v1708 = vsub.f32 %v1706, %v1707
    %v1709 = vand.u32 %v1708, 4294901760
    %1710 = vmatpush1.msra.mxu0 %v1709
    %1711 = vmatprep.subr.mxu0 0.0
    %v1712 = vand.u32 %v358, 4294901760
    %v1713 = vsub.f32 %v358, %v1712
    %v1714 = vand.u32 %v1713, 4294901760
    %v1715 = vsub.f32 %v1713, %v1714
    %v1716 = vand.u32 %v1715, 4294901760
    %1717 = vmatpush1.msra.mxu0 %v1716
    %1718 = vmatprep.subr.mxu0 0.0
    %v1719 = vand.u32 %v359, 4294901760
    %v1720 = vsub.f32 %v359, %v1719
    %v1721 = vand.u32 %v1720, 4294901760
    %v1722 = vsub.f32 %v1720, %v1721
    %v1723 = vand.u32 %v1722, 4294901760
    %1724 = vmatpush1.msra.mxu0 %v1723
    %1725 = vmatprep.subr.mxu0 0.0
    %v1726 = vand.u32 %v360, 4294901760
    %v1727 = vsub.f32 %v360, %v1726
    %v1728 = vand.u32 %v1727, 4294901760
    %v1729 = vsub.f32 %v1727, %v1728
    %v1730 = vand.u32 %v1729, 4294901760
    %1731 = vmatpush1.msra.mxu0 %v1730
    %1732 = vmatprep.subr.mxu0 0.0
    %v1733 = vand.u32 %v361, 4294901760
    %v1734 = vsub.f32 %v361, %v1733
    %v1735 = vand.u32 %v1734, 4294901760
    %v1736 = vsub.f32 %v1734, %v1735
    %v1737 = vand.u32 %v1736, 4294901760
    %1738 = vmatpush1.msra.mxu0 %v1737
    %1739 = vmatprep.subr.mxu0 0.0
    %v1740 = vand.u32 %v362, 4294901760
    %v1741 = vsub.f32 %v362, %v1740
    %v1742 = vand.u32 %v1741, 4294901760
    %v1743 = vsub.f32 %v1741, %v1742
    %v1744 = vand.u32 %v1743, 4294901760
    %1745 = vmatpush1.msra.mxu0 %v1744
    %v1746 = vand.u32 %v452, 4294901760
    %1747 = vmatprep.mubr.f32.mxu0 %v1746
    %v1748 = vand.u32 %v451, 4294901760
    %1749 = vmatmul.mubr.f32.gmra.mrb[0].mxu0 %v1748
    %v1750 = vpop.f32.mrb[0].mxu0
    %v1751 = vadd.f32 %v1504, %v1750
    %v1752 = vpop.f32.mrb[0].mxu0
    %v1753 = vand.u32 %v462, 4294901760
    %1754 = vmatprep.mubr.f32.mxu0 %v1753
    %v1755 = vand.u32 %v461, 4294901760
    %1756 = vmatmul.mubr.f32.gmra.mrb[0].mxu0 %v1755
    %v1757 = vpop.f32.mrb[0].mxu0
    %v1758 = vadd.f32 %v1519, %v1757
    %v1759 = vpop.f32.mrb[0].mxu0
    %1760 = vdwg.mxu0
    %1761 = vmatprep.subr.mxu0 0.0
    %v1762 = vand.u32 %v331, 4294901760
    %v1763 = vsub.f32 %v331, %v1762
    %1764 = vmatpush1.msra.mxu0 %v1763
    %1765 = vmatprep.subr.mxu0 0.0
    %v1766 = vand.u32 %v332, 4294901760
    %v1767 = vsub.f32 %v332, %v1766
    %1768 = vmatpush1.msra.mxu0 %v1767
    %1769 = vmatprep.subr.mxu0 0.0
    %v1770 = vand.u32 %v333, 4294901760
    %v1771 = vsub.f32 %v333, %v1770
    %1772 = vmatpush1.msra.mxu0 %v1771
    %1773 = vmatprep.subr.mxu0 0.0
    %v1774 = vand.u32 %v334, 4294901760
    %v1775 = vsub.f32 %v334, %v1774
    %1776 = vmatpush1.msra.mxu0 %v1775
    %1777 = vmatprep.subr.mxu0 0.0
    %v1778 = vand.u32 %v335, 4294901760
    %v1779 = vsub.f32 %v335, %v1778
    %1780 = vmatpush1.msra.mxu0 %v1779
    %1781 = vmatprep.subr.mxu0 0.0
    %v1782 = vand.u32 %v336, 4294901760
    %v1783 = vsub.f32 %v336, %v1782
    %1784 = vmatpush1.msra.mxu0 %v1783
    %1785 = vmatprep.subr.mxu0 0.0
    %v1786 = vand.u32 %v337, 4294901760
    %v1787 = vsub.f32 %v337, %v1786
    %1788 = vmatpush1.msra.mxu0 %v1787
    %1789 = vmatprep.subr.mxu0 0.0
    %v1790 = vand.u32 %v338, 4294901760
    %v1791 = vsub.f32 %v338, %v1790
    %1792 = vmatpush1.msra.mxu0 %v1791
    %1793 = vmatprep.subr.mxu0 0.0
    %v1794 = vand.u32 %v339, 4294901760
    %v1795 = vsub.f32 %v339, %v1794
    %1796 = vmatpush1.msra.mxu0 %v1795
    %1797 = vmatprep.subr.mxu0 0.0
    %v1798 = vand.u32 %v340, 4294901760
    %v1799 = vsub.f32 %v340, %v1798
    %1800 = vmatpush1.msra.mxu0 %v1799
    %1801 = vmatprep.subr.mxu0 0.0
    %v1802 = vand.u32 %v341, 4294901760
    %v1803 = vsub.f32 %v341, %v1802
    %1804 = vmatpush1.msra.mxu0 %v1803
    %1805 = vmatprep.subr.mxu0 0.0
    %v1806 = vand.u32 %v342, 4294901760
    %v1807 = vsub.f32 %v342, %v1806
    %1808 = vmatpush1.msra.mxu0 %v1807
    %1809 = vmatprep.subr.mxu0 0.0
    %v1810 = vand.u32 %v343, 4294901760
    %v1811 = vsub.f32 %v343, %v1810
    %1812 = vmatpush1.msra.mxu0 %v1811
    %1813 = vmatprep.subr.mxu0 0.0
    %v1814 = vand.u32 %v344, 4294901760
    %v1815 = vsub.f32 %v344, %v1814
    %1816 = vmatpush1.msra.mxu0 %v1815
    %1817 = vmatprep.subr.mxu0 0.0
    %v1818 = vand.u32 %v345, 4294901760
    %v1819 = vsub.f32 %v345, %v1818
    %1820 = vmatpush1.msra.mxu0 %v1819
    %1821 = vmatprep.subr.mxu0 0.0
    %v1822 = vand.u32 %v346, 4294901760
    %v1823 = vsub.f32 %v346, %v1822
    %1824 = vmatpush1.msra.mxu0 %v1823
    %1825 = vmatprep.subr.mxu0 0.0
    %v1826 = vand.u32 %v347, 4294901760
    %v1827 = vsub.f32 %v347, %v1826
    %1828 = vmatpush1.msra.mxu0 %v1827
    %1829 = vmatprep.subr.mxu0 0.0
    %v1830 = vand.u32 %v348, 4294901760
    %v1831 = vsub.f32 %v348, %v1830
    %1832 = vmatpush1.msra.mxu0 %v1831
    %1833 = vmatprep.subr.mxu0 0.0
    %v1834 = vand.u32 %v349, 4294901760
    %v1835 = vsub.f32 %v349, %v1834
    %1836 = vmatpush1.msra.mxu0 %v1835
    %1837 = vmatprep.subr.mxu0 0.0
    %v1838 = vand.u32 %v350, 4294901760
    %v1839 = vsub.f32 %v350, %v1838
    %1840 = vmatpush1.msra.mxu0 %v1839
    %1841 = vmatprep.subr.mxu0 0.0
    %v1842 = vand.u32 %v351, 4294901760
    %v1843 = vsub.f32 %v351, %v1842
    %1844 = vmatpush1.msra.mxu0 %v1843
    %1845 = vmatprep.subr.mxu0 0.0
    %v1846 = vand.u32 %v352, 4294901760
    %v1847 = vsub.f32 %v352, %v1846
    %1848 = vmatpush1.msra.mxu0 %v1847
    %1849 = vmatprep.subr.mxu0 0.0
    %v1850 = vand.u32 %v353, 4294901760
    %v1851 = vsub.f32 %v353, %v1850
    %1852 = vmatpush1.msra.mxu0 %v1851
    %1853 = vmatprep.subr.mxu0 0.0
    %v1854 = vand.u32 %v354, 4294901760
    %v1855 = vsub.f32 %v354, %v1854
    %1856 = vmatpush1.msra.mxu0 %v1855
    %1857 = vmatprep.subr.mxu0 0.0
    %v1858 = vand.u32 %v355, 4294901760
    %v1859 = vsub.f32 %v355, %v1858
    %1860 = vmatpush1.msra.mxu0 %v1859
    %1861 = vmatprep.subr.mxu0 0.0
    %v1862 = vand.u32 %v356, 4294901760
    %v1863 = vsub.f32 %v356, %v1862
    %1864 = vmatpush1.msra.mxu0 %v1863
    %1865 = vmatprep.subr.mxu0 0.0
    %v1866 = vand.u32 %v357, 4294901760
    %v1867 = vsub.f32 %v357, %v1866
    %1868 = vmatpush1.msra.mxu0 %v1867
    %1869 = vmatprep.subr.mxu0 0.0
    %v1870 = vand.u32 %v358, 4294901760
    %v1871 = vsub.f32 %v358, %v1870
    %1872 = vmatpush1.msra.mxu0 %v1871
    %1873 = vmatprep.subr.mxu0 0.0
    %v1874 = vand.u32 %v359, 4294901760
    %v1875 = vsub.f32 %v359, %v1874
    %1876 = vmatpush1.msra.mxu0 %v1875
    %1877 = vmatprep.subr.mxu0 0.0
    %v1878 = vand.u32 %v360, 4294901760
    %v1879 = vsub.f32 %v360, %v1878
    %1880 = vmatpush1.msra.mxu0 %v1879
    %1881 = vmatprep.subr.mxu0 0.0
    %v1882 = vand.u32 %v361, 4294901760
    %v1883 = vsub.f32 %v361, %v1882
    %1884 = vmatpush1.msra.mxu0 %v1883
    %1885 = vmatprep.subr.mxu0 0.0
    %v1886 = vand.u32 %v362, 4294901760
    %v1887 = vsub.f32 %v362, %v1886
    %1888 = vmatpush1.msra.mxu0 %v1887
    %v1889 = vand.u32 %v452, 4294901760
    %v1890 = vsub.f32 %v452, %v1889
    %1891 = vmatprep.mubr.f32.mxu0 %v1890
    %v1892 = vand.u32 %v451, 4294901760
    %v1893 = vsub.f32 %v451, %v1892
    %1894 = vmatmul.mubr.f32.gmra.mrb[0].mxu0 %v1893
    %v1895 = vpop.f32.mrb[0].mxu0
    %v1896 = vadd.f32 %v1751, %v1895
    %v1897 = vpop.f32.mrb[0].mxu0
    %v1898 = vand.u32 %v462, 4294901760
    %v1899 = vsub.f32 %v462, %v1898
    %1900 = vmatprep.mubr.f32.mxu0 %v1899
    %v1901 = vand.u32 %v461, 4294901760
    %v1902 = vsub.f32 %v461, %v1901
    %1903 = vmatmul.mubr.f32.gmra.mrb[0].mxu0 %v1902
    %v1904 = vpop.f32.mrb[0].mxu0
    %v1905 = vadd.f32 %v1758, %v1904
    %v1906 = vpop.f32.mrb[0].mxu0
    %1907 = vdwg.mxu0
    %1908 = vmatprep.subr.mxu0 0.0
    %v1909 = vand.u32 %v331, 4294901760
    %1910 = vmatpush1.msra.mxu0 %v1909
    %1911 = vmatprep.subr.mxu0 0.0
    %v1912 = vand.u32 %v332, 4294901760
    %1913 = vmatpush1.msra.mxu0 %v1912
    %1914 = vmatprep.subr.mxu0 0.0
    %v1915 = vand.u32 %v333, 4294901760
    %1916 = vmatpush1.msra.mxu0 %v1915
    %1917 = vmatprep.subr.mxu0 0.0
    %v1918 = vand.u32 %v334, 4294901760
    %1919 = vmatpush1.msra.mxu0 %v1918
    %1920 = vmatprep.subr.mxu0 0.0
    %v1921 = vand.u32 %v335, 4294901760
    %1922 = vmatpush1.msra.mxu0 %v1921
    %1923 = vmatprep.subr.mxu0 0.0
    %v1924 = vand.u32 %v336, 4294901760
    %1925 = vmatpush1.msra.mxu0 %v1924
    %1926 = vmatprep.subr.mxu0 0.0
    %v1927 = vand.u32 %v337, 4294901760
    %1928 = vmatpush1.msra.mxu0 %v1927
    %1929 = vmatprep.subr.mxu0 0.0
    %v1930 = vand.u32 %v338, 4294901760
    %1931 = vmatpush1.msra.mxu0 %v1930
    %1932 = vmatprep.subr.mxu0 0.0
    %v1933 = vand.u32 %v339, 4294901760
    %1934 = vmatpush1.msra.mxu0 %v1933
    %1935 = vmatprep.subr.mxu0 0.0
    %v1936 = vand.u32 %v340, 4294901760
    %1937 = vmatpush1.msra.mxu0 %v1936
    %1938 = vmatprep.subr.mxu0 0.0
    %v1939 = vand.u32 %v341, 4294901760
    %1940 = vmatpush1.msra.mxu0 %v1939
    %1941 = vmatprep.subr.mxu0 0.0
    %v1942 = vand.u32 %v342, 4294901760
    %1943 = vmatpush1.msra.mxu0 %v1942
    %1944 = vmatprep.subr.mxu0 0.0
    %v1945 = vand.u32 %v343, 4294901760
    %1946 = vmatpush1.msra.mxu0 %v1945
    %1947 = vmatprep.subr.mxu0 0.0
    %v1948 = vand.u32 %v344, 4294901760
    %1949 = vmatpush1.msra.mxu0 %v1948
    %1950 = vmatprep.subr.mxu0 0.0
    %v1951 = vand.u32 %v345, 4294901760
    %1952 = vmatpush1.msra.mxu0 %v1951
    %1953 = vmatprep.subr.mxu0 0.0
    %v1954 = vand.u32 %v346, 4294901760
    %1955 = vmatpush1.msra.mxu0 %v1954
    %1956 = vmatprep.subr.mxu0 0.0
    %v1957 = vand.u32 %v347, 4294901760
    %1958 = vmatpush1.msra.mxu0 %v1957
    %1959 = vmatprep.subr.mxu0 0.0
    %v1960 = vand.u32 %v348, 4294901760
    %1961 = vmatpush1.msra.mxu0 %v1960
    %1962 = vmatprep.subr.mxu0 0.0
    %v1963 = vand.u32 %v349, 4294901760
    %1964 = vmatpush1.msra.mxu0 %v1963
    %1965 = vmatprep.subr.mxu0 0.0
    %v1966 = vand.u32 %v350, 4294901760
    %1967 = vmatpush1.msra.mxu0 %v1966
    %1968 = vmatprep.subr.mxu0 0.0
    %v1969 = vand.u32 %v351, 4294901760
    %1970 = vmatpush1.msra.mxu0 %v1969
    %1971 = vmatprep.subr.mxu0 0.0
    %v1972 = vand.u32 %v352, 4294901760
    %1973 = vmatpush1.msra.mxu0 %v1972
    %1974 = vmatprep.subr.mxu0 0.0
    %v1975 = vand.u32 %v353, 4294901760
    %1976 = vmatpush1.msra.mxu0 %v1975
    %1977 = vmatprep.subr.mxu0 0.0
    %v1978 = vand.u32 %v354, 4294901760
    %1979 = vmatpush1.msra.mxu0 %v1978
    %1980 = vmatprep.subr.mxu0 0.0
    %v1981 = vand.u32 %v355, 4294901760
    %1982 = vmatpush1.msra.mxu0 %v1981
    %1983 = vmatprep.subr.mxu0 0.0
    %v1984 = vand.u32 %v356, 4294901760
    %1985 = vmatpush1.msra.mxu0 %v1984
    %1986 = vmatprep.subr.mxu0 0.0
    %v1987 = vand.u32 %v357, 4294901760
    %1988 = vmatpush1.msra.mxu0 %v1987
    %1989 = vmatprep.subr.mxu0 0.0
    %v1990 = vand.u32 %v358, 4294901760
    %1991 = vmatpush1.msra.mxu0 %v1990
    %1992 = vmatprep.subr.mxu0 0.0
    %v1993 = vand.u32 %v359, 4294901760
    %1994 = vmatpush1.msra.mxu0 %v1993
    %1995 = vmatprep.subr.mxu0 0.0
    %v1996 = vand.u32 %v360, 4294901760
    %1997 = vmatpush1.msra.mxu0 %v1996
    %1998 = vmatprep.subr.mxu0 0.0
    %v1999 = vand.u32 %v361, 4294901760
    %2000 = vmatpush1.msra.mxu0 %v1999
    %2001 = vmatprep.subr.mxu0 0.0
    %v2002 = vand.u32 %v362, 4294901760
    %2003 = vmatpush1.msra.mxu0 %v2002
    %v2004 = vand.u32 %v452, 4294901760
    %v2005 = vsub.f32 %v452, %v2004
    %v2006 = vand.u32 %v2005, 4294901760
    %2007 = vmatprep.mubr.f32.mxu0 %v2006
    %v2008 = vand.u32 %v451, 4294901760
    %v2009 = vsub.f32 %v451, %v2008
    %v2010 = vand.u32 %v2009, 4294901760
    %2011 = vmatmul.mubr.f32.gmra.mrb[0].mxu0 %v2010
    %v2012 = vpop.f32.mrb[0].mxu0
    %v2013 = vadd.f32 %v1896, %v2012
    %v2014 = vpop.f32.mrb[0].mxu0
    %v2015 = vand.u32 %v462, 4294901760
    %v2016 = vsub.f32 %v462, %v2015
    %v2017 = vand.u32 %v2016, 4294901760
    %2018 = vmatprep.mubr.f32.mxu0 %v2017
    %v2019 = vand.u32 %v461, 4294901760
    %v2020 = vsub.f32 %v461, %v2019
    %v2021 = vand.u32 %v2020, 4294901760
    %2022 = vmatmul.mubr.f32.gmra.mrb[0].mxu0 %v2021
    %v2023 = vpop.f32.mrb[0].mxu0
    %v2024 = vadd.f32 %v1905, %v2023
    %v2025 = vpop.f32.mrb[0].mxu0
    %2026 = vdwg.mxu0
    %2027 = vmatprep.subr.mxu0 0.0
    %v2028 = vand.u32 %v331, 4294901760
    %v2029 = vsub.f32 %v331, %v2028
    %v2030 = vand.u32 %v2029, 4294901760
    %2031 = vmatpush1.msra.mxu0 %v2030
    %2032 = vmatprep.subr.mxu0 0.0
    %v2033 = vand.u32 %v332, 4294901760
    %v2034 = vsub.f32 %v332, %v2033
    %v2035 = vand.u32 %v2034, 4294901760
    %2036 = vmatpush1.msra.mxu0 %v2035
    %2037 = vmatprep.subr.mxu0 0.0
    %v2038 = vand.u32 %v333, 4294901760
    %v2039 = vsub.f32 %v333, %v2038
    %v2040 = vand.u32 %v2039, 4294901760
    %2041 = vmatpush1.msra.mxu0 %v2040
    %2042 = vmatprep.subr.mxu0 0.0
    %v2043 = vand.u32 %v334, 4294901760
    %v2044 = vsub.f32 %v334, %v2043
    %v2045 = vand.u32 %v2044, 4294901760
    %2046 = vmatpush1.msra.mxu0 %v2045
    %2047 = vmatprep.subr.mxu0 0.0
    %v2048 = vand.u32 %v335, 4294901760
    %v2049 = vsub.f32 %v335, %v2048
    %v2050 = vand.u32 %v2049, 4294901760
    %2051 = vmatpush1.msra.mxu0 %v2050
    %2052 = vmatprep.subr.mxu0 0.0
    %v2053 = vand.u32 %v336, 4294901760
    %v2054 = vsub.f32 %v336, %v2053
    %v2055 = vand.u32 %v2054, 4294901760
    %2056 = vmatpush1.msra.mxu0 %v2055
    %2057 = vmatprep.subr.mxu0 0.0
    %v2058 = vand.u32 %v337, 4294901760
    %v2059 = vsub.f32 %v337, %v2058
    %v2060 = vand.u32 %v2059, 4294901760
    %2061 = vmatpush1.msra.mxu0 %v2060
    %2062 = vmatprep.subr.mxu0 0.0
    %v2063 = vand.u32 %v338, 4294901760
    %v2064 = vsub.f32 %v338, %v2063
    %v2065 = vand.u32 %v2064, 4294901760
    %2066 = vmatpush1.msra.mxu0 %v2065
    %2067 = vmatprep.subr.mxu0 0.0
    %v2068 = vand.u32 %v339, 4294901760
    %v2069 = vsub.f32 %v339, %v2068
    %v2070 = vand.u32 %v2069, 4294901760
    %2071 = vmatpush1.msra.mxu0 %v2070
    %2072 = vmatprep.subr.mxu0 0.0
    %v2073 = vand.u32 %v340, 4294901760
    %v2074 = vsub.f32 %v340, %v2073
    %v2075 = vand.u32 %v2074, 4294901760
    %2076 = vmatpush1.msra.mxu0 %v2075
    %2077 = vmatprep.subr.mxu0 0.0
    %v2078 = vand.u32 %v341, 4294901760
    %v2079 = vsub.f32 %v341, %v2078
    %v2080 = vand.u32 %v2079, 4294901760
    %2081 = vmatpush1.msra.mxu0 %v2080
    %2082 = vmatprep.subr.mxu0 0.0
    %v2083 = vand.u32 %v342, 4294901760
    %v2084 = vsub.f32 %v342, %v2083
    %v2085 = vand.u32 %v2084, 4294901760
    %2086 = vmatpush1.msra.mxu0 %v2085
    %2087 = vmatprep.subr.mxu0 0.0
    %v2088 = vand.u32 %v343, 4294901760
    %v2089 = vsub.f32 %v343, %v2088
    %v2090 = vand.u32 %v2089, 4294901760
    %2091 = vmatpush1.msra.mxu0 %v2090
    %2092 = vmatprep.subr.mxu0 0.0
    %v2093 = vand.u32 %v344, 4294901760
    %v2094 = vsub.f32 %v344, %v2093
    %v2095 = vand.u32 %v2094, 4294901760
    %2096 = vmatpush1.msra.mxu0 %v2095
    %2097 = vmatprep.subr.mxu0 0.0
    %v2098 = vand.u32 %v345, 4294901760
    %v2099 = vsub.f32 %v345, %v2098
    %v2100 = vand.u32 %v2099, 4294901760
    %2101 = vmatpush1.msra.mxu0 %v2100
    %2102 = vmatprep.subr.mxu0 0.0
    %v2103 = vand.u32 %v346, 4294901760
    %v2104 = vsub.f32 %v346, %v2103
    %v2105 = vand.u32 %v2104, 4294901760
    %2106 = vmatpush1.msra.mxu0 %v2105
    %2107 = vmatprep.subr.mxu0 0.0
    %v2108 = vand.u32 %v347, 4294901760
    %v2109 = vsub.f32 %v347, %v2108
    %v2110 = vand.u32 %v2109, 4294901760
    %2111 = vmatpush1.msra.mxu0 %v2110
    %2112 = vmatprep.subr.mxu0 0.0
    %v2113 = vand.u32 %v348, 4294901760
    %v2114 = vsub.f32 %v348, %v2113
    %v2115 = vand.u32 %v2114, 4294901760
    %2116 = vmatpush1.msra.mxu0 %v2115
    %2117 = vmatprep.subr.mxu0 0.0
    %v2118 = vand.u32 %v349, 4294901760
    %v2119 = vsub.f32 %v349, %v2118
    %v2120 = vand.u32 %v2119, 4294901760
    %2121 = vmatpush1.msra.mxu0 %v2120
    %2122 = vmatprep.subr.mxu0 0.0
    %v2123 = vand.u32 %v350, 4294901760
    %v2124 = vsub.f32 %v350, %v2123
    %v2125 = vand.u32 %v2124, 4294901760
    %2126 = vmatpush1.msra.mxu0 %v2125
    %2127 = vmatprep.subr.mxu0 0.0
    %v2128 = vand.u32 %v351, 4294901760
    %v2129 = vsub.f32 %v351, %v2128
    %v2130 = vand.u32 %v2129, 4294901760
    %2131 = vmatpush1.msra.mxu0 %v2130
    %2132 = vmatprep.subr.mxu0 0.0
    %v2133 = vand.u32 %v352, 4294901760
    %v2134 = vsub.f32 %v352, %v2133
    %v2135 = vand.u32 %v2134, 4294901760
    %2136 = vmatpush1.msra.mxu0 %v2135
    %2137 = vmatprep.subr.mxu0 0.0
    %v2138 = vand.u32 %v353, 4294901760
    %v2139 = vsub.f32 %v353, %v2138
    %v2140 = vand.u32 %v2139, 4294901760
    %2141 = vmatpush1.msra.mxu0 %v2140
    %2142 = vmatprep.subr.mxu0 0.0
    %v2143 = vand.u32 %v354, 4294901760
    %v2144 = vsub.f32 %v354, %v2143
    %v2145 = vand.u32 %v2144, 4294901760
    %2146 = vmatpush1.msra.mxu0 %v2145
    %2147 = vmatprep.subr.mxu0 0.0
    %v2148 = vand.u32 %v355, 4294901760
    %v2149 = vsub.f32 %v355, %v2148
    %v2150 = vand.u32 %v2149, 4294901760
    %2151 = vmatpush1.msra.mxu0 %v2150
    %2152 = vmatprep.subr.mxu0 0.0
    %v2153 = vand.u32 %v356, 4294901760
    %v2154 = vsub.f32 %v356, %v2153
    %v2155 = vand.u32 %v2154, 4294901760
    %2156 = vmatpush1.msra.mxu0 %v2155
    %2157 = vmatprep.subr.mxu0 0.0
    %v2158 = vand.u32 %v357, 4294901760
    %v2159 = vsub.f32 %v357, %v2158
    %v2160 = vand.u32 %v2159, 4294901760
    %2161 = vmatpush1.msra.mxu0 %v2160
    %2162 = vmatprep.subr.mxu0 0.0
    %v2163 = vand.u32 %v358, 4294901760
    %v2164 = vsub.f32 %v358, %v2163
    %v2165 = vand.u32 %v2164, 4294901760
    %2166 = vmatpush1.msra.mxu0 %v2165
    %2167 = vmatprep.subr.mxu0 0.0
    %v2168 = vand.u32 %v359, 4294901760
    %v2169 = vsub.f32 %v359, %v2168
    %v2170 = vand.u32 %v2169, 4294901760
    %2171 = vmatpush1.msra.mxu0 %v2170
    %2172 = vmatprep.subr.mxu0 0.0
    %v2173 = vand.u32 %v360, 4294901760
    %v2174 = vsub.f32 %v360, %v2173
    %v2175 = vand.u32 %v2174, 4294901760
    %2176 = vmatpush1.msra.mxu0 %v2175
    %2177 = vmatprep.subr.mxu0 0.0
    %v2178 = vand.u32 %v361, 4294901760
    %v2179 = vsub.f32 %v361, %v2178
    %v2180 = vand.u32 %v2179, 4294901760
    %2181 = vmatpush1.msra.mxu0 %v2180
    %2182 = vmatprep.subr.mxu0 0.0
    %v2183 = vand.u32 %v362, 4294901760
    %v2184 = vsub.f32 %v362, %v2183
    %v2185 = vand.u32 %v2184, 4294901760
    %2186 = vmatpush1.msra.mxu0 %v2185
    %v2187 = vand.u32 %v452, 4294901760
    %2188 = vmatprep.mubr.f32.mxu0 %v2187
    %v2189 = vand.u32 %v451, 4294901760
    %2190 = vmatmul.mubr.f32.gmra.mrb[0].mxu0 %v2189
    %v2191 = vpop.f32.mrb[0].mxu0
    %v2192 = vadd.f32 %v2013, %v2191
    %v2193 = vpop.f32.mrb[0].mxu0
    %v2194 = vand.u32 %v462, 4294901760
    %2195 = vmatprep.mubr.f32.mxu0 %v2194
    %v2196 = vand.u32 %v461, 4294901760
    %2197 = vmatmul.mubr.f32.gmra.mrb[0].mxu0 %v2196
    %v2198 = vpop.f32.mrb[0].mxu0
    %v2199 = vadd.f32 %v2024, %v2198
    %v2200 = vpop.f32.mrb[0].mxu0
    %2201 = vdwg.mxu0
    %2202 = vmatprep.subr.mxu0 0.0
    %v2203 = vand.u32 %v331, 4294901760
    %2204 = vmatpush1.msra.mxu0 %v2203
    %2205 = vmatprep.subr.mxu0 0.0
    %v2206 = vand.u32 %v332, 4294901760
    %2207 = vmatpush1.msra.mxu0 %v2206
    %2208 = vmatprep.subr.mxu0 0.0
    %v2209 = vand.u32 %v333, 4294901760
    %2210 = vmatpush1.msra.mxu0 %v2209
    %2211 = vmatprep.subr.mxu0 0.0
    %v2212 = vand.u32 %v334, 4294901760
    %2213 = vmatpush1.msra.mxu0 %v2212
    %2214 = vmatprep.subr.mxu0 0.0
    %v2215 = vand.u32 %v335, 4294901760
    %2216 = vmatpush1.msra.mxu0 %v2215
    %2217 = vmatprep.subr.mxu0 0.0
    %v2218 = vand.u32 %v336, 4294901760
    %2219 = vmatpush1.msra.mxu0 %v2218
    %2220 = vmatprep.subr.mxu0 0.0
    %v2221 = vand.u32 %v337, 4294901760
    %2222 = vmatpush1.msra.mxu0 %v2221
    %2223 = vmatprep.subr.mxu0 0.0
    %v2224 = vand.u32 %v338, 4294901760
    %2225 = vmatpush1.msra.mxu0 %v2224
    %2226 = vmatprep.subr.mxu0 0.0
    %v2227 = vand.u32 %v339, 4294901760
    %2228 = vmatpush1.msra.mxu0 %v2227
    %2229 = vmatprep.subr.mxu0 0.0
    %v2230 = vand.u32 %v340, 4294901760
    %2231 = vmatpush1.msra.mxu0 %v2230
    %2232 = vmatprep.subr.mxu0 0.0
    %v2233 = vand.u32 %v341, 4294901760
    %2234 = vmatpush1.msra.mxu0 %v2233
    %2235 = vmatprep.subr.mxu0 0.0
    %v2236 = vand.u32 %v342, 4294901760
    %2237 = vmatpush1.msra.mxu0 %v2236
    %2238 = vmatprep.subr.mxu0 0.0
    %v2239 = vand.u32 %v343, 4294901760
    %2240 = vmatpush1.msra.mxu0 %v2239
    %2241 = vmatprep.subr.mxu0 0.0
    %v2242 = vand.u32 %v344, 4294901760
    %2243 = vmatpush1.msra.mxu0 %v2242
    %2244 = vmatprep.subr.mxu0 0.0
    %v2245 = vand.u32 %v345, 4294901760
    %2246 = vmatpush1.msra.mxu0 %v2245
    %2247 = vmatprep.subr.mxu0 0.0
    %v2248 = vand.u32 %v346, 4294901760
    %2249 = vmatpush1.msra.mxu0 %v2248
    %2250 = vmatprep.subr.mxu0 0.0
    %v2251 = vand.u32 %v347, 4294901760
    %2252 = vmatpush1.msra.mxu0 %v2251
    %2253 = vmatprep.subr.mxu0 0.0
    %v2254 = vand.u32 %v348, 4294901760
    %2255 = vmatpush1.msra.mxu0 %v2254
    %2256 = vmatprep.subr.mxu0 0.0
    %v2257 = vand.u32 %v349, 4294901760
    %2258 = vmatpush1.msra.mxu0 %v2257
    %2259 = vmatprep.subr.mxu0 0.0
    %v2260 = vand.u32 %v350, 4294901760
    %2261 = vmatpush1.msra.mxu0 %v2260
    %2262 = vmatprep.subr.mxu0 0.0
    %v2263 = vand.u32 %v351, 4294901760
    %2264 = vmatpush1.msra.mxu0 %v2263
    %2265 = vmatprep.subr.mxu0 0.0
    %v2266 = vand.u32 %v352, 4294901760
    %2267 = vmatpush1.msra.mxu0 %v2266
    %2268 = vmatprep.subr.mxu0 0.0
    %v2269 = vand.u32 %v353, 4294901760
    %2270 = vmatpush1.msra.mxu0 %v2269
    %2271 = vmatprep.subr.mxu0 0.0
    %v2272 = vand.u32 %v354, 4294901760
    %2273 = vmatpush1.msra.mxu0 %v2272
    %2274 = vmatprep.subr.mxu0 0.0
    %v2275 = vand.u32 %v355, 4294901760
    %2276 = vmatpush1.msra.mxu0 %v2275
    %2277 = vmatprep.subr.mxu0 0.0
    %v2278 = vand.u32 %v356, 4294901760
    %2279 = vmatpush1.msra.mxu0 %v2278
    %2280 = vmatprep.subr.mxu0 0.0
    %v2281 = vand.u32 %v357, 4294901760
    %2282 = vmatpush1.msra.mxu0 %v2281
    %2283 = vmatprep.subr.mxu0 0.0
    %v2284 = vand.u32 %v358, 4294901760
    %2285 = vmatpush1.msra.mxu0 %v2284
    %2286 = vmatprep.subr.mxu0 0.0
    %v2287 = vand.u32 %v359, 4294901760
    %2288 = vmatpush1.msra.mxu0 %v2287
    %2289 = vmatprep.subr.mxu0 0.0
    %v2290 = vand.u32 %v360, 4294901760
    %2291 = vmatpush1.msra.mxu0 %v2290
    %2292 = vmatprep.subr.mxu0 0.0
    %v2293 = vand.u32 %v361, 4294901760
    %2294 = vmatpush1.msra.mxu0 %v2293
    %2295 = vmatprep.subr.mxu0 0.0
    %v2296 = vand.u32 %v362, 4294901760
    %2297 = vmatpush1.msra.mxu0 %v2296
    %v2298 = vand.u32 %v452, 4294901760
    %2299 = vmatprep.mubr.f32.mxu0 %v2298
    %v2300 = vand.u32 %v451, 4294901760
    %2301 = vmatmul.mubr.f32.gmra.mrb[0].mxu0 %v2300
    %v2302 = vpop.f32.mrb[0].mxu0
    %v2303 = vadd.f32 %v2192, %v2302
    %v2304 = vpop.f32.mrb[0].mxu0
    %v2305 = vand.u32 %v462, 4294901760
    %2306 = vmatprep.mubr.f32.mxu0 %v2305
    %v2307 = vand.u32 %v461, 4294901760
    %2308 = vmatmul.mubr.f32.gmra.mrb[0].mxu0 %v2307
    %v2309 = vpop.f32.mrb[0].mxu0
    %v2310 = vadd.f32 %v2199, %v2309
    %v2311 = vpop.f32.mrb[0].mxu0
    %2312 = vdwg.mxu0
    %2313 = vmatprep.subr.mxu0 0.0
    %v2314 = vand.u32 %v363, 4294901760
    %2315 = vmatpush1.msra.mxu0 %v2314
    %2316 = vmatprep.subr.mxu0 0.0
    %v2317 = vand.u32 %v364, 4294901760
    %2318 = vmatpush1.msra.mxu0 %v2317
    %2319 = vmatprep.subr.mxu0 0.0
    %v2320 = vand.u32 %v365, 4294901760
    %2321 = vmatpush1.msra.mxu0 %v2320
    %2322 = vmatprep.subr.mxu0 0.0
    %v2323 = vand.u32 %v366, 4294901760
    %2324 = vmatpush1.msra.mxu0 %v2323
    %2325 = vmatprep.subr.mxu0 0.0
    %v2326 = vand.u32 %v367, 4294901760
    %2327 = vmatpush1.msra.mxu0 %v2326
    %2328 = vmatprep.subr.mxu0 0.0
    %v2329 = vand.u32 %v368, 4294901760
    %2330 = vmatpush1.msra.mxu0 %v2329
    %2331 = vmatprep.subr.mxu0 0.0
    %v2332 = vand.u32 %v369, 4294901760
    %2333 = vmatpush1.msra.mxu0 %v2332
    %2334 = vmatprep.subr.mxu0 0.0
    %v2335 = vand.u32 %v370, 4294901760
    %2336 = vmatpush1.msra.mxu0 %v2335
    %2337 = vmatprep.subr.mxu0 0.0
    %v2338 = vand.u32 %v371, 4294901760
    %2339 = vmatpush1.msra.mxu0 %v2338
    %2340 = vmatprep.subr.mxu0 0.0
    %v2341 = vand.u32 %v372, 4294901760
    %2342 = vmatpush1.msra.mxu0 %v2341
    %2343 = vmatprep.subr.mxu0 0.0
    %v2344 = vand.u32 %v373, 4294901760
    %2345 = vmatpush1.msra.mxu0 %v2344
    %2346 = vmatprep.subr.mxu0 0.0
    %v2347 = vand.u32 %v374, 4294901760
    %2348 = vmatpush1.msra.mxu0 %v2347
    %2349 = vmatprep.subr.mxu0 0.0
    %v2350 = vand.u32 %v375, 4294901760
    %2351 = vmatpush1.msra.mxu0 %v2350
    %2352 = vmatprep.subr.mxu0 0.0
    %v2353 = vand.u32 %v376, 4294901760
    %2354 = vmatpush1.msra.mxu0 %v2353
    %2355 = vmatprep.subr.mxu0 0.0
    %v2356 = vand.u32 %v377, 4294901760
    %2357 = vmatpush1.msra.mxu0 %v2356
    %2358 = vmatprep.subr.mxu0 0.0
    %v2359 = vand.u32 %v378, 4294901760
    %2360 = vmatpush1.msra.mxu0 %v2359
    %2361 = vmatprep.subr.mxu0 0.0
    %v2362 = vand.u32 %v379, 4294901760
    %2363 = vmatpush1.msra.mxu0 %v2362
    %2364 = vmatprep.subr.mxu0 0.0
    %v2365 = vand.u32 %v380, 4294901760
    %2366 = vmatpush1.msra.mxu0 %v2365
    %2367 = vmatprep.subr.mxu0 0.0
    %v2368 = vand.u32 %v381, 4294901760
    %2369 = vmatpush1.msra.mxu0 %v2368
    %2370 = vmatprep.subr.mxu0 0.0
    %v2371 = vand.u32 %v382, 4294901760
    %2372 = vmatpush1.msra.mxu0 %v2371
    %2373 = vmatprep.subr.mxu0 0.0
    %v2374 = vand.u32 %v383, 4294901760
    %2375 = vmatpush1.msra.mxu0 %v2374
    %2376 = vmatprep.subr.mxu0 0.0
    %v2377 = vand.u32 %v384, 4294901760
    %2378 = vmatpush1.msra.mxu0 %v2377
    %2379 = vmatprep.subr.mxu0 0.0
    %v2380 = vand.u32 %v385, 4294901760
    %2381 = vmatpush1.msra.mxu0 %v2380
    %2382 = vmatprep.subr.mxu0 0.0
    %v2383 = vand.u32 %v386, 4294901760
    %2384 = vmatpush1.msra.mxu0 %v2383
    %2385 = vmatprep.subr.mxu0 0.0
    %v2386 = vand.u32 %v387, 4294901760
    %2387 = vmatpush1.msra.mxu0 %v2386
    %2388 = vmatprep.subr.mxu0 0.0
    %v2389 = vand.u32 %v388, 4294901760
    %2390 = vmatpush1.msra.mxu0 %v2389
    %2391 = vmatprep.subr.mxu0 0.0
    %v2392 = vand.u32 %v389, 4294901760
    %2393 = vmatpush1.msra.mxu0 %v2392
    %2394 = vmatprep.subr.mxu0 0.0
    %v2395 = vand.u32 %v390, 4294901760
    %2396 = vmatpush1.msra.mxu0 %v2395
    %2397 = vmatprep.subr.mxu0 0.0
    %v2398 = vand.u32 %v391, 4294901760
    %2399 = vmatpush1.msra.mxu0 %v2398
    %2400 = vmatprep.subr.mxu0 0.0
    %v2401 = vand.u32 %v392, 4294901760
    %2402 = vmatpush1.msra.mxu0 %v2401
    %2403 = vmatprep.subr.mxu0 0.0
    %v2404 = vand.u32 %v393, 4294901760
    %2405 = vmatpush1.msra.mxu0 %v2404
    %2406 = vmatprep.subr.mxu0 0.0
    %v2407 = vand.u32 %v394, 4294901760
    %2408 = vmatpush1.msra.mxu0 %v2407
    %v2409 = vand.u32 %v454, 4294901760
    %v2410 = vsub.f32 %v454, %v2409
    %v2411 = vand.u32 %v2410, 4294901760
    %v2412 = vsub.f32 %v2410, %v2411
    %v2413 = vand.u32 %v2412, 4294901760
    %2414 = vmatprep.mubr.f32.mxu0 %v2413
    %v2415 = vand.u32 %v453, 4294901760
    %v2416 = vsub.f32 %v453, %v2415
    %v2417 = vand.u32 %v2416, 4294901760
    %v2418 = vsub.f32 %v2416, %v2417
    %v2419 = vand.u32 %v2418, 4294901760
    %2420 = vmatmul.mubr.f32.gmra.mrb[0].mxu0 %v2419
    %v2421 = vpop.f32.mrb[0].mxu0
    %v2422 = vadd.f32 %v2303, %v2421
    %v2423 = vpop.f32.mrb[0].mxu0
    %v2424 = vand.u32 %v464, 4294901760
    %v2425 = vsub.f32 %v464, %v2424
    %v2426 = vand.u32 %v2425, 4294901760
    %v2427 = vsub.f32 %v2425, %v2426
    %v2428 = vand.u32 %v2427, 4294901760
    %2429 = vmatprep.mubr.f32.mxu0 %v2428
    %v2430 = vand.u32 %v463, 4294901760
    %v2431 = vsub.f32 %v463, %v2430
    %v2432 = vand.u32 %v2431, 4294901760
    %v2433 = vsub.f32 %v2431, %v2432
    %v2434 = vand.u32 %v2433, 4294901760
    %2435 = vmatmul.mubr.f32.gmra.mrb[0].mxu0 %v2434
    %v2436 = vpop.f32.mrb[0].mxu0
    %v2437 = vadd.f32 %v2310, %v2436
    %v2438 = vpop.f32.mrb[0].mxu0
    %2439 = vdwg.mxu0
    %2440 = vmatprep.subr.mxu0 0.0
    %v2441 = vand.u32 %v363, 4294901760
    %v2442 = vsub.f32 %v363, %v2441
    %v2443 = vand.u32 %v2442, 4294901760
    %v2444 = vsub.f32 %v2442, %v2443
    %v2445 = vand.u32 %v2444, 4294901760
    %2446 = vmatpush1.msra.mxu0 %v2445
    %2447 = vmatprep.subr.mxu0 0.0
    %v2448 = vand.u32 %v364, 4294901760
    %v2449 = vsub.f32 %v364, %v2448
    %v2450 = vand.u32 %v2449, 4294901760
    %v2451 = vsub.f32 %v2449, %v2450
    %v2452 = vand.u32 %v2451, 4294901760
    %2453 = vmatpush1.msra.mxu0 %v2452
    %2454 = vmatprep.subr.mxu0 0.0
    %v2455 = vand.u32 %v365, 4294901760
    %v2456 = vsub.f32 %v365, %v2455
    %v2457 = vand.u32 %v2456, 4294901760
    %v2458 = vsub.f32 %v2456, %v2457
    %v2459 = vand.u32 %v2458, 4294901760
    %2460 = vmatpush1.msra.mxu0 %v2459
    %2461 = vmatprep.subr.mxu0 0.0
    %v2462 = vand.u32 %v366, 4294901760
    %v2463 = vsub.f32 %v366, %v2462
    %v2464 = vand.u32 %v2463, 4294901760
    %v2465 = vsub.f32 %v2463, %v2464
    %v2466 = vand.u32 %v2465, 4294901760
    %2467 = vmatpush1.msra.mxu0 %v2466
    %2468 = vmatprep.subr.mxu0 0.0
    %v2469 = vand.u32 %v367, 4294901760
    %v2470 = vsub.f32 %v367, %v2469
    %v2471 = vand.u32 %v2470, 4294901760
    %v2472 = vsub.f32 %v2470, %v2471
    %v2473 = vand.u32 %v2472, 4294901760
    %2474 = vmatpush1.msra.mxu0 %v2473
    %2475 = vmatprep.subr.mxu0 0.0
    %v2476 = vand.u32 %v368, 4294901760
    %v2477 = vsub.f32 %v368, %v2476
    %v2478 = vand.u32 %v2477, 4294901760
    %v2479 = vsub.f32 %v2477, %v2478
    %v2480 = vand.u32 %v2479, 4294901760
    %2481 = vmatpush1.msra.mxu0 %v2480
    %2482 = vmatprep.subr.mxu0 0.0
    %v2483 = vand.u32 %v369, 4294901760
    %v2484 = vsub.f32 %v369, %v2483
    %v2485 = vand.u32 %v2484, 4294901760
    %v2486 = vsub.f32 %v2484, %v2485
    %v2487 = vand.u32 %v2486, 4294901760
    %2488 = vmatpush1.msra.mxu0 %v2487
    %2489 = vmatprep.subr.mxu0 0.0
    %v2490 = vand.u32 %v370, 4294901760
    %v2491 = vsub.f32 %v370, %v2490
    %v2492 = vand.u32 %v2491, 4294901760
    %v2493 = vsub.f32 %v2491, %v2492
    %v2494 = vand.u32 %v2493, 4294901760
    %2495 = vmatpush1.msra.mxu0 %v2494
    %2496 = vmatprep.subr.mxu0 0.0
    %v2497 = vand.u32 %v371, 4294901760
    %v2498 = vsub.f32 %v371, %v2497
    %v2499 = vand.u32 %v2498, 4294901760
    %v2500 = vsub.f32 %v2498, %v2499
    %v2501 = vand.u32 %v2500, 4294901760
    %2502 = vmatpush1.msra.mxu0 %v2501
    %2503 = vmatprep.subr.mxu0 0.0
    %v2504 = vand.u32 %v372, 4294901760
    %v2505 = vsub.f32 %v372, %v2504
    %v2506 = vand.u32 %v2505, 4294901760
    %v2507 = vsub.f32 %v2505, %v2506
    %v2508 = vand.u32 %v2507, 4294901760
    %2509 = vmatpush1.msra.mxu0 %v2508
    %2510 = vmatprep.subr.mxu0 0.0
    %v2511 = vand.u32 %v373, 4294901760
    %v2512 = vsub.f32 %v373, %v2511
    %v2513 = vand.u32 %v2512, 4294901760
    %v2514 = vsub.f32 %v2512, %v2513
    %v2515 = vand.u32 %v2514, 4294901760
    %2516 = vmatpush1.msra.mxu0 %v2515
    %2517 = vmatprep.subr.mxu0 0.0
    %v2518 = vand.u32 %v374, 4294901760
    %v2519 = vsub.f32 %v374, %v2518
    %v2520 = vand.u32 %v2519, 4294901760
    %v2521 = vsub.f32 %v2519, %v2520
    %v2522 = vand.u32 %v2521, 4294901760
    %2523 = vmatpush1.msra.mxu0 %v2522
    %2524 = vmatprep.subr.mxu0 0.0
    %v2525 = vand.u32 %v375, 4294901760
    %v2526 = vsub.f32 %v375, %v2525
    %v2527 = vand.u32 %v2526, 4294901760
    %v2528 = vsub.f32 %v2526, %v2527
    %v2529 = vand.u32 %v2528, 4294901760
    %2530 = vmatpush1.msra.mxu0 %v2529
    %2531 = vmatprep.subr.mxu0 0.0
    %v2532 = vand.u32 %v376, 4294901760
    %v2533 = vsub.f32 %v376, %v2532
    %v2534 = vand.u32 %v2533, 4294901760
    %v2535 = vsub.f32 %v2533, %v2534
    %v2536 = vand.u32 %v2535, 4294901760
    %2537 = vmatpush1.msra.mxu0 %v2536
    %2538 = vmatprep.subr.mxu0 0.0
    %v2539 = vand.u32 %v377, 4294901760
    %v2540 = vsub.f32 %v377, %v2539
    %v2541 = vand.u32 %v2540, 4294901760
    %v2542 = vsub.f32 %v2540, %v2541
    %v2543 = vand.u32 %v2542, 4294901760
    %2544 = vmatpush1.msra.mxu0 %v2543
    %2545 = vmatprep.subr.mxu0 0.0
    %v2546 = vand.u32 %v378, 4294901760
    %v2547 = vsub.f32 %v378, %v2546
    %v2548 = vand.u32 %v2547, 4294901760
    %v2549 = vsub.f32 %v2547, %v2548
    %v2550 = vand.u32 %v2549, 4294901760
    %2551 = vmatpush1.msra.mxu0 %v2550
    %2552 = vmatprep.subr.mxu0 0.0
    %v2553 = vand.u32 %v379, 4294901760
    %v2554 = vsub.f32 %v379, %v2553
    %v2555 = vand.u32 %v2554, 4294901760
    %v2556 = vsub.f32 %v2554, %v2555
    %v2557 = vand.u32 %v2556, 4294901760
    %2558 = vmatpush1.msra.mxu0 %v2557
    %2559 = vmatprep.subr.mxu0 0.0
    %v2560 = vand.u32 %v380, 4294901760
    %v2561 = vsub.f32 %v380, %v2560
    %v2562 = vand.u32 %v2561, 4294901760
    %v2563 = vsub.f32 %v2561, %v2562
    %v2564 = vand.u32 %v2563, 4294901760
    %2565 = vmatpush1.msra.mxu0 %v2564
    %2566 = vmatprep.subr.mxu0 0.0
    %v2567 = vand.u32 %v381, 4294901760
    %v2568 = vsub.f32 %v381, %v2567
    %v2569 = vand.u32 %v2568, 4294901760
    %v2570 = vsub.f32 %v2568, %v2569
    %v2571 = vand.u32 %v2570, 4294901760
    %2572 = vmatpush1.msra.mxu0 %v2571
    %2573 = vmatprep.subr.mxu0 0.0
    %v2574 = vand.u32 %v382, 4294901760
    %v2575 = vsub.f32 %v382, %v2574
    %v2576 = vand.u32 %v2575, 4294901760
    %v2577 = vsub.f32 %v2575, %v2576
    %v2578 = vand.u32 %v2577, 4294901760
    %2579 = vmatpush1.msra.mxu0 %v2578
    %2580 = vmatprep.subr.mxu0 0.0
    %v2581 = vand.u32 %v383, 4294901760
    %v2582 = vsub.f32 %v383, %v2581
    %v2583 = vand.u32 %v2582, 4294901760
    %v2584 = vsub.f32 %v2582, %v2583
    %v2585 = vand.u32 %v2584, 4294901760
    %2586 = vmatpush1.msra.mxu0 %v2585
    %2587 = vmatprep.subr.mxu0 0.0
    %v2588 = vand.u32 %v384, 4294901760
    %v2589 = vsub.f32 %v384, %v2588
    %v2590 = vand.u32 %v2589, 4294901760
    %v2591 = vsub.f32 %v2589, %v2590
    %v2592 = vand.u32 %v2591, 4294901760
    %2593 = vmatpush1.msra.mxu0 %v2592
    %2594 = vmatprep.subr.mxu0 0.0
    %v2595 = vand.u32 %v385, 4294901760
    %v2596 = vsub.f32 %v385, %v2595
    %v2597 = vand.u32 %v2596, 4294901760
    %v2598 = vsub.f32 %v2596, %v2597
    %v2599 = vand.u32 %v2598, 4294901760
    %2600 = vmatpush1.msra.mxu0 %v2599
    %2601 = vmatprep.subr.mxu0 0.0
    %v2602 = vand.u32 %v386, 4294901760
    %v2603 = vsub.f32 %v386, %v2602
    %v2604 = vand.u32 %v2603, 4294901760
    %v2605 = vsub.f32 %v2603, %v2604
    %v2606 = vand.u32 %v2605, 4294901760
    %2607 = vmatpush1.msra.mxu0 %v2606
    %2608 = vmatprep.subr.mxu0 0.0
    %v2609 = vand.u32 %v387, 4294901760
    %v2610 = vsub.f32 %v387, %v2609
    %v2611 = vand.u32 %v2610, 4294901760
    %v2612 = vsub.f32 %v2610, %v2611
    %v2613 = vand.u32 %v2612, 4294901760
    %2614 = vmatpush1.msra.mxu0 %v2613
    %2615 = vmatprep.subr.mxu0 0.0
    %v2616 = vand.u32 %v388, 4294901760
    %v2617 = vsub.f32 %v388, %v2616
    %v2618 = vand.u32 %v2617, 4294901760
    %v2619 = vsub.f32 %v2617, %v2618
    %v2620 = vand.u32 %v2619, 4294901760
    %2621 = vmatpush1.msra.mxu0 %v2620
    %2622 = vmatprep.subr.mxu0 0.0
    %v2623 = vand.u32 %v389, 4294901760
    %v2624 = vsub.f32 %v389, %v2623
    %v2625 = vand.u32 %v2624, 4294901760
    %v2626 = vsub.f32 %v2624, %v2625
    %v2627 = vand.u32 %v2626, 4294901760
    %2628 = vmatpush1.msra.mxu0 %v2627
    %2629 = vmatprep.subr.mxu0 0.0
    %v2630 = vand.u32 %v390, 4294901760
    %v2631 = vsub.f32 %v390, %v2630
    %v2632 = vand.u32 %v2631, 4294901760
    %v2633 = vsub.f32 %v2631, %v2632
    %v2634 = vand.u32 %v2633, 4294901760
    %2635 = vmatpush1.msra.mxu0 %v2634
    %2636 = vmatprep.subr.mxu0 0.0
    %v2637 = vand.u32 %v391, 4294901760
    %v2638 = vsub.f32 %v391, %v2637
    %v2639 = vand.u32 %v2638, 4294901760
    %v2640 = vsub.f32 %v2638, %v2639
    %v2641 = vand.u32 %v2640, 4294901760
    %2642 = vmatpush1.msra.mxu0 %v2641
    %2643 = vmatprep.subr.mxu0 0.0
    %v2644 = vand.u32 %v392, 4294901760
    %v2645 = vsub.f32 %v392, %v2644
    %v2646 = vand.u32 %v2645, 4294901760
    %v2647 = vsub.f32 %v2645, %v2646
    %v2648 = vand.u32 %v2647, 4294901760
    %2649 = vmatpush1.msra.mxu0 %v2648
    %2650 = vmatprep.subr.mxu0 0.0
    %v2651 = vand.u32 %v393, 4294901760
    %v2652 = vsub.f32 %v393, %v2651
    %v2653 = vand.u32 %v2652, 4294901760
    %v2654 = vsub.f32 %v2652, %v2653
    %v2655 = vand.u32 %v2654, 4294901760
    %2656 = vmatpush1.msra.mxu0 %v2655
    %2657 = vmatprep.subr.mxu0 0.0
    %v2658 = vand.u32 %v394, 4294901760
    %v2659 = vsub.f32 %v394, %v2658
    %v2660 = vand.u32 %v2659, 4294901760
    %v2661 = vsub.f32 %v2659, %v2660
    %v2662 = vand.u32 %v2661, 4294901760
    %2663 = vmatpush1.msra.mxu0 %v2662
    %v2664 = vand.u32 %v454, 4294901760
    %2665 = vmatprep.mubr.f32.mxu0 %v2664
    %v2666 = vand.u32 %v453, 4294901760
    %2667 = vmatmul.mubr.f32.gmra.mrb[0].mxu0 %v2666
    %v2668 = vpop.f32.mrb[0].mxu0
    %v2669 = vadd.f32 %v2422, %v2668
    %v2670 = vpop.f32.mrb[0].mxu0
    %v2671 = vand.u32 %v464, 4294901760
    %2672 = vmatprep.mubr.f32.mxu0 %v2671
    %v2673 = vand.u32 %v463, 4294901760
    %2674 = vmatmul.mubr.f32.gmra.mrb[0].mxu0 %v2673
    %v2675 = vpop.f32.mrb[0].mxu0
    %v2676 = vadd.f32 %v2437, %v2675
    %v2677 = vpop.f32.mrb[0].mxu0
    %2678 = vdwg.mxu0
    %2679 = vmatprep.subr.mxu0 0.0
    %v2680 = vand.u32 %v363, 4294901760
    %v2681 = vsub.f32 %v363, %v2680
    %2682 = vmatpush1.msra.mxu0 %v2681
    %2683 = vmatprep.subr.mxu0 0.0
    %v2684 = vand.u32 %v364, 4294901760
    %v2685 = vsub.f32 %v364, %v2684
    %2686 = vmatpush1.msra.mxu0 %v2685
    %2687 = vmatprep.subr.mxu0 0.0
    %v2688 = vand.u32 %v365, 4294901760
    %v2689 = vsub.f32 %v365, %v2688
    %2690 = vmatpush1.msra.mxu0 %v2689
    %2691 = vmatprep.subr.mxu0 0.0
    %v2692 = vand.u32 %v366, 4294901760
    %v2693 = vsub.f32 %v366, %v2692
    %2694 = vmatpush1.msra.mxu0 %v2693
    %2695 = vmatprep.subr.mxu0 0.0
    %v2696 = vand.u32 %v367, 4294901760
    %v2697 = vsub.f32 %v367, %v2696
    %2698 = vmatpush1.msra.mxu0 %v2697
    %2699 = vmatprep.subr.mxu0 0.0
    %v2700 = vand.u32 %v368, 4294901760
    %v2701 = vsub.f32 %v368, %v2700
    %2702 = vmatpush1.msra.mxu0 %v2701
    %2703 = vmatprep.subr.mxu0 0.0
    %v2704 = vand.u32 %v369, 4294901760
    %v2705 = vsub.f32 %v369, %v2704
    %2706 = vmatpush1.msra.mxu0 %v2705
    %2707 = vmatprep.subr.mxu0 0.0
    %v2708 = vand.u32 %v370, 4294901760
    %v2709 = vsub.f32 %v370, %v2708
    %2710 = vmatpush1.msra.mxu0 %v2709
    %2711 = vmatprep.subr.mxu0 0.0
    %v2712 = vand.u32 %v371, 4294901760
    %v2713 = vsub.f32 %v371, %v2712
    %2714 = vmatpush1.msra.mxu0 %v2713
    %2715 = vmatprep.subr.mxu0 0.0
    %v2716 = vand.u32 %v372, 4294901760
    %v2717 = vsub.f32 %v372, %v2716
    %2718 = vmatpush1.msra.mxu0 %v2717
    %2719 = vmatprep.subr.mxu0 0.0
    %v2720 = vand.u32 %v373, 4294901760
    %v2721 = vsub.f32 %v373, %v2720
    %2722 = vmatpush1.msra.mxu0 %v2721
    %2723 = vmatprep.subr.mxu0 0.0
    %v2724 = vand.u32 %v374, 4294901760
    %v2725 = vsub.f32 %v374, %v2724
    %2726 = vmatpush1.msra.mxu0 %v2725
    %2727 = vmatprep.subr.mxu0 0.0
    %v2728 = vand.u32 %v375, 4294901760
    %v2729 = vsub.f32 %v375, %v2728
    %2730 = vmatpush1.msra.mxu0 %v2729
    %2731 = vmatprep.subr.mxu0 0.0
    %v2732 = vand.u32 %v376, 4294901760
    %v2733 = vsub.f32 %v376, %v2732
    %2734 = vmatpush1.msra.mxu0 %v2733
    %2735 = vmatprep.subr.mxu0 0.0
    %v2736 = vand.u32 %v377, 4294901760
    %v2737 = vsub.f32 %v377, %v2736
    %2738 = vmatpush1.msra.mxu0 %v2737
    %2739 = vmatprep.subr.mxu0 0.0
    %v2740 = vand.u32 %v378, 4294901760
    %v2741 = vsub.f32 %v378, %v2740
    %2742 = vmatpush1.msra.mxu0 %v2741
    %2743 = vmatprep.subr.mxu0 0.0
    %v2744 = vand.u32 %v379, 4294901760
    %v2745 = vsub.f32 %v379, %v2744
    %2746 = vmatpush1.msra.mxu0 %v2745
    %2747 = vmatprep.subr.mxu0 0.0
    %v2748 = vand.u32 %v380, 4294901760
    %v2749 = vsub.f32 %v380, %v2748
    %2750 = vmatpush1.msra.mxu0 %v2749
    %2751 = vmatprep.subr.mxu0 0.0
    %v2752 = vand.u32 %v381, 4294901760
    %v2753 = vsub.f32 %v381, %v2752
    %2754 = vmatpush1.msra.mxu0 %v2753
    %2755 = vmatprep.subr.mxu0 0.0
    %v2756 = vand.u32 %v382, 4294901760
    %v2757 = vsub.f32 %v382, %v2756
    %2758 = vmatpush1.msra.mxu0 %v2757
    %2759 = vmatprep.subr.mxu0 0.0
    %v2760 = vand.u32 %v383, 4294901760
    %v2761 = vsub.f32 %v383, %v2760
    %2762 = vmatpush1.msra.mxu0 %v2761
    %2763 = vmatprep.subr.mxu0 0.0
    %v2764 = vand.u32 %v384, 4294901760
    %v2765 = vsub.f32 %v384, %v2764
    %2766 = vmatpush1.msra.mxu0 %v2765
    %2767 = vmatprep.subr.mxu0 0.0
    %v2768 = vand.u32 %v385, 4294901760
    %v2769 = vsub.f32 %v385, %v2768
    %2770 = vmatpush1.msra.mxu0 %v2769
    %2771 = vmatprep.subr.mxu0 0.0
    %v2772 = vand.u32 %v386, 4294901760
    %v2773 = vsub.f32 %v386, %v2772
    %2774 = vmatpush1.msra.mxu0 %v2773
    %2775 = vmatprep.subr.mxu0 0.0
    %v2776 = vand.u32 %v387, 4294901760
    %v2777 = vsub.f32 %v387, %v2776
    %2778 = vmatpush1.msra.mxu0 %v2777
    %2779 = vmatprep.subr.mxu0 0.0
    %v2780 = vand.u32 %v388, 4294901760
    %v2781 = vsub.f32 %v388, %v2780
    %2782 = vmatpush1.msra.mxu0 %v2781
    %2783 = vmatprep.subr.mxu0 0.0
    %v2784 = vand.u32 %v389, 4294901760
    %v2785 = vsub.f32 %v389, %v2784
    %2786 = vmatpush1.msra.mxu0 %v2785
    %2787 = vmatprep.subr.mxu0 0.0
    %v2788 = vand.u32 %v390, 4294901760
    %v2789 = vsub.f32 %v390, %v2788
    %2790 = vmatpush1.msra.mxu0 %v2789
    %2791 = vmatprep.subr.mxu0 0.0
    %v2792 = vand.u32 %v391, 4294901760
    %v2793 = vsub.f32 %v391, %v2792
    %2794 = vmatpush1.msra.mxu0 %v2793
    %2795 = vmatprep.subr.mxu0 0.0
    %v2796 = vand.u32 %v392, 4294901760
    %v2797 = vsub.f32 %v392, %v2796
    %2798 = vmatpush1.msra.mxu0 %v2797
    %2799 = vmatprep.subr.mxu0 0.0
    %v2800 = vand.u32 %v393, 4294901760
    %v2801 = vsub.f32 %v393, %v2800
    %2802 = vmatpush1.msra.mxu0 %v2801
    %2803 = vmatprep.subr.mxu0 0.0
    %v2804 = vand.u32 %v394, 4294901760
    %v2805 = vsub.f32 %v394, %v2804
    %2806 = vmatpush1.msra.mxu0 %v2805
    %v2807 = vand.u32 %v454, 4294901760
    %v2808 = vsub.f32 %v454, %v2807
    %2809 = vmatprep.mubr.f32.mxu0 %v2808
    %v2810 = vand.u32 %v453, 4294901760
    %v2811 = vsub.f32 %v453, %v2810
    %2812 = vmatmul.mubr.f32.gmra.mrb[0].mxu0 %v2811
    %v2813 = vpop.f32.mrb[0].mxu0
    %v2814 = vadd.f32 %v2669, %v2813
    %v2815 = vpop.f32.mrb[0].mxu0
    %v2816 = vand.u32 %v464, 4294901760
    %v2817 = vsub.f32 %v464, %v2816
    %2818 = vmatprep.mubr.f32.mxu0 %v2817
    %v2819 = vand.u32 %v463, 4294901760
    %v2820 = vsub.f32 %v463, %v2819
    %2821 = vmatmul.mubr.f32.gmra.mrb[0].mxu0 %v2820
    %v2822 = vpop.f32.mrb[0].mxu0
    %v2823 = vadd.f32 %v2676, %v2822
    %v2824 = vpop.f32.mrb[0].mxu0
    %2825 = vdwg.mxu0
    %2826 = vmatprep.subr.mxu0 0.0
    %v2827 = vand.u32 %v363, 4294901760
    %2828 = vmatpush1.msra.mxu0 %v2827
    %2829 = vmatprep.subr.mxu0 0.0
    %v2830 = vand.u32 %v364, 4294901760
    %2831 = vmatpush1.msra.mxu0 %v2830
    %2832 = vmatprep.subr.mxu0 0.0
    %v2833 = vand.u32 %v365, 4294901760
    %2834 = vmatpush1.msra.mxu0 %v2833
    %2835 = vmatprep.subr.mxu0 0.0
    %v2836 = vand.u32 %v366, 4294901760
    %2837 = vmatpush1.msra.mxu0 %v2836
    %2838 = vmatprep.subr.mxu0 0.0
    %v2839 = vand.u32 %v367, 4294901760
    %2840 = vmatpush1.msra.mxu0 %v2839
    %2841 = vmatprep.subr.mxu0 0.0
    %v2842 = vand.u32 %v368, 4294901760
    %2843 = vmatpush1.msra.mxu0 %v2842
    %2844 = vmatprep.subr.mxu0 0.0
    %v2845 = vand.u32 %v369, 4294901760
    %2846 = vmatpush1.msra.mxu0 %v2845
    %2847 = vmatprep.subr.mxu0 0.0
    %v2848 = vand.u32 %v370, 4294901760
    %2849 = vmatpush1.msra.mxu0 %v2848
    %2850 = vmatprep.subr.mxu0 0.0
    %v2851 = vand.u32 %v371, 4294901760
    %2852 = vmatpush1.msra.mxu0 %v2851
    %2853 = vmatprep.subr.mxu0 0.0
    %v2854 = vand.u32 %v372, 4294901760
    %2855 = vmatpush1.msra.mxu0 %v2854
    %2856 = vmatprep.subr.mxu0 0.0
    %v2857 = vand.u32 %v373, 4294901760
    %2858 = vmatpush1.msra.mxu0 %v2857
    %2859 = vmatprep.subr.mxu0 0.0
    %v2860 = vand.u32 %v374, 4294901760
    %2861 = vmatpush1.msra.mxu0 %v2860
    %2862 = vmatprep.subr.mxu0 0.0
    %v2863 = vand.u32 %v375, 4294901760
    %2864 = vmatpush1.msra.mxu0 %v2863
    %2865 = vmatprep.subr.mxu0 0.0
    %v2866 = vand.u32 %v376, 4294901760
    %2867 = vmatpush1.msra.mxu0 %v2866
    %2868 = vmatprep.subr.mxu0 0.0
    %v2869 = vand.u32 %v377, 4294901760
    %2870 = vmatpush1.msra.mxu0 %v2869
    %2871 = vmatprep.subr.mxu0 0.0
    %v2872 = vand.u32 %v378, 4294901760
    %2873 = vmatpush1.msra.mxu0 %v2872
    %2874 = vmatprep.subr.mxu0 0.0
    %v2875 = vand.u32 %v379, 4294901760
    %2876 = vmatpush1.msra.mxu0 %v2875
    %2877 = vmatprep.subr.mxu0 0.0
    %v2878 = vand.u32 %v380, 4294901760
    %2879 = vmatpush1.msra.mxu0 %v2878
    %2880 = vmatprep.subr.mxu0 0.0
    %v2881 = vand.u32 %v381, 4294901760
    %2882 = vmatpush1.msra.mxu0 %v2881
    %2883 = vmatprep.subr.mxu0 0.0
    %v2884 = vand.u32 %v382, 4294901760
    %2885 = vmatpush1.msra.mxu0 %v2884
    %2886 = vmatprep.subr.mxu0 0.0
    %v2887 = vand.u32 %v383, 4294901760
    %2888 = vmatpush1.msra.mxu0 %v2887
    %2889 = vmatprep.subr.mxu0 0.0
    %v2890 = vand.u32 %v384, 4294901760
    %2891 = vmatpush1.msra.mxu0 %v2890
    %2892 = vmatprep.subr.mxu0 0.0
    %v2893 = vand.u32 %v385, 4294901760
    %2894 = vmatpush1.msra.mxu0 %v2893
    %2895 = vmatprep.subr.mxu0 0.0
    %v2896 = vand.u32 %v386, 4294901760
    %2897 = vmatpush1.msra.mxu0 %v2896
    %2898 = vmatprep.subr.mxu0 0.0
    %v2899 = vand.u32 %v387, 4294901760
    %2900 = vmatpush1.msra.mxu0 %v2899
    %2901 = vmatprep.subr.mxu0 0.0
    %v2902 = vand.u32 %v388, 4294901760
    %2903 = vmatpush1.msra.mxu0 %v2902
    %2904 = vmatprep.subr.mxu0 0.0
    %v2905 = vand.u32 %v389, 4294901760
    %2906 = vmatpush1.msra.mxu0 %v2905
    %2907 = vmatprep.subr.mxu0 0.0
    %v2908 = vand.u32 %v390, 4294901760
    %2909 = vmatpush1.msra.mxu0 %v2908
    %2910 = vmatprep.subr.mxu0 0.0
    %v2911 = vand.u32 %v391, 4294901760
    %2912 = vmatpush1.msra.mxu0 %v2911
    %2913 = vmatprep.subr.mxu0 0.0
    %v2914 = vand.u32 %v392, 4294901760
    %2915 = vmatpush1.msra.mxu0 %v2914
    %2916 = vmatprep.subr.mxu0 0.0
    %v2917 = vand.u32 %v393, 4294901760
    %2918 = vmatpush1.msra.mxu0 %v2917
    %2919 = vmatprep.subr.mxu0 0.0
    %v2920 = vand.u32 %v394, 4294901760
    %2921 = vmatpush1.msra.mxu0 %v2920
    %v2922 = vand.u32 %v454, 4294901760
    %v2923 = vsub.f32 %v454, %v2922
    %v2924 = vand.u32 %v2923, 4294901760
    %2925 = vmatprep.mubr.f32.mxu0 %v2924
    %v2926 = vand.u32 %v453, 4294901760
    %v2927 = vsub.f32 %v453, %v2926
    %v2928 = vand.u32 %v2927, 4294901760
    %2929 = vmatmul.mubr.f32.gmra.mrb[0].mxu0 %v2928
    %v2930 = vpop.f32.mrb[0].mxu0
    %v2931 = vadd.f32 %v2814, %v2930
    %v2932 = vpop.f32.mrb[0].mxu0
    %v2933 = vand.u32 %v464, 4294901760
    %v2934 = vsub.f32 %v464, %v2933
    %v2935 = vand.u32 %v2934, 4294901760
    %2936 = vmatprep.mubr.f32.mxu0 %v2935
    %v2937 = vand.u32 %v463, 4294901760
    %v2938 = vsub.f32 %v463, %v2937
    %v2939 = vand.u32 %v2938, 4294901760
    %2940 = vmatmul.mubr.f32.gmra.mrb[0].mxu0 %v2939
    %v2941 = vpop.f32.mrb[0].mxu0
    %v2942 = vadd.f32 %v2823, %v2941
    %v2943 = vpop.f32.mrb[0].mxu0
    %2944 = vdwg.mxu0
    %2945 = vmatprep.subr.mxu0 0.0
    %v2946 = vand.u32 %v363, 4294901760
    %v2947 = vsub.f32 %v363, %v2946
    %v2948 = vand.u32 %v2947, 4294901760
    %2949 = vmatpush1.msra.mxu0 %v2948
    %2950 = vmatprep.subr.mxu0 0.0
    %v2951 = vand.u32 %v364, 4294901760
    %v2952 = vsub.f32 %v364, %v2951
    %v2953 = vand.u32 %v2952, 4294901760
    %2954 = vmatpush1.msra.mxu0 %v2953
    %2955 = vmatprep.subr.mxu0 0.0
    %v2956 = vand.u32 %v365, 4294901760
    %v2957 = vsub.f32 %v365, %v2956
    %v2958 = vand.u32 %v2957, 4294901760
    %2959 = vmatpush1.msra.mxu0 %v2958
    %2960 = vmatprep.subr.mxu0 0.0
    %v2961 = vand.u32 %v366, 4294901760
    %v2962 = vsub.f32 %v366, %v2961
    %v2963 = vand.u32 %v2962, 4294901760
    %2964 = vmatpush1.msra.mxu0 %v2963
    %2965 = vmatprep.subr.mxu0 0.0
    %v2966 = vand.u32 %v367, 4294901760
    %v2967 = vsub.f32 %v367, %v2966
    %v2968 = vand.u32 %v2967, 4294901760
    %2969 = vmatpush1.msra.mxu0 %v2968
    %2970 = vmatprep.subr.mxu0 0.0
    %v2971 = vand.u32 %v368, 4294901760
    %v2972 = vsub.f32 %v368, %v2971
    %v2973 = vand.u32 %v2972, 4294901760
    %2974 = vmatpush1.msra.mxu0 %v2973
    %2975 = vmatprep.subr.mxu0 0.0
    %v2976 = vand.u32 %v369, 4294901760
    %v2977 = vsub.f32 %v369, %v2976
    %v2978 = vand.u32 %v2977, 4294901760
    %2979 = vmatpush1.msra.mxu0 %v2978
    %2980 = vmatprep.subr.mxu0 0.0
    %v2981 = vand.u32 %v370, 4294901760
    %v2982 = vsub.f32 %v370, %v2981
    %v2983 = vand.u32 %v2982, 4294901760
    %2984 = vmatpush1.msra.mxu0 %v2983
    %2985 = vmatprep.subr.mxu0 0.0
    %v2986 = vand.u32 %v371, 4294901760
    %v2987 = vsub.f32 %v371, %v2986
    %v2988 = vand.u32 %v2987, 4294901760
    %2989 = vmatpush1.msra.mxu0 %v2988
    %2990 = vmatprep.subr.mxu0 0.0
    %v2991 = vand.u32 %v372, 4294901760
    %v2992 = vsub.f32 %v372, %v2991
    %v2993 = vand.u32 %v2992, 4294901760
    %2994 = vmatpush1.msra.mxu0 %v2993
    %2995 = vmatprep.subr.mxu0 0.0
    %v2996 = vand.u32 %v373, 4294901760
    %v2997 = vsub.f32 %v373, %v2996
    %v2998 = vand.u32 %v2997, 4294901760
    %2999 = vmatpush1.msra.mxu0 %v2998
    %3000 = vmatprep.subr.mxu0 0.0
    %v3001 = vand.u32 %v374, 4294901760
    %v3002 = vsub.f32 %v374, %v3001
    %v3003 = vand.u32 %v3002, 4294901760
    %3004 = vmatpush1.msra.mxu0 %v3003
    %3005 = vmatprep.subr.mxu0 0.0
    %v3006 = vand.u32 %v375, 4294901760
    %v3007 = vsub.f32 %v375, %v3006
    %v3008 = vand.u32 %v3007, 4294901760
    %3009 = vmatpush1.msra.mxu0 %v3008
    %3010 = vmatprep.subr.mxu0 0.0
    %v3011 = vand.u32 %v376, 4294901760
    %v3012 = vsub.f32 %v376, %v3011
    %v3013 = vand.u32 %v3012, 4294901760
    %3014 = vmatpush1.msra.mxu0 %v3013
    %3015 = vmatprep.subr.mxu0 0.0
    %v3016 = vand.u32 %v377, 4294901760
    %v3017 = vsub.f32 %v377, %v3016
    %v3018 = vand.u32 %v3017, 4294901760
    %3019 = vmatpush1.msra.mxu0 %v3018
    %3020 = vmatprep.subr.mxu0 0.0
    %v3021 = vand.u32 %v378, 4294901760
    %v3022 = vsub.f32 %v378, %v3021
    %v3023 = vand.u32 %v3022, 4294901760
    %3024 = vmatpush1.msra.mxu0 %v3023
    %3025 = vmatprep.subr.mxu0 0.0
    %v3026 = vand.u32 %v379, 4294901760
    %v3027 = vsub.f32 %v379, %v3026
    %v3028 = vand.u32 %v3027, 4294901760
    %3029 = vmatpush1.msra.mxu0 %v3028
    %3030 = vmatprep.subr.mxu0 0.0
    %v3031 = vand.u32 %v380, 4294901760
    %v3032 = vsub.f32 %v380, %v3031
    %v3033 = vand.u32 %v3032, 4294901760
    %3034 = vmatpush1.msra.mxu0 %v3033
    %3035 = vmatprep.subr.mxu0 0.0
    %v3036 = vand.u32 %v381, 4294901760
    %v3037 = vsub.f32 %v381, %v3036
    %v3038 = vand.u32 %v3037, 4294901760
    %3039 = vmatpush1.msra.mxu0 %v3038
    %3040 = vmatprep.subr.mxu0 0.0
    %v3041 = vand.u32 %v382, 4294901760
    %v3042 = vsub.f32 %v382, %v3041
    %v3043 = vand.u32 %v3042, 4294901760
    %3044 = vmatpush1.msra.mxu0 %v3043
    %3045 = vmatprep.subr.mxu0 0.0
    %v3046 = vand.u32 %v383, 4294901760
    %v3047 = vsub.f32 %v383, %v3046
    %v3048 = vand.u32 %v3047, 4294901760
    %3049 = vmatpush1.msra.mxu0 %v3048
    %3050 = vmatprep.subr.mxu0 0.0
    %v3051 = vand.u32 %v384, 4294901760
    %v3052 = vsub.f32 %v384, %v3051
    %v3053 = vand.u32 %v3052, 4294901760
    %3054 = vmatpush1.msra.mxu0 %v3053
    %3055 = vmatprep.subr.mxu0 0.0
    %v3056 = vand.u32 %v385, 4294901760
    %v3057 = vsub.f32 %v385, %v3056
    %v3058 = vand.u32 %v3057, 4294901760
    %3059 = vmatpush1.msra.mxu0 %v3058
    %3060 = vmatprep.subr.mxu0 0.0
    %v3061 = vand.u32 %v386, 4294901760
    %v3062 = vsub.f32 %v386, %v3061
    %v3063 = vand.u32 %v3062, 4294901760
    %3064 = vmatpush1.msra.mxu0 %v3063
    %3065 = vmatprep.subr.mxu0 0.0
    %v3066 = vand.u32 %v387, 4294901760
    %v3067 = vsub.f32 %v387, %v3066
    %v3068 = vand.u32 %v3067, 4294901760
    %3069 = vmatpush1.msra.mxu0 %v3068
    %3070 = vmatprep.subr.mxu0 0.0
    %v3071 = vand.u32 %v388, 4294901760
    %v3072 = vsub.f32 %v388, %v3071
    %v3073 = vand.u32 %v3072, 4294901760
    %3074 = vmatpush1.msra.mxu0 %v3073
    %3075 = vmatprep.subr.mxu0 0.0
    %v3076 = vand.u32 %v389, 4294901760
    %v3077 = vsub.f32 %v389, %v3076
    %v3078 = vand.u32 %v3077, 4294901760
    %3079 = vmatpush1.msra.mxu0 %v3078
    %3080 = vmatprep.subr.mxu0 0.0
    %v3081 = vand.u32 %v390, 4294901760
    %v3082 = vsub.f32 %v390, %v3081
    %v3083 = vand.u32 %v3082, 4294901760
    %3084 = vmatpush1.msra.mxu0 %v3083
    %3085 = vmatprep.subr.mxu0 0.0
    %v3086 = vand.u32 %v391, 4294901760
    %v3087 = vsub.f32 %v391, %v3086
    %v3088 = vand.u32 %v3087, 4294901760
    %3089 = vmatpush1.msra.mxu0 %v3088
    %3090 = vmatprep.subr.mxu0 0.0
    %v3091 = vand.u32 %v392, 4294901760
    %v3092 = vsub.f32 %v392, %v3091
    %v3093 = vand.u32 %v3092, 4294901760
    %3094 = vmatpush1.msra.mxu0 %v3093
    %3095 = vmatprep.subr.mxu0 0.0
    %v3096 = vand.u32 %v393, 4294901760
    %v3097 = vsub.f32 %v393, %v3096
    %v3098 = vand.u32 %v3097, 4294901760
    %3099 = vmatpush1.msra.mxu0 %v3098
    %3100 = vmatprep.subr.mxu0 0.0
    %v3101 = vand.u32 %v394, 4294901760
    %v3102 = vsub.f32 %v394, %v3101
    %v3103 = vand.u32 %v3102, 4294901760
    %3104 = vmatpush1.msra.mxu0 %v3103
    %v3105 = vand.u32 %v454, 4294901760
    %3106 = vmatprep.mubr.f32.mxu0 %v3105
    %v3107 = vand.u32 %v453, 4294901760
    %3108 = vmatmul.mubr.f32.gmra.mrb[0].mxu0 %v3107
    %v3109 = vpop.f32.mrb[0].mxu0
    %v3110 = vadd.f32 %v2931, %v3109
    %v3111 = vpop.f32.mrb[0].mxu0
    %v3112 = vand.u32 %v464, 4294901760
    %3113 = vmatprep.mubr.f32.mxu0 %v3112
    %v3114 = vand.u32 %v463, 4294901760
    %3115 = vmatmul.mubr.f32.gmra.mrb[0].mxu0 %v3114
    %v3116 = vpop.f32.mrb[0].mxu0
    %v3117 = vadd.f32 %v2942, %v3116
    %v3118 = vpop.f32.mrb[0].mxu0
    %3119 = vdwg.mxu0
    %3120 = vmatprep.subr.mxu0 0.0
    %v3121 = vand.u32 %v363, 4294901760
    %3122 = vmatpush1.msra.mxu0 %v3121
    %3123 = vmatprep.subr.mxu0 0.0
    %v3124 = vand.u32 %v364, 4294901760
    %3125 = vmatpush1.msra.mxu0 %v3124
    %3126 = vmatprep.subr.mxu0 0.0
    %v3127 = vand.u32 %v365, 4294901760
    %3128 = vmatpush1.msra.mxu0 %v3127
    %3129 = vmatprep.subr.mxu0 0.0
    %v3130 = vand.u32 %v366, 4294901760
    %3131 = vmatpush1.msra.mxu0 %v3130
    %3132 = vmatprep.subr.mxu0 0.0
    %v3133 = vand.u32 %v367, 4294901760
    %3134 = vmatpush1.msra.mxu0 %v3133
    %3135 = vmatprep.subr.mxu0 0.0
    %v3136 = vand.u32 %v368, 4294901760
    %3137 = vmatpush1.msra.mxu0 %v3136
    %3138 = vmatprep.subr.mxu0 0.0
    %v3139 = vand.u32 %v369, 4294901760
    %3140 = vmatpush1.msra.mxu0 %v3139
    %3141 = vmatprep.subr.mxu0 0.0
    %v3142 = vand.u32 %v370, 4294901760
    %3143 = vmatpush1.msra.mxu0 %v3142
    %3144 = vmatprep.subr.mxu0 0.0
    %v3145 = vand.u32 %v371, 4294901760
    %3146 = vmatpush1.msra.mxu0 %v3145
    %3147 = vmatprep.subr.mxu0 0.0
    %v3148 = vand.u32 %v372, 4294901760
    %3149 = vmatpush1.msra.mxu0 %v3148
    %3150 = vmatprep.subr.mxu0 0.0
    %v3151 = vand.u32 %v373, 4294901760
    %3152 = vmatpush1.msra.mxu0 %v3151
    %3153 = vmatprep.subr.mxu0 0.0
    %v3154 = vand.u32 %v374, 4294901760
    %3155 = vmatpush1.msra.mxu0 %v3154
    %3156 = vmatprep.subr.mxu0 0.0
    %v3157 = vand.u32 %v375, 4294901760
    %3158 = vmatpush1.msra.mxu0 %v3157
    %3159 = vmatprep.subr.mxu0 0.0
    %v3160 = vand.u32 %v376, 4294901760
    %3161 = vmatpush1.msra.mxu0 %v3160
    %3162 = vmatprep.subr.mxu0 0.0
    %v3163 = vand.u32 %v377, 4294901760
    %3164 = vmatpush1.msra.mxu0 %v3163
    %3165 = vmatprep.subr.mxu0 0.0
    %v3166 = vand.u32 %v378, 4294901760
    %3167 = vmatpush1.msra.mxu0 %v3166
    %3168 = vmatprep.subr.mxu0 0.0
    %v3169 = vand.u32 %v379, 4294901760
    %3170 = vmatpush1.msra.mxu0 %v3169
    %3171 = vmatprep.subr.mxu0 0.0
    %v3172 = vand.u32 %v380, 4294901760
    %3173 = vmatpush1.msra.mxu0 %v3172
    %3174 = vmatprep.subr.mxu0 0.0
    %v3175 = vand.u32 %v381, 4294901760
    %3176 = vmatpush1.msra.mxu0 %v3175
    %3177 = vmatprep.subr.mxu0 0.0
    %v3178 = vand.u32 %v382, 4294901760
    %3179 = vmatpush1.msra.mxu0 %v3178
    %3180 = vmatprep.subr.mxu0 0.0
    %v3181 = vand.u32 %v383, 4294901760
    %3182 = vmatpush1.msra.mxu0 %v3181
    %3183 = vmatprep.subr.mxu0 0.0
    %v3184 = vand.u32 %v384, 4294901760
    %3185 = vmatpush1.msra.mxu0 %v3184
    %3186 = vmatprep.subr.mxu0 0.0
    %v3187 = vand.u32 %v385, 4294901760
    %3188 = vmatpush1.msra.mxu0 %v3187
    %3189 = vmatprep.subr.mxu0 0.0
    %v3190 = vand.u32 %v386, 4294901760
    %3191 = vmatpush1.msra.mxu0 %v3190
    %3192 = vmatprep.subr.mxu0 0.0
    %v3193 = vand.u32 %v387, 4294901760
    %3194 = vmatpush1.msra.mxu0 %v3193
    %3195 = vmatprep.subr.mxu0 0.0
    %v3196 = vand.u32 %v388, 4294901760
    %3197 = vmatpush1.msra.mxu0 %v3196
    %3198 = vmatprep.subr.mxu0 0.0
    %v3199 = vand.u32 %v389, 4294901760
    %3200 = vmatpush1.msra.mxu0 %v3199
    %3201 = vmatprep.subr.mxu0 0.0
    %v3202 = vand.u32 %v390, 4294901760
    %3203 = vmatpush1.msra.mxu0 %v3202
    %3204 = vmatprep.subr.mxu0 0.0
    %v3205 = vand.u32 %v391, 4294901760
    %3206 = vmatpush1.msra.mxu0 %v3205
    %3207 = vmatprep.subr.mxu0 0.0
    %v3208 = vand.u32 %v392, 4294901760
    %3209 = vmatpush1.msra.mxu0 %v3208
    %3210 = vmatprep.subr.mxu0 0.0
    %v3211 = vand.u32 %v393, 4294901760
    %3212 = vmatpush1.msra.mxu0 %v3211
    %3213 = vmatprep.subr.mxu0 0.0
    %v3214 = vand.u32 %v394, 4294901760
    %3215 = vmatpush1.msra.mxu0 %v3214
    %v3216 = vand.u32 %v454, 4294901760
    %3217 = vmatprep.mubr.f32.mxu0 %v3216
    %v3218 = vand.u32 %v453, 4294901760
    %3219 = vmatmul.mubr.f32.gmra.mrb[0].mxu0 %v3218
    %v3220 = vpop.f32.mrb[0].mxu0
    %v3221 = vadd.f32 %v3110, %v3220
    %v3222 = vpop.f32.mrb[0].mxu0
    %v3223 = vand.u32 %v464, 4294901760
    %3224 = vmatprep.mubr.f32.mxu0 %v3223
    %v3225 = vand.u32 %v463, 4294901760
    %3226 = vmatmul.mubr.f32.gmra.mrb[0].mxu0 %v3225
    %v3227 = vpop.f32.mrb[0].mxu0
    %v3228 = vadd.f32 %v3117, %v3227
    %v3229 = vpop.f32.mrb[0].mxu0
    %3230 = vdwg.mxu0
    %3231 = vmatprep.subr.mxu0 0.0
    %v3232 = vand.u32 %v395, 4294901760
    %3233 = vmatpush1.msra.mxu0 %v3232
    %3234 = vmatprep.subr.mxu0 0.0
    %v3235 = vand.u32 %v396, 4294901760
    %3236 = vmatpush1.msra.mxu0 %v3235
    %3237 = vmatprep.subr.mxu0 0.0
    %v3238 = vand.u32 %v397, 4294901760
    %3239 = vmatpush1.msra.mxu0 %v3238
    %3240 = vmatprep.subr.mxu0 0.0
    %v3241 = vand.u32 %v398, 4294901760
    %3242 = vmatpush1.msra.mxu0 %v3241
    %3243 = vmatprep.subr.mxu0 0.0
    %v3244 = vand.u32 %v399, 4294901760
    %3245 = vmatpush1.msra.mxu0 %v3244
    %3246 = vmatprep.subr.mxu0 0.0
    %v3247 = vand.u32 %v400, 4294901760
    %3248 = vmatpush1.msra.mxu0 %v3247
    %3249 = vmatprep.subr.mxu0 0.0
    %v3250 = vand.u32 %v401, 4294901760
    %3251 = vmatpush1.msra.mxu0 %v3250
    %3252 = vmatprep.subr.mxu0 0.0
    %v3253 = vand.u32 %v402, 4294901760
    %3254 = vmatpush1.msra.mxu0 %v3253
    %3255 = vmatprep.subr.mxu0 0.0
    %v3256 = vand.u32 %v403, 4294901760
    %3257 = vmatpush1.msra.mxu0 %v3256
    %3258 = vmatprep.subr.mxu0 0.0
    %v3259 = vand.u32 %v404, 4294901760
    %3260 = vmatpush1.msra.mxu0 %v3259
    %3261 = vmatprep.subr.mxu0 0.0
    %v3262 = vand.u32 %v405, 4294901760
    %3263 = vmatpush1.msra.mxu0 %v3262
    %3264 = vmatprep.subr.mxu0 0.0
    %v3265 = vand.u32 %v406, 4294901760
    %3266 = vmatpush1.msra.mxu0 %v3265
    %3267 = vmatprep.subr.mxu0 0.0
    %v3268 = vand.u32 %v407, 4294901760
    %3269 = vmatpush1.msra.mxu0 %v3268
    %3270 = vmatprep.subr.mxu0 0.0
    %v3271 = vand.u32 %v408, 4294901760
    %3272 = vmatpush1.msra.mxu0 %v3271
    %3273 = vmatprep.subr.mxu0 0.0
    %v3274 = vand.u32 %v409, 4294901760
    %3275 = vmatpush1.msra.mxu0 %v3274
    %3276 = vmatprep.subr.mxu0 0.0
    %v3277 = vand.u32 %v410, 4294901760
    %3278 = vmatpush1.msra.mxu0 %v3277
    %3279 = vmatprep.subr.mxu0 0.0
    %v3280 = vand.u32 %v411, 4294901760
    %3281 = vmatpush1.msra.mxu0 %v3280
    %3282 = vmatprep.subr.mxu0 0.0
    %v3283 = vand.u32 %v412, 4294901760
    %3284 = vmatpush1.msra.mxu0 %v3283
    %3285 = vmatprep.subr.mxu0 0.0
    %v3286 = vand.u32 %v413, 4294901760
    %3287 = vmatpush1.msra.mxu0 %v3286
    %3288 = vmatprep.subr.mxu0 0.0
    %v3289 = vand.u32 %v414, 4294901760
    %3290 = vmatpush1.msra.mxu0 %v3289
    %3291 = vmatprep.subr.mxu0 0.0
    %v3292 = vand.u32 %v415, 4294901760
    %3293 = vmatpush1.msra.mxu0 %v3292
    %3294 = vmatprep.subr.mxu0 0.0
    %v3295 = vand.u32 %v416, 4294901760
    %3296 = vmatpush1.msra.mxu0 %v3295
    %3297 = vmatprep.subr.mxu0 0.0
    %v3298 = vand.u32 %v417, 4294901760
    %3299 = vmatpush1.msra.mxu0 %v3298
    %3300 = vmatprep.subr.mxu0 0.0
    %v3301 = vand.u32 %v418, 4294901760
    %3302 = vmatpush1.msra.mxu0 %v3301
    %3303 = vmatprep.subr.mxu0 0.0
    %v3304 = vand.u32 %v419, 4294901760
    %3305 = vmatpush1.msra.mxu0 %v3304
    %3306 = vmatprep.subr.mxu0 0.0
    %v3307 = vand.u32 %v420, 4294901760
    %3308 = vmatpush1.msra.mxu0 %v3307
    %3309 = vmatprep.subr.mxu0 0.0
    %v3310 = vand.u32 %v421, 4294901760
    %3311 = vmatpush1.msra.mxu0 %v3310
    %3312 = vmatprep.subr.mxu0 0.0
    %v3313 = vand.u32 %v422, 4294901760
    %3314 = vmatpush1.msra.mxu0 %v3313
    %3315 = vmatprep.subr.mxu0 0.0
    %v3316 = vand.u32 %v423, 4294901760
    %3317 = vmatpush1.msra.mxu0 %v3316
    %3318 = vmatprep.subr.mxu0 0.0
    %v3319 = vand.u32 %v424, 4294901760
    %3320 = vmatpush1.msra.mxu0 %v3319
    %3321 = vmatprep.subr.mxu0 0.0
    %v3322 = vand.u32 %v425, 4294901760
    %3323 = vmatpush1.msra.mxu0 %v3322
    %3324 = vmatprep.subr.mxu0 0.0
    %v3325 = vand.u32 %v426, 4294901760
    %3326 = vmatpush1.msra.mxu0 %v3325
    %v3327 = vand.u32 %v456, 4294901760
    %v3328 = vsub.f32 %v456, %v3327
    %v3329 = vand.u32 %v3328, 4294901760
    %v3330 = vsub.f32 %v3328, %v3329
    %v3331 = vand.u32 %v3330, 4294901760
    %3332 = vmatprep.mubr.f32.mxu0 %v3331
    %v3333 = vand.u32 %v455, 4294901760
    %v3334 = vsub.f32 %v455, %v3333
    %v3335 = vand.u32 %v3334, 4294901760
    %v3336 = vsub.f32 %v3334, %v3335
    %v3337 = vand.u32 %v3336, 4294901760
    %3338 = vmatmul.mubr.f32.gmra.mrb[0].mxu0 %v3337
    %v3339 = vpop.f32.mrb[0].mxu0
    %v3340 = vadd.f32 %v3221, %v3339
    %v3341 = vpop.f32.mrb[0].mxu0
    %v3342 = vand.u32 %v466, 4294901760
    %v3343 = vsub.f32 %v466, %v3342
    %v3344 = vand.u32 %v3343, 4294901760
    %v3345 = vsub.f32 %v3343, %v3344
    %v3346 = vand.u32 %v3345, 4294901760
    %3347 = vmatprep.mubr.f32.mxu0 %v3346
    %v3348 = vand.u32 %v465, 4294901760
    %v3349 = vsub.f32 %v465, %v3348
    %v3350 = vand.u32 %v3349, 4294901760
    %v3351 = vsub.f32 %v3349, %v3350
    %v3352 = vand.u32 %v3351, 4294901760
    %3353 = vmatmul.mubr.f32.gmra.mrb[0].mxu0 %v3352
    %v3354 = vpop.f32.mrb[0].mxu0
    %v3355 = vadd.f32 %v3228, %v3354
    %v3356 = vpop.f32.mrb[0].mxu0
    %3357 = vdwg.mxu0
    %3358 = vmatprep.subr.mxu0 0.0
    %v3359 = vand.u32 %v395, 4294901760
    %v3360 = vsub.f32 %v395, %v3359
    %v3361 = vand.u32 %v3360, 4294901760
    %v3362 = vsub.f32 %v3360, %v3361
    %v3363 = vand.u32 %v3362, 4294901760
    %3364 = vmatpush1.msra.mxu0 %v3363
    %3365 = vmatprep.subr.mxu0 0.0
    %v3366 = vand.u32 %v396, 4294901760
    %v3367 = vsub.f32 %v396, %v3366
    %v3368 = vand.u32 %v3367, 4294901760
    %v3369 = vsub.f32 %v3367, %v3368
    %v3370 = vand.u32 %v3369, 4294901760
    %3371 = vmatpush1.msra.mxu0 %v3370
    %3372 = vmatprep.subr.mxu0 0.0
    %v3373 = vand.u32 %v397, 4294901760
    %v3374 = vsub.f32 %v397, %v3373
    %v3375 = vand.u32 %v3374, 4294901760
    %v3376 = vsub.f32 %v3374, %v3375
    %v3377 = vand.u32 %v3376, 4294901760
    %3378 = vmatpush1.msra.mxu0 %v3377
    %3379 = vmatprep.subr.mxu0 0.0
    %v3380 = vand.u32 %v398, 4294901760
    %v3381 = vsub.f32 %v398, %v3380
    %v3382 = vand.u32 %v3381, 4294901760
    %v3383 = vsub.f32 %v3381, %v3382
    %v3384 = vand.u32 %v3383, 4294901760
    %3385 = vmatpush1.msra.mxu0 %v3384
    %3386 = vmatprep.subr.mxu0 0.0
    %v3387 = vand.u32 %v399, 4294901760
    %v3388 = vsub.f32 %v399, %v3387
    %v3389 = vand.u32 %v3388, 4294901760
    %v3390 = vsub.f32 %v3388, %v3389
    %v3391 = vand.u32 %v3390, 4294901760
    %3392 = vmatpush1.msra.mxu0 %v3391
    %3393 = vmatprep.subr.mxu0 0.0
    %v3394 = vand.u32 %v400, 4294901760
    %v3395 = vsub.f32 %v400, %v3394
    %v3396 = vand.u32 %v3395, 4294901760
    %v3397 = vsub.f32 %v3395, %v3396
    %v3398 = vand.u32 %v3397, 4294901760
    %3399 = vmatpush1.msra.mxu0 %v3398
    %3400 = vmatprep.subr.mxu0 0.0
    %v3401 = vand.u32 %v401, 4294901760
    %v3402 = vsub.f32 %v401, %v3401
    %v3403 = vand.u32 %v3402, 4294901760
    %v3404 = vsub.f32 %v3402, %v3403
    %v3405 = vand.u32 %v3404, 4294901760
    %3406 = vmatpush1.msra.mxu0 %v3405
    %3407 = vmatprep.subr.mxu0 0.0
    %v3408 = vand.u32 %v402, 4294901760
    %v3409 = vsub.f32 %v402, %v3408
    %v3410 = vand.u32 %v3409, 4294901760
    %v3411 = vsub.f32 %v3409, %v3410
    %v3412 = vand.u32 %v3411, 4294901760
    %3413 = vmatpush1.msra.mxu0 %v3412
    %3414 = vmatprep.subr.mxu0 0.0
    %v3415 = vand.u32 %v403, 4294901760
    %v3416 = vsub.f32 %v403, %v3415
    %v3417 = vand.u32 %v3416, 4294901760
    %v3418 = vsub.f32 %v3416, %v3417
    %v3419 = vand.u32 %v3418, 4294901760
    %3420 = vmatpush1.msra.mxu0 %v3419
    %3421 = vmatprep.subr.mxu0 0.0
    %v3422 = vand.u32 %v404, 4294901760
    %v3423 = vsub.f32 %v404, %v3422
    %v3424 = vand.u32 %v3423, 4294901760
    %v3425 = vsub.f32 %v3423, %v3424
    %v3426 = vand.u32 %v3425, 4294901760
    %3427 = vmatpush1.msra.mxu0 %v3426
    %3428 = vmatprep.subr.mxu0 0.0
    %v3429 = vand.u32 %v405, 4294901760
    %v3430 = vsub.f32 %v405, %v3429
    %v3431 = vand.u32 %v3430, 4294901760
    %v3432 = vsub.f32 %v3430, %v3431
    %v3433 = vand.u32 %v3432, 4294901760
    %3434 = vmatpush1.msra.mxu0 %v3433
    %3435 = vmatprep.subr.mxu0 0.0
    %v3436 = vand.u32 %v406, 4294901760
    %v3437 = vsub.f32 %v406, %v3436
    %v3438 = vand.u32 %v3437, 4294901760
    %v3439 = vsub.f32 %v3437, %v3438
    %v3440 = vand.u32 %v3439, 4294901760
    %3441 = vmatpush1.msra.mxu0 %v3440
    %3442 = vmatprep.subr.mxu0 0.0
    %v3443 = vand.u32 %v407, 4294901760
    %v3444 = vsub.f32 %v407, %v3443
    %v3445 = vand.u32 %v3444, 4294901760
    %v3446 = vsub.f32 %v3444, %v3445
    %v3447 = vand.u32 %v3446, 4294901760
    %3448 = vmatpush1.msra.mxu0 %v3447
    %3449 = vmatprep.subr.mxu0 0.0
    %v3450 = vand.u32 %v408, 4294901760
    %v3451 = vsub.f32 %v408, %v3450
    %v3452 = vand.u32 %v3451, 4294901760
    %v3453 = vsub.f32 %v3451, %v3452
    %v3454 = vand.u32 %v3453, 4294901760
    %3455 = vmatpush1.msra.mxu0 %v3454
    %3456 = vmatprep.subr.mxu0 0.0
    %v3457 = vand.u32 %v409, 4294901760
    %v3458 = vsub.f32 %v409, %v3457
    %v3459 = vand.u32 %v3458, 4294901760
    %v3460 = vsub.f32 %v3458, %v3459
    %v3461 = vand.u32 %v3460, 4294901760
    %3462 = vmatpush1.msra.mxu0 %v3461
    %3463 = vmatprep.subr.mxu0 0.0
    %v3464 = vand.u32 %v410, 4294901760
    %v3465 = vsub.f32 %v410, %v3464
    %v3466 = vand.u32 %v3465, 4294901760
    %v3467 = vsub.f32 %v3465, %v3466
    %v3468 = vand.u32 %v3467, 4294901760
    %3469 = vmatpush1.msra.mxu0 %v3468
    %3470 = vmatprep.subr.mxu0 0.0
    %v3471 = vand.u32 %v411, 4294901760
    %v3472 = vsub.f32 %v411, %v3471
    %v3473 = vand.u32 %v3472, 4294901760
    %v3474 = vsub.f32 %v3472, %v3473
    %v3475 = vand.u32 %v3474, 4294901760
    %3476 = vmatpush1.msra.mxu0 %v3475
    %3477 = vmatprep.subr.mxu0 0.0
    %v3478 = vand.u32 %v412, 4294901760
    %v3479 = vsub.f32 %v412, %v3478
    %v3480 = vand.u32 %v3479, 4294901760
    %v3481 = vsub.f32 %v3479, %v3480
    %v3482 = vand.u32 %v3481, 4294901760
    %3483 = vmatpush1.msra.mxu0 %v3482
    %3484 = vmatprep.subr.mxu0 0.0
    %v3485 = vand.u32 %v413, 4294901760
    %v3486 = vsub.f32 %v413, %v3485
    %v3487 = vand.u32 %v3486, 4294901760
    %v3488 = vsub.f32 %v3486, %v3487
    %v3489 = vand.u32 %v3488, 4294901760
    %3490 = vmatpush1.msra.mxu0 %v3489
    %3491 = vmatprep.subr.mxu0 0.0
    %v3492 = vand.u32 %v414, 4294901760
    %v3493 = vsub.f32 %v414, %v3492
    %v3494 = vand.u32 %v3493, 4294901760
    %v3495 = vsub.f32 %v3493, %v3494
    %v3496 = vand.u32 %v3495, 4294901760
    %3497 = vmatpush1.msra.mxu0 %v3496
    %3498 = vmatprep.subr.mxu0 0.0
    %v3499 = vand.u32 %v415, 4294901760
    %v3500 = vsub.f32 %v415, %v3499
    %v3501 = vand.u32 %v3500, 4294901760
    %v3502 = vsub.f32 %v3500, %v3501
    %v3503 = vand.u32 %v3502, 4294901760
    %3504 = vmatpush1.msra.mxu0 %v3503
    %3505 = vmatprep.subr.mxu0 0.0
    %v3506 = vand.u32 %v416, 4294901760
    %v3507 = vsub.f32 %v416, %v3506
    %v3508 = vand.u32 %v3507, 4294901760
    %v3509 = vsub.f32 %v3507, %v3508
    %v3510 = vand.u32 %v3509, 4294901760
    %3511 = vmatpush1.msra.mxu0 %v3510
    %3512 = vmatprep.subr.mxu0 0.0
    %v3513 = vand.u32 %v417, 4294901760
    %v3514 = vsub.f32 %v417, %v3513
    %v3515 = vand.u32 %v3514, 4294901760
    %v3516 = vsub.f32 %v3514, %v3515
    %v3517 = vand.u32 %v3516, 4294901760
    %3518 = vmatpush1.msra.mxu0 %v3517
    %3519 = vmatprep.subr.mxu0 0.0
    %v3520 = vand.u32 %v418, 4294901760
    %v3521 = vsub.f32 %v418, %v3520
    %v3522 = vand.u32 %v3521, 4294901760
    %v3523 = vsub.f32 %v3521, %v3522
    %v3524 = vand.u32 %v3523, 4294901760
    %3525 = vmatpush1.msra.mxu0 %v3524
    %3526 = vmatprep.subr.mxu0 0.0
    %v3527 = vand.u32 %v419, 4294901760
    %v3528 = vsub.f32 %v419, %v3527
    %v3529 = vand.u32 %v3528, 4294901760
    %v3530 = vsub.f32 %v3528, %v3529
    %v3531 = vand.u32 %v3530, 4294901760
    %3532 = vmatpush1.msra.mxu0 %v3531
    %3533 = vmatprep.subr.mxu0 0.0
    %v3534 = vand.u32 %v420, 4294901760
    %v3535 = vsub.f32 %v420, %v3534
    %v3536 = vand.u32 %v3535, 4294901760
    %v3537 = vsub.f32 %v3535, %v3536
    %v3538 = vand.u32 %v3537, 4294901760
    %3539 = vmatpush1.msra.mxu0 %v3538
    %3540 = vmatprep.subr.mxu0 0.0
    %v3541 = vand.u32 %v421, 4294901760
    %v3542 = vsub.f32 %v421, %v3541
    %v3543 = vand.u32 %v3542, 4294901760
    %v3544 = vsub.f32 %v3542, %v3543
    %v3545 = vand.u32 %v3544, 4294901760
    %3546 = vmatpush1.msra.mxu0 %v3545
    %3547 = vmatprep.subr.mxu0 0.0
    %v3548 = vand.u32 %v422, 4294901760
    %v3549 = vsub.f32 %v422, %v3548
    %v3550 = vand.u32 %v3549, 4294901760
    %v3551 = vsub.f32 %v3549, %v3550
    %v3552 = vand.u32 %v3551, 4294901760
    %3553 = vmatpush1.msra.mxu0 %v3552
    %3554 = vmatprep.subr.mxu0 0.0
    %v3555 = vand.u32 %v423, 4294901760
    %v3556 = vsub.f32 %v423, %v3555
    %v3557 = vand.u32 %v3556, 4294901760
    %v3558 = vsub.f32 %v3556, %v3557
    %v3559 = vand.u32 %v3558, 4294901760
    %3560 = vmatpush1.msra.mxu0 %v3559
    %3561 = vmatprep.subr.mxu0 0.0
    %v3562 = vand.u32 %v424, 4294901760
    %v3563 = vsub.f32 %v424, %v3562
    %v3564 = vand.u32 %v3563, 4294901760
    %v3565 = vsub.f32 %v3563, %v3564
    %v3566 = vand.u32 %v3565, 4294901760
    %3567 = vmatpush1.msra.mxu0 %v3566
    %3568 = vmatprep.subr.mxu0 0.0
    %v3569 = vand.u32 %v425, 4294901760
    %v3570 = vsub.f32 %v425, %v3569
    %v3571 = vand.u32 %v3570, 4294901760
    %v3572 = vsub.f32 %v3570, %v3571
    %v3573 = vand.u32 %v3572, 4294901760
    %3574 = vmatpush1.msra.mxu0 %v3573
    %3575 = vmatprep.subr.mxu0 0.0
    %v3576 = vand.u32 %v426, 4294901760
    %v3577 = vsub.f32 %v426, %v3576
    %v3578 = vand.u32 %v3577, 4294901760
    %v3579 = vsub.f32 %v3577, %v3578
    %v3580 = vand.u32 %v3579, 4294901760
    %3581 = vmatpush1.msra.mxu0 %v3580
    %v3582 = vand.u32 %v456, 4294901760
    %3583 = vmatprep.mubr.f32.mxu0 %v3582
    %v3584 = vand.u32 %v455, 4294901760
    %3585 = vmatmul.mubr.f32.gmra.mrb[0].mxu0 %v3584
    %v3586 = vpop.f32.mrb[0].mxu0
    %v3587 = vadd.f32 %v3340, %v3586
    %v3588 = vpop.f32.mrb[0].mxu0
    %v3589 = vand.u32 %v466, 4294901760
    %3590 = vmatprep.mubr.f32.mxu0 %v3589
    %v3591 = vand.u32 %v465, 4294901760
    %3592 = vmatmul.mubr.f32.gmra.mrb[0].mxu0 %v3591
    %v3593 = vpop.f32.mrb[0].mxu0
    %v3594 = vadd.f32 %v3355, %v3593
    %v3595 = vpop.f32.mrb[0].mxu0
    %3596 = vdwg.mxu0
    %3597 = vmatprep.subr.mxu0 0.0
    %v3598 = vand.u32 %v395, 4294901760
    %v3599 = vsub.f32 %v395, %v3598
    %3600 = vmatpush1.msra.mxu0 %v3599
    %3601 = vmatprep.subr.mxu0 0.0
    %v3602 = vand.u32 %v396, 4294901760
    %v3603 = vsub.f32 %v396, %v3602
    %3604 = vmatpush1.msra.mxu0 %v3603
    %3605 = vmatprep.subr.mxu0 0.0
    %v3606 = vand.u32 %v397, 4294901760
    %v3607 = vsub.f32 %v397, %v3606
    %3608 = vmatpush1.msra.mxu0 %v3607
    %3609 = vmatprep.subr.mxu0 0.0
    %v3610 = vand.u32 %v398, 4294901760
    %v3611 = vsub.f32 %v398, %v3610
    %3612 = vmatpush1.msra.mxu0 %v3611
    %3613 = vmatprep.subr.mxu0 0.0
    %v3614 = vand.u32 %v399, 4294901760
    %v3615 = vsub.f32 %v399, %v3614
    %3616 = vmatpush1.msra.mxu0 %v3615
    %3617 = vmatprep.subr.mxu0 0.0
    %v3618 = vand.u32 %v400, 4294901760
    %v3619 = vsub.f32 %v400, %v3618
    %3620 = vmatpush1.msra.mxu0 %v3619
    %3621 = vmatprep.subr.mxu0 0.0
    %v3622 = vand.u32 %v401, 4294901760
    %v3623 = vsub.f32 %v401, %v3622
    %3624 = vmatpush1.msra.mxu0 %v3623
    %3625 = vmatprep.subr.mxu0 0.0
    %v3626 = vand.u32 %v402, 4294901760
    %v3627 = vsub.f32 %v402, %v3626
    %3628 = vmatpush1.msra.mxu0 %v3627
    %3629 = vmatprep.subr.mxu0 0.0
    %v3630 = vand.u32 %v403, 4294901760
    %v3631 = vsub.f32 %v403, %v3630
    %3632 = vmatpush1.msra.mxu0 %v3631
    %3633 = vmatprep.subr.mxu0 0.0
    %v3634 = vand.u32 %v404, 4294901760
    %v3635 = vsub.f32 %v404, %v3634
    %3636 = vmatpush1.msra.mxu0 %v3635
    %3637 = vmatprep.subr.mxu0 0.0
    %v3638 = vand.u32 %v405, 4294901760
    %v3639 = vsub.f32 %v405, %v3638
    %3640 = vmatpush1.msra.mxu0 %v3639
    %3641 = vmatprep.subr.mxu0 0.0
    %v3642 = vand.u32 %v406, 4294901760
    %v3643 = vsub.f32 %v406, %v3642
    %3644 = vmatpush1.msra.mxu0 %v3643
    %3645 = vmatprep.subr.mxu0 0.0
    %v3646 = vand.u32 %v407, 4294901760
    %v3647 = vsub.f32 %v407, %v3646
    %3648 = vmatpush1.msra.mxu0 %v3647
    %3649 = vmatprep.subr.mxu0 0.0
    %v3650 = vand.u32 %v408, 4294901760
    %v3651 = vsub.f32 %v408, %v3650
    %3652 = vmatpush1.msra.mxu0 %v3651
    %3653 = vmatprep.subr.mxu0 0.0
    %v3654 = vand.u32 %v409, 4294901760
    %v3655 = vsub.f32 %v409, %v3654
    %3656 = vmatpush1.msra.mxu0 %v3655
    %3657 = vmatprep.subr.mxu0 0.0
    %v3658 = vand.u32 %v410, 4294901760
    %v3659 = vsub.f32 %v410, %v3658
    %3660 = vmatpush1.msra.mxu0 %v3659
    %3661 = vmatprep.subr.mxu0 0.0
    %v3662 = vand.u32 %v411, 4294901760
    %v3663 = vsub.f32 %v411, %v3662
    %3664 = vmatpush1.msra.mxu0 %v3663
    %3665 = vmatprep.subr.mxu0 0.0
    %v3666 = vand.u32 %v412, 4294901760
    %v3667 = vsub.f32 %v412, %v3666
    %3668 = vmatpush1.msra.mxu0 %v3667
    %3669 = vmatprep.subr.mxu0 0.0
    %v3670 = vand.u32 %v413, 4294901760
    %v3671 = vsub.f32 %v413, %v3670
    %3672 = vmatpush1.msra.mxu0 %v3671
    %3673 = vmatprep.subr.mxu0 0.0
    %v3674 = vand.u32 %v414, 4294901760
    %v3675 = vsub.f32 %v414, %v3674
    %3676 = vmatpush1.msra.mxu0 %v3675
    %3677 = vmatprep.subr.mxu0 0.0
    %v3678 = vand.u32 %v415, 4294901760
    %v3679 = vsub.f32 %v415, %v3678
    %3680 = vmatpush1.msra.mxu0 %v3679
    %3681 = vmatprep.subr.mxu0 0.0
    %v3682 = vand.u32 %v416, 4294901760
    %v3683 = vsub.f32 %v416, %v3682
    %3684 = vmatpush1.msra.mxu0 %v3683
    %3685 = vmatprep.subr.mxu0 0.0
    %v3686 = vand.u32 %v417, 4294901760
    %v3687 = vsub.f32 %v417, %v3686
    %3688 = vmatpush1.msra.mxu0 %v3687
    %3689 = vmatprep.subr.mxu0 0.0
    %v3690 = vand.u32 %v418, 4294901760
    %v3691 = vsub.f32 %v418, %v3690
    %3692 = vmatpush1.msra.mxu0 %v3691
    %3693 = vmatprep.subr.mxu0 0.0
    %v3694 = vand.u32 %v419, 4294901760
    %v3695 = vsub.f32 %v419, %v3694
    %3696 = vmatpush1.msra.mxu0 %v3695
    %3697 = vmatprep.subr.mxu0 0.0
    %v3698 = vand.u32 %v420, 4294901760
    %v3699 = vsub.f32 %v420, %v3698
    %3700 = vmatpush1.msra.mxu0 %v3699
    %3701 = vmatprep.subr.mxu0 0.0
    %v3702 = vand.u32 %v421, 4294901760
    %v3703 = vsub.f32 %v421, %v3702
    %3704 = vmatpush1.msra.mxu0 %v3703
    %3705 = vmatprep.subr.mxu0 0.0
    %v3706 = vand.u32 %v422, 4294901760
    %v3707 = vsub.f32 %v422, %v3706
    %3708 = vmatpush1.msra.mxu0 %v3707
    %3709 = vmatprep.subr.mxu0 0.0
    %v3710 = vand.u32 %v423, 4294901760
    %v3711 = vsub.f32 %v423, %v3710
    %3712 = vmatpush1.msra.mxu0 %v3711
    %3713 = vmatprep.subr.mxu0 0.0
    %v3714 = vand.u32 %v424, 4294901760
    %v3715 = vsub.f32 %v424, %v3714
    %3716 = vmatpush1.msra.mxu0 %v3715
    %3717 = vmatprep.subr.mxu0 0.0
    %v3718 = vand.u32 %v425, 4294901760
    %v3719 = vsub.f32 %v425, %v3718
    %3720 = vmatpush1.msra.mxu0 %v3719
    %3721 = vmatprep.subr.mxu0 0.0
    %v3722 = vand.u32 %v426, 4294901760
    %v3723 = vsub.f32 %v426, %v3722
    %3724 = vmatpush1.msra.mxu0 %v3723
    %v3725 = vand.u32 %v456, 4294901760
    %v3726 = vsub.f32 %v456, %v3725
    %3727 = vmatprep.mubr.f32.mxu0 %v3726
    %v3728 = vand.u32 %v455, 4294901760
    %v3729 = vsub.f32 %v455, %v3728
    %3730 = vmatmul.mubr.f32.gmra.mrb[0].mxu0 %v3729
    %v3731 = vpop.f32.mrb[0].mxu0
    %v3732 = vadd.f32 %v3587, %v3731
    %v3733 = vpop.f32.mrb[0].mxu0
    %v3734 = vand.u32 %v466, 4294901760
    %v3735 = vsub.f32 %v466, %v3734
    %3736 = vmatprep.mubr.f32.mxu0 %v3735
    %v3737 = vand.u32 %v465, 4294901760
    %v3738 = vsub.f32 %v465, %v3737
    %3739 = vmatmul.mubr.f32.gmra.mrb[0].mxu0 %v3738
    %v3740 = vpop.f32.mrb[0].mxu0
    %v3741 = vadd.f32 %v3594, %v3740
    %v3742 = vpop.f32.mrb[0].mxu0
    %3743 = vdwg.mxu0
    %3744 = vmatprep.subr.mxu0 0.0
    %v3745 = vand.u32 %v395, 4294901760
    %3746 = vmatpush1.msra.mxu0 %v3745
    %3747 = vmatprep.subr.mxu0 0.0
    %v3748 = vand.u32 %v396, 4294901760
    %3749 = vmatpush1.msra.mxu0 %v3748
    %3750 = vmatprep.subr.mxu0 0.0
    %v3751 = vand.u32 %v397, 4294901760
    %3752 = vmatpush1.msra.mxu0 %v3751
    %3753 = vmatprep.subr.mxu0 0.0
    %v3754 = vand.u32 %v398, 4294901760
    %3755 = vmatpush1.msra.mxu0 %v3754
    %3756 = vmatprep.subr.mxu0 0.0
    %v3757 = vand.u32 %v399, 4294901760
    %3758 = vmatpush1.msra.mxu0 %v3757
    %3759 = vmatprep.subr.mxu0 0.0
    %v3760 = vand.u32 %v400, 4294901760
    %3761 = vmatpush1.msra.mxu0 %v3760
    %3762 = vmatprep.subr.mxu0 0.0
    %v3763 = vand.u32 %v401, 4294901760
    %3764 = vmatpush1.msra.mxu0 %v3763
    %3765 = vmatprep.subr.mxu0 0.0
    %v3766 = vand.u32 %v402, 4294901760
    %3767 = vmatpush1.msra.mxu0 %v3766
    %3768 = vmatprep.subr.mxu0 0.0
    %v3769 = vand.u32 %v403, 4294901760
    %3770 = vmatpush1.msra.mxu0 %v3769
    %3771 = vmatprep.subr.mxu0 0.0
    %v3772 = vand.u32 %v404, 4294901760
    %3773 = vmatpush1.msra.mxu0 %v3772
    %3774 = vmatprep.subr.mxu0 0.0
    %v3775 = vand.u32 %v405, 4294901760
    %3776 = vmatpush1.msra.mxu0 %v3775
    %3777 = vmatprep.subr.mxu0 0.0
    %v3778 = vand.u32 %v406, 4294901760
    %3779 = vmatpush1.msra.mxu0 %v3778
    %3780 = vmatprep.subr.mxu0 0.0
    %v3781 = vand.u32 %v407, 4294901760
    %3782 = vmatpush1.msra.mxu0 %v3781
    %3783 = vmatprep.subr.mxu0 0.0
    %v3784 = vand.u32 %v408, 4294901760
    %3785 = vmatpush1.msra.mxu0 %v3784
    %3786 = vmatprep.subr.mxu0 0.0
    %v3787 = vand.u32 %v409, 4294901760
    %3788 = vmatpush1.msra.mxu0 %v3787
    %3789 = vmatprep.subr.mxu0 0.0
    %v3790 = vand.u32 %v410, 4294901760
    %3791 = vmatpush1.msra.mxu0 %v3790
    %3792 = vmatprep.subr.mxu0 0.0
    %v3793 = vand.u32 %v411, 4294901760
    %3794 = vmatpush1.msra.mxu0 %v3793
    %3795 = vmatprep.subr.mxu0 0.0
    %v3796 = vand.u32 %v412, 4294901760
    %3797 = vmatpush1.msra.mxu0 %v3796
    %3798 = vmatprep.subr.mxu0 0.0
    %v3799 = vand.u32 %v413, 4294901760
    %3800 = vmatpush1.msra.mxu0 %v3799
    %3801 = vmatprep.subr.mxu0 0.0
    %v3802 = vand.u32 %v414, 4294901760
    %3803 = vmatpush1.msra.mxu0 %v3802
    %3804 = vmatprep.subr.mxu0 0.0
    %v3805 = vand.u32 %v415, 4294901760
    %3806 = vmatpush1.msra.mxu0 %v3805
    %3807 = vmatprep.subr.mxu0 0.0
    %v3808 = vand.u32 %v416, 4294901760
    %3809 = vmatpush1.msra.mxu0 %v3808
    %3810 = vmatprep.subr.mxu0 0.0
    %v3811 = vand.u32 %v417, 4294901760
    %3812 = vmatpush1.msra.mxu0 %v3811
    %3813 = vmatprep.subr.mxu0 0.0
    %v3814 = vand.u32 %v418, 4294901760
    %3815 = vmatpush1.msra.mxu0 %v3814
    %3816 = vmatprep.subr.mxu0 0.0
    %v3817 = vand.u32 %v419, 4294901760
    %3818 = vmatpush1.msra.mxu0 %v3817
    %3819 = vmatprep.subr.mxu0 0.0
    %v3820 = vand.u32 %v420, 4294901760
    %3821 = vmatpush1.msra.mxu0 %v3820
    %3822 = vmatprep.subr.mxu0 0.0
    %v3823 = vand.u32 %v421, 4294901760
    %3824 = vmatpush1.msra.mxu0 %v3823
    %3825 = vmatprep.subr.mxu0 0.0
    %v3826 = vand.u32 %v422, 4294901760
    %3827 = vmatpush1.msra.mxu0 %v3826
    %3828 = vmatprep.subr.mxu0 0.0
    %v3829 = vand.u32 %v423, 4294901760
    %3830 = vmatpush1.msra.mxu0 %v3829
    %3831 = vmatprep.subr.mxu0 0.0
    %v3832 = vand.u32 %v424, 4294901760
    %3833 = vmatpush1.msra.mxu0 %v3832
    %3834 = vmatprep.subr.mxu0 0.0
    %v3835 = vand.u32 %v425, 4294901760
    %3836 = vmatpush1.msra.mxu0 %v3835
    %3837 = vmatprep.subr.mxu0 0.0
    %v3838 = vand.u32 %v426, 4294901760
    %3839 = vmatpush1.msra.mxu0 %v3838
    %v3840 = vand.u32 %v456, 4294901760
    %v3841 = vsub.f32 %v456, %v3840
    %v3842 = vand.u32 %v3841, 4294901760
    %3843 = vmatprep.mubr.f32.mxu0 %v3842
    %v3844 = vand.u32 %v455, 4294901760
    %v3845 = vsub.f32 %v455, %v3844
    %v3846 = vand.u32 %v3845, 4294901760
    %3847 = vmatmul.mubr.f32.gmra.mrb[0].mxu0 %v3846
    %v3848 = vpop.f32.mrb[0].mxu0
    %v3849 = vadd.f32 %v3732, %v3848
    %v3850 = vpop.f32.mrb[0].mxu0
    %v3851 = vand.u32 %v466, 4294901760
    %v3852 = vsub.f32 %v466, %v3851
    %v3853 = vand.u32 %v3852, 4294901760
    %3854 = vmatprep.mubr.f32.mxu0 %v3853
    %v3855 = vand.u32 %v465, 4294901760
    %v3856 = vsub.f32 %v465, %v3855
    %v3857 = vand.u32 %v3856, 4294901760
    %3858 = vmatmul.mubr.f32.gmra.mrb[0].mxu0 %v3857
    %v3859 = vpop.f32.mrb[0].mxu0
    %v3860 = vadd.f32 %v3741, %v3859
    %v3861 = vpop.f32.mrb[0].mxu0
    %3862 = vdwg.mxu0
    %3863 = vmatprep.subr.mxu0 0.0
    %v3864 = vand.u32 %v395, 4294901760
    %v3865 = vsub.f32 %v395, %v3864
    %v3866 = vand.u32 %v3865, 4294901760
    %3867 = vmatpush1.msra.mxu0 %v3866
    %3868 = vmatprep.subr.mxu0 0.0
    %v3869 = vand.u32 %v396, 4294901760
    %v3870 = vsub.f32 %v396, %v3869
    %v3871 = vand.u32 %v3870, 4294901760
    %3872 = vmatpush1.msra.mxu0 %v3871
    %3873 = vmatprep.subr.mxu0 0.0
    %v3874 = vand.u32 %v397, 4294901760
    %v3875 = vsub.f32 %v397, %v3874
    %v3876 = vand.u32 %v3875, 4294901760
    %3877 = vmatpush1.msra.mxu0 %v3876
    %3878 = vmatprep.subr.mxu0 0.0
    %v3879 = vand.u32 %v398, 4294901760
    %v3880 = vsub.f32 %v398, %v3879
    %v3881 = vand.u32 %v3880, 4294901760
    %3882 = vmatpush1.msra.mxu0 %v3881
    %3883 = vmatprep.subr.mxu0 0.0
    %v3884 = vand.u32 %v399, 4294901760
    %v3885 = vsub.f32 %v399, %v3884
    %v3886 = vand.u32 %v3885, 4294901760
    %3887 = vmatpush1.msra.mxu0 %v3886
    %3888 = vmatprep.subr.mxu0 0.0
    %v3889 = vand.u32 %v400, 4294901760
    %v3890 = vsub.f32 %v400, %v3889
    %v3891 = vand.u32 %v3890, 4294901760
    %3892 = vmatpush1.msra.mxu0 %v3891
    %3893 = vmatprep.subr.mxu0 0.0
    %v3894 = vand.u32 %v401, 4294901760
    %v3895 = vsub.f32 %v401, %v3894
    %v3896 = vand.u32 %v3895, 4294901760
    %3897 = vmatpush1.msra.mxu0 %v3896
    %3898 = vmatprep.subr.mxu0 0.0
    %v3899 = vand.u32 %v402, 4294901760
    %v3900 = vsub.f32 %v402, %v3899
    %v3901 = vand.u32 %v3900, 4294901760
    %3902 = vmatpush1.msra.mxu0 %v3901
    %3903 = vmatprep.subr.mxu0 0.0
    %v3904 = vand.u32 %v403, 4294901760
    %v3905 = vsub.f32 %v403, %v3904
    %v3906 = vand.u32 %v3905, 4294901760
    %3907 = vmatpush1.msra.mxu0 %v3906
    %3908 = vmatprep.subr.mxu0 0.0
    %v3909 = vand.u32 %v404, 4294901760
    %v3910 = vsub.f32 %v404, %v3909
    %v3911 = vand.u32 %v3910, 4294901760
    %3912 = vmatpush1.msra.mxu0 %v3911
    %3913 = vmatprep.subr.mxu0 0.0
    %v3914 = vand.u32 %v405, 4294901760
    %v3915 = vsub.f32 %v405, %v3914
    %v3916 = vand.u32 %v3915, 4294901760
    %3917 = vmatpush1.msra.mxu0 %v3916
    %3918 = vmatprep.subr.mxu0 0.0
    %v3919 = vand.u32 %v406, 4294901760
    %v3920 = vsub.f32 %v406, %v3919
    %v3921 = vand.u32 %v3920, 4294901760
    %3922 = vmatpush1.msra.mxu0 %v3921
    %3923 = vmatprep.subr.mxu0 0.0
    %v3924 = vand.u32 %v407, 4294901760
    %v3925 = vsub.f32 %v407, %v3924
    %v3926 = vand.u32 %v3925, 4294901760
    %3927 = vmatpush1.msra.mxu0 %v3926
    %3928 = vmatprep.subr.mxu0 0.0
    %v3929 = vand.u32 %v408, 4294901760
    %v3930 = vsub.f32 %v408, %v3929
    %v3931 = vand.u32 %v3930, 4294901760
    %3932 = vmatpush1.msra.mxu0 %v3931
    %3933 = vmatprep.subr.mxu0 0.0
    %v3934 = vand.u32 %v409, 4294901760
    %v3935 = vsub.f32 %v409, %v3934
    %v3936 = vand.u32 %v3935, 4294901760
    %3937 = vmatpush1.msra.mxu0 %v3936
    %3938 = vmatprep.subr.mxu0 0.0
    %v3939 = vand.u32 %v410, 4294901760
    %v3940 = vsub.f32 %v410, %v3939
    %v3941 = vand.u32 %v3940, 4294901760
    %3942 = vmatpush1.msra.mxu0 %v3941
    %3943 = vmatprep.subr.mxu0 0.0
    %v3944 = vand.u32 %v411, 4294901760
    %v3945 = vsub.f32 %v411, %v3944
    %v3946 = vand.u32 %v3945, 4294901760
    %3947 = vmatpush1.msra.mxu0 %v3946
    %3948 = vmatprep.subr.mxu0 0.0
    %v3949 = vand.u32 %v412, 4294901760
    %v3950 = vsub.f32 %v412, %v3949
    %v3951 = vand.u32 %v3950, 4294901760
    %3952 = vmatpush1.msra.mxu0 %v3951
    %3953 = vmatprep.subr.mxu0 0.0
    %v3954 = vand.u32 %v413, 4294901760
    %v3955 = vsub.f32 %v413, %v3954
    %v3956 = vand.u32 %v3955, 4294901760
    %3957 = vmatpush1.msra.mxu0 %v3956
    %3958 = vmatprep.subr.mxu0 0.0
    %v3959 = vand.u32 %v414, 4294901760
    %v3960 = vsub.f32 %v414, %v3959
    %v3961 = vand.u32 %v3960, 4294901760
    %3962 = vmatpush1.msra.mxu0 %v3961
    %3963 = vmatprep.subr.mxu0 0.0
    %v3964 = vand.u32 %v415, 4294901760
    %v3965 = vsub.f32 %v415, %v3964
    %v3966 = vand.u32 %v3965, 4294901760
    %3967 = vmatpush1.msra.mxu0 %v3966
    %3968 = vmatprep.subr.mxu0 0.0
    %v3969 = vand.u32 %v416, 4294901760
    %v3970 = vsub.f32 %v416, %v3969
    %v3971 = vand.u32 %v3970, 4294901760
    %3972 = vmatpush1.msra.mxu0 %v3971
    %3973 = vmatprep.subr.mxu0 0.0
    %v3974 = vand.u32 %v417, 4294901760
    %v3975 = vsub.f32 %v417, %v3974
    %v3976 = vand.u32 %v3975, 4294901760
    %3977 = vmatpush1.msra.mxu0 %v3976
    %3978 = vmatprep.subr.mxu0 0.0
    %v3979 = vand.u32 %v418, 4294901760
    %v3980 = vsub.f32 %v418, %v3979
    %v3981 = vand.u32 %v3980, 4294901760
    %3982 = vmatpush1.msra.mxu0 %v3981
    %3983 = vmatprep.subr.mxu0 0.0
    %v3984 = vand.u32 %v419, 4294901760
    %v3985 = vsub.f32 %v419, %v3984
    %v3986 = vand.u32 %v3985, 4294901760
    %3987 = vmatpush1.msra.mxu0 %v3986
    %3988 = vmatprep.subr.mxu0 0.0
    %v3989 = vand.u32 %v420, 4294901760
    %v3990 = vsub.f32 %v420, %v3989
    %v3991 = vand.u32 %v3990, 4294901760
    %3992 = vmatpush1.msra.mxu0 %v3991
    %3993 = vmatprep.subr.mxu0 0.0
    %v3994 = vand.u32 %v421, 4294901760
    %v3995 = vsub.f32 %v421, %v3994
    %v3996 = vand.u32 %v3995, 4294901760
    %3997 = vmatpush1.msra.mxu0 %v3996
    %3998 = vmatprep.subr.mxu0 0.0
    %v3999 = vand.u32 %v422, 4294901760
    %v4000 = vsub.f32 %v422, %v3999
    %v4001 = vand.u32 %v4000, 4294901760
    %4002 = vmatpush1.msra.mxu0 %v4001
    %4003 = vmatprep.subr.mxu0 0.0
    %v4004 = vand.u32 %v423, 4294901760
    %v4005 = vsub.f32 %v423, %v4004
    %v4006 = vand.u32 %v4005, 4294901760
    %4007 = vmatpush1.msra.mxu0 %v4006
    %4008 = vmatprep.subr.mxu0 0.0
    %v4009 = vand.u32 %v424, 4294901760
    %v4010 = vsub.f32 %v424, %v4009
    %v4011 = vand.u32 %v4010, 4294901760
    %4012 = vmatpush1.msra.mxu0 %v4011
    %4013 = vmatprep.subr.mxu0 0.0
    %v4014 = vand.u32 %v425, 4294901760
    %v4015 = vsub.f32 %v425, %v4014
    %v4016 = vand.u32 %v4015, 4294901760
    %4017 = vmatpush1.msra.mxu0 %v4016
    %4018 = vmatprep.subr.mxu0 0.0
    %v4019 = vand.u32 %v426, 4294901760
    %v4020 = vsub.f32 %v426, %v4019
    %v4021 = vand.u32 %v4020, 4294901760
    %4022 = vmatpush1.msra.mxu0 %v4021
    %v4023 = vand.u32 %v456, 4294901760
    %4024 = vmatprep.mubr.f32.mxu0 %v4023
    %v4025 = vand.u32 %v455, 4294901760
    %4026 = vmatmul.mubr.f32.gmra.mrb[0].mxu0 %v4025
    %v4027 = vpop.f32.mrb[0].mxu0
    %v4028 = vadd.f32 %v3849, %v4027
    %v4029 = vpop.f32.mrb[0].mxu0
    %v4030 = vand.u32 %v466, 4294901760
    %4031 = vmatprep.mubr.f32.mxu0 %v4030
    %v4032 = vand.u32 %v465, 4294901760
    %4033 = vmatmul.mubr.f32.gmra.mrb[0].mxu0 %v4032
    %v4034 = vpop.f32.mrb[0].mxu0
    %v4035 = vadd.f32 %v3860, %v4034
    %v4036 = vpop.f32.mrb[0].mxu0
    %4037 = vdwg.mxu0
    %4038 = vmatprep.subr.mxu0 0.0
    %v4039 = vand.u32 %v395, 4294901760
    %4040 = vmatpush1.msra.mxu0 %v4039
    %4041 = vmatprep.subr.mxu0 0.0
    %v4042 = vand.u32 %v396, 4294901760
    %4043 = vmatpush1.msra.mxu0 %v4042
    %4044 = vmatprep.subr.mxu0 0.0
    %v4045 = vand.u32 %v397, 4294901760
    %4046 = vmatpush1.msra.mxu0 %v4045
    %4047 = vmatprep.subr.mxu0 0.0
    %v4048 = vand.u32 %v398, 4294901760
    %4049 = vmatpush1.msra.mxu0 %v4048
    %4050 = vmatprep.subr.mxu0 0.0
    %v4051 = vand.u32 %v399, 4294901760
    %4052 = vmatpush1.msra.mxu0 %v4051
    %4053 = vmatprep.subr.mxu0 0.0
    %v4054 = vand.u32 %v400, 4294901760
    %4055 = vmatpush1.msra.mxu0 %v4054
    %4056 = vmatprep.subr.mxu0 0.0
    %v4057 = vand.u32 %v401, 4294901760
    %4058 = vmatpush1.msra.mxu0 %v4057
    %4059 = vmatprep.subr.mxu0 0.0
    %v4060 = vand.u32 %v402, 4294901760
    %4061 = vmatpush1.msra.mxu0 %v4060
    %4062 = vmatprep.subr.mxu0 0.0
    %v4063 = vand.u32 %v403, 4294901760
    %4064 = vmatpush1.msra.mxu0 %v4063
    %4065 = vmatprep.subr.mxu0 0.0
    %v4066 = vand.u32 %v404, 4294901760
    %4067 = vmatpush1.msra.mxu0 %v4066
    %4068 = vmatprep.subr.mxu0 0.0
    %v4069 = vand.u32 %v405, 4294901760
    %4070 = vmatpush1.msra.mxu0 %v4069
    %4071 = vmatprep.subr.mxu0 0.0
    %v4072 = vand.u32 %v406, 4294901760
    %4073 = vmatpush1.msra.mxu0 %v4072
    %4074 = vmatprep.subr.mxu0 0.0
    %v4075 = vand.u32 %v407, 4294901760
    %4076 = vmatpush1.msra.mxu0 %v4075
    %4077 = vmatprep.subr.mxu0 0.0
    %v4078 = vand.u32 %v408, 4294901760
    %4079 = vmatpush1.msra.mxu0 %v4078
    %4080 = vmatprep.subr.mxu0 0.0
    %v4081 = vand.u32 %v409, 4294901760
    %4082 = vmatpush1.msra.mxu0 %v4081
    %4083 = vmatprep.subr.mxu0 0.0
    %v4084 = vand.u32 %v410, 4294901760
    %4085 = vmatpush1.msra.mxu0 %v4084
    %4086 = vmatprep.subr.mxu0 0.0
    %v4087 = vand.u32 %v411, 4294901760
    %4088 = vmatpush1.msra.mxu0 %v4087
    %4089 = vmatprep.subr.mxu0 0.0
    %v4090 = vand.u32 %v412, 4294901760
    %4091 = vmatpush1.msra.mxu0 %v4090
    %4092 = vmatprep.subr.mxu0 0.0
    %v4093 = vand.u32 %v413, 4294901760
    %4094 = vmatpush1.msra.mxu0 %v4093
    %4095 = vmatprep.subr.mxu0 0.0
    %v4096 = vand.u32 %v414, 4294901760
    %4097 = vmatpush1.msra.mxu0 %v4096
    %4098 = vmatprep.subr.mxu0 0.0
    %v4099 = vand.u32 %v415, 4294901760
    %4100 = vmatpush1.msra.mxu0 %v4099
    %4101 = vmatprep.subr.mxu0 0.0
    %v4102 = vand.u32 %v416, 4294901760
    %4103 = vmatpush1.msra.mxu0 %v4102
    %4104 = vmatprep.subr.mxu0 0.0
    %v4105 = vand.u32 %v417, 4294901760
    %4106 = vmatpush1.msra.mxu0 %v4105
    %4107 = vmatprep.subr.mxu0 0.0
    %v4108 = vand.u32 %v418, 4294901760
    %4109 = vmatpush1.msra.mxu0 %v4108
    %4110 = vmatprep.subr.mxu0 0.0
    %v4111 = vand.u32 %v419, 4294901760
    %4112 = vmatpush1.msra.mxu0 %v4111
    %4113 = vmatprep.subr.mxu0 0.0
    %v4114 = vand.u32 %v420, 4294901760
    %4115 = vmatpush1.msra.mxu0 %v4114
    %4116 = vmatprep.subr.mxu0 0.0
    %v4117 = vand.u32 %v421, 4294901760
    %4118 = vmatpush1.msra.mxu0 %v4117
    %4119 = vmatprep.subr.mxu0 0.0
    %v4120 = vand.u32 %v422, 4294901760
    %4121 = vmatpush1.msra.mxu0 %v4120
    %4122 = vmatprep.subr.mxu0 0.0
    %v4123 = vand.u32 %v423, 4294901760
    %4124 = vmatpush1.msra.mxu0 %v4123
    %4125 = vmatprep.subr.mxu0 0.0
    %v4126 = vand.u32 %v424, 4294901760
    %4127 = vmatpush1.msra.mxu0 %v4126
    %4128 = vmatprep.subr.mxu0 0.0
    %v4129 = vand.u32 %v425, 4294901760
    %4130 = vmatpush1.msra.mxu0 %v4129
    %4131 = vmatprep.subr.mxu0 0.0
    %v4132 = vand.u32 %v426, 4294901760
    %4133 = vmatpush1.msra.mxu0 %v4132
    %v4134 = vand.u32 %v456, 4294901760
    %4135 = vmatprep.mubr.f32.mxu0 %v4134
    %v4136 = vand.u32 %v455, 4294901760
    %4137 = vmatmul.mubr.f32.gmra.mrb[0].mxu0 %v4136
    %v4138 = vpop.f32.mrb[0].mxu0
    %v4139 = vadd.f32 %v4028, %v4138
    %v4140 = vpop.f32.mrb[0].mxu0
    %v4141 = vand.u32 %v466, 4294901760
    %4142 = vmatprep.mubr.f32.mxu0 %v4141
    %v4143 = vand.u32 %v465, 4294901760
    %4144 = vmatmul.mubr.f32.gmra.mrb[0].mxu0 %v4143
    %v4145 = vpop.f32.mrb[0].mxu0
    %v4146 = vadd.f32 %v4035, %v4145
    %v4147 = vpop.f32.mrb[0].mxu0
    %4148 = vdwg.mxu0
    %4149 = vmatprep.subr.mxu0 0.0
    %v4150 = vand.u32 %v427, 4294901760
    %4151 = vmatpush1.msra.mxu0 %v4150
    %4152 = vmatprep.subr.mxu0 0.0
    %v4153 = vand.u32 %v428, 4294901760
    %4154 = vmatpush1.msra.mxu0 %v4153
    %4155 = vmatprep.subr.mxu0 0.0
    %v4156 = vand.u32 %v429, 4294901760
    %4157 = vmatpush1.msra.mxu0 %v4156
    %4158 = vmatprep.subr.mxu0 0.0
    %v4159 = vand.u32 %v430, 4294901760
    %4160 = vmatpush1.msra.mxu0 %v4159
    %4161 = vmatprep.subr.mxu0 0.0
    %v4162 = vand.u32 %v431, 4294901760
    %4163 = vmatpush1.msra.mxu0 %v4162
    %4164 = vmatprep.subr.mxu0 0.0
    %v4165 = vand.u32 %v432, 4294901760
    %4166 = vmatpush1.msra.mxu0 %v4165
    %4167 = vmatprep.subr.mxu0 0.0
    %v4168 = vand.u32 %v433, 4294901760
    %4169 = vmatpush1.msra.mxu0 %v4168
    %4170 = vmatprep.subr.mxu0 0.0
    %v4171 = vand.u32 %v434, 4294901760
    %4172 = vmatpush1.msra.mxu0 %v4171
    %4173 = vmatprep.subr.mxu0 0.0
    %v4174 = vand.u32 %v435, 4294901760
    %4175 = vmatpush1.msra.mxu0 %v4174
    %4176 = vmatprep.subr.mxu0 0.0
    %v4177 = vand.u32 %v436, 4294901760
    %4178 = vmatpush1.msra.mxu0 %v4177
    %4179 = vmatprep.subr.mxu0 0.0
    %v4180 = vand.u32 %v437, 4294901760
    %4181 = vmatpush1.msra.mxu0 %v4180
    %4182 = vmatprep.subr.mxu0 0.0
    %v4183 = vand.u32 %v438, 4294901760
    %4184 = vmatpush1.msra.mxu0 %v4183
    %4185 = vmatprep.subr.mxu0 0.0
    %v4186 = vand.u32 %v439, 4294901760
    %4187 = vmatpush1.msra.mxu0 %v4186
    %4188 = vmatprep.subr.mxu0 0.0
    %v4189 = vand.u32 %v440, 4294901760
    %4190 = vmatpush1.msra.mxu0 %v4189
    %4191 = vmatprep.subr.mxu0 0.0
    %v4192 = vand.u32 %v441, 4294901760
    %4193 = vmatpush1.msra.mxu0 %v4192
    %4194 = vmatprep.subr.mxu0 0.0
    %v4195 = vand.u32 %v442, 4294901760
    %4196 = vmatpush1.msra.mxu0 %v4195
    %4197 = vmatprep.subr.mxu0 0.0
    %v4198 = vand.u32 %v443, 4294901760
    %4199 = vmatpush1.msra.mxu0 %v4198
    %4200 = vmatprep.subr.mxu0 0.0
    %v4201 = vand.u32 %v444, 4294901760
    %4202 = vmatpush1.msra.mxu0 %v4201
    %4203 = vmatprep.subr.mxu0 0.0
    %v4204 = vand.u32 %v445, 4294901760
    %4205 = vmatpush1.msra.mxu0 %v4204
    %4206 = vmatprep.subr.mxu0 0.0
    %v4207 = vand.u32 %v446, 4294901760
    %4208 = vmatpush1.msra.mxu0 %v4207
    %4209 = vmatprep.subr.mxu0 0.0
    %v4210 = vand.u32 %v447, 4294901760
    %4211 = vmatpush1.msra.mxu0 %v4210
    %4212 = vmatprep.subr.mxu0 0.0
    %v4213 = vand.u32 %v448, 4294901760
    %4214 = vmatpush1.msra.mxu0 %v4213
    %4215 = vmatprep.subr.mxu0 0.0
    %4216 = vmatpush1.msra.mxu0 0.0
    %4217 = vmatprep.subr.mxu0 0.0
    %4218 = vmatpush1.msra.mxu0 0.0
    %4219 = vmatprep.subr.mxu0 0.0
    %4220 = vmatpush1.msra.mxu0 0.0
    %4221 = vmatprep.subr.mxu0 0.0
    %4222 = vmatpush1.msra.mxu0 0.0
    %4223 = vmatprep.subr.mxu0 0.0
    %4224 = vmatpush1.msra.mxu0 0.0
    %4225 = vmatprep.subr.mxu0 0.0
    %4226 = vmatpush1.msra.mxu0 0.0
    %4227 = vmatprep.subr.mxu0 0.0
    %4228 = vmatpush1.msra.mxu0 0.0
    %4229 = vmatprep.subr.mxu0 0.0
    %4230 = vmatpush1.msra.mxu0 0.0
    %4231 = vmatprep.subr.mxu0 0.0
    %4232 = vmatpush1.msra.mxu0 0.0
    %4233 = vmatprep.subr.mxu0 0.0
    %4234 = vmatpush1.msra.mxu0 0.0
    %v4235 = vand.u32 %v472, 4294901760
    %v4236 = vsub.f32 %v472, %v4235
    %v4237 = vand.u32 %v4236, 4294901760
    %v4238 = vsub.f32 %v4236, %v4237
    %v4239 = vand.u32 %v4238, 4294901760
    %4240 = vmatprep.mubr.f32.mxu0 %v4239
    %v4241 = vand.u32 %v457, 4294901760
    %v4242 = vsub.f32 %v457, %v4241
    %v4243 = vand.u32 %v4242, 4294901760
    %v4244 = vsub.f32 %v4242, %v4243
    %v4245 = vand.u32 %v4244, 4294901760
    %4246 = vmatmul.mubr.f32.gmra.mrb[0].mxu0 %v4245
    %v4247 = vpop.f32.mrb[0].mxu0
    %v4248 = vadd.f32 %v4139, %v4247
    %v4249 = vpop.f32.mrb[0].mxu0
    %v4250 = vand.u32 %v475, 4294901760
    %v4251 = vsub.f32 %v475, %v4250
    %v4252 = vand.u32 %v4251, 4294901760
    %v4253 = vsub.f32 %v4251, %v4252
    %v4254 = vand.u32 %v4253, 4294901760
    %4255 = vmatprep.mubr.f32.mxu0 %v4254
    %v4256 = vand.u32 %v467, 4294901760
    %v4257 = vsub.f32 %v467, %v4256
    %v4258 = vand.u32 %v4257, 4294901760
    %v4259 = vsub.f32 %v4257, %v4258
    %v4260 = vand.u32 %v4259, 4294901760
    %4261 = vmatmul.mubr.f32.gmra.mrb[0].mxu0 %v4260
    %v4262 = vpop.f32.mrb[0].mxu0
    %v4263 = vadd.f32 %v4146, %v4262
    %v4264 = vpop.f32.mrb[0].mxu0
    %4265 = vdwg.mxu0
    %4266 = vmatprep.subr.mxu0 0.0
    %v4267 = vand.u32 %v427, 4294901760
    %v4268 = vsub.f32 %v427, %v4267
    %v4269 = vand.u32 %v4268, 4294901760
    %v4270 = vsub.f32 %v4268, %v4269
    %v4271 = vand.u32 %v4270, 4294901760
    %4272 = vmatpush1.msra.mxu0 %v4271
    %4273 = vmatprep.subr.mxu0 0.0
    %v4274 = vand.u32 %v428, 4294901760
    %v4275 = vsub.f32 %v428, %v4274
    %v4276 = vand.u32 %v4275, 4294901760
    %v4277 = vsub.f32 %v4275, %v4276
    %v4278 = vand.u32 %v4277, 4294901760
    %4279 = vmatpush1.msra.mxu0 %v4278
    %4280 = vmatprep.subr.mxu0 0.0
    %v4281 = vand.u32 %v429, 4294901760
    %v4282 = vsub.f32 %v429, %v4281
    %v4283 = vand.u32 %v4282, 4294901760
    %v4284 = vsub.f32 %v4282, %v4283
    %v4285 = vand.u32 %v4284, 4294901760
    %4286 = vmatpush1.msra.mxu0 %v4285
    %4287 = vmatprep.subr.mxu0 0.0
    %v4288 = vand.u32 %v430, 4294901760
    %v4289 = vsub.f32 %v430, %v4288
    %v4290 = vand.u32 %v4289, 4294901760
    %v4291 = vsub.f32 %v4289, %v4290
    %v4292 = vand.u32 %v4291, 4294901760
    %4293 = vmatpush1.msra.mxu0 %v4292
    %4294 = vmatprep.subr.mxu0 0.0
    %v4295 = vand.u32 %v431, 4294901760
    %v4296 = vsub.f32 %v431, %v4295
    %v4297 = vand.u32 %v4296, 4294901760
    %v4298 = vsub.f32 %v4296, %v4297
    %v4299 = vand.u32 %v4298, 4294901760
    %4300 = vmatpush1.msra.mxu0 %v4299
    %4301 = vmatprep.subr.mxu0 0.0
    %v4302 = vand.u32 %v432, 4294901760
    %v4303 = vsub.f32 %v432, %v4302
    %v4304 = vand.u32 %v4303, 4294901760
    %v4305 = vsub.f32 %v4303, %v4304
    %v4306 = vand.u32 %v4305, 4294901760
    %4307 = vmatpush1.msra.mxu0 %v4306
    %4308 = vmatprep.subr.mxu0 0.0
    %v4309 = vand.u32 %v433, 4294901760
    %v4310 = vsub.f32 %v433, %v4309
    %v4311 = vand.u32 %v4310, 4294901760
    %v4312 = vsub.f32 %v4310, %v4311
    %v4313 = vand.u32 %v4312, 4294901760
    %4314 = vmatpush1.msra.mxu0 %v4313
    %4315 = vmatprep.subr.mxu0 0.0
    %v4316 = vand.u32 %v434, 4294901760
    %v4317 = vsub.f32 %v434, %v4316
    %v4318 = vand.u32 %v4317, 4294901760
    %v4319 = vsub.f32 %v4317, %v4318
    %v4320 = vand.u32 %v4319, 4294901760
    %4321 = vmatpush1.msra.mxu0 %v4320
    %4322 = vmatprep.subr.mxu0 0.0
    %v4323 = vand.u32 %v435, 4294901760
    %v4324 = vsub.f32 %v435, %v4323
    %v4325 = vand.u32 %v4324, 4294901760
    %v4326 = vsub.f32 %v4324, %v4325
    %v4327 = vand.u32 %v4326, 4294901760
    %4328 = vmatpush1.msra.mxu0 %v4327
    %4329 = vmatprep.subr.mxu0 0.0
    %v4330 = vand.u32 %v436, 4294901760
    %v4331 = vsub.f32 %v436, %v4330
    %v4332 = vand.u32 %v4331, 4294901760
    %v4333 = vsub.f32 %v4331, %v4332
    %v4334 = vand.u32 %v4333, 4294901760
    %4335 = vmatpush1.msra.mxu0 %v4334
    %4336 = vmatprep.subr.mxu0 0.0
    %v4337 = vand.u32 %v437, 4294901760
    %v4338 = vsub.f32 %v437, %v4337
    %v4339 = vand.u32 %v4338, 4294901760
    %v4340 = vsub.f32 %v4338, %v4339
    %v4341 = vand.u32 %v4340, 4294901760
    %4342 = vmatpush1.msra.mxu0 %v4341
    %4343 = vmatprep.subr.mxu0 0.0
    %v4344 = vand.u32 %v438, 4294901760
    %v4345 = vsub.f32 %v438, %v4344
    %v4346 = vand.u32 %v4345, 4294901760
    %v4347 = vsub.f32 %v4345, %v4346
    %v4348 = vand.u32 %v4347, 4294901760
    %4349 = vmatpush1.msra.mxu0 %v4348
    %4350 = vmatprep.subr.mxu0 0.0
    %v4351 = vand.u32 %v439, 4294901760
    %v4352 = vsub.f32 %v439, %v4351
    %v4353 = vand.u32 %v4352, 4294901760
    %v4354 = vsub.f32 %v4352, %v4353
    %v4355 = vand.u32 %v4354, 4294901760
    %4356 = vmatpush1.msra.mxu0 %v4355
    %4357 = vmatprep.subr.mxu0 0.0
    %v4358 = vand.u32 %v440, 4294901760
    %v4359 = vsub.f32 %v440, %v4358
    %v4360 = vand.u32 %v4359, 4294901760
    %v4361 = vsub.f32 %v4359, %v4360
    %v4362 = vand.u32 %v4361, 4294901760
    %4363 = vmatpush1.msra.mxu0 %v4362
    %4364 = vmatprep.subr.mxu0 0.0
    %v4365 = vand.u32 %v441, 4294901760
    %v4366 = vsub.f32 %v441, %v4365
    %v4367 = vand.u32 %v4366, 4294901760
    %v4368 = vsub.f32 %v4366, %v4367
    %v4369 = vand.u32 %v4368, 4294901760
    %4370 = vmatpush1.msra.mxu0 %v4369
    %4371 = vmatprep.subr.mxu0 0.0
    %v4372 = vand.u32 %v442, 4294901760
    %v4373 = vsub.f32 %v442, %v4372
    %v4374 = vand.u32 %v4373, 4294901760
    %v4375 = vsub.f32 %v4373, %v4374
    %v4376 = vand.u32 %v4375, 4294901760
    %4377 = vmatpush1.msra.mxu0 %v4376
    %4378 = vmatprep.subr.mxu0 0.0
    %v4379 = vand.u32 %v443, 4294901760
    %v4380 = vsub.f32 %v443, %v4379
    %v4381 = vand.u32 %v4380, 4294901760
    %v4382 = vsub.f32 %v4380, %v4381
    %v4383 = vand.u32 %v4382, 4294901760
    %4384 = vmatpush1.msra.mxu0 %v4383
    %4385 = vmatprep.subr.mxu0 0.0
    %v4386 = vand.u32 %v444, 4294901760
    %v4387 = vsub.f32 %v444, %v4386
    %v4388 = vand.u32 %v4387, 4294901760
    %v4389 = vsub.f32 %v4387, %v4388
    %v4390 = vand.u32 %v4389, 4294901760
    %4391 = vmatpush1.msra.mxu0 %v4390
    %4392 = vmatprep.subr.mxu0 0.0
    %v4393 = vand.u32 %v445, 4294901760
    %v4394 = vsub.f32 %v445, %v4393
    %v4395 = vand.u32 %v4394, 4294901760
    %v4396 = vsub.f32 %v4394, %v4395
    %v4397 = vand.u32 %v4396, 4294901760
    %4398 = vmatpush1.msra.mxu0 %v4397
    %4399 = vmatprep.subr.mxu0 0.0
    %v4400 = vand.u32 %v446, 4294901760
    %v4401 = vsub.f32 %v446, %v4400
    %v4402 = vand.u32 %v4401, 4294901760
    %v4403 = vsub.f32 %v4401, %v4402
    %v4404 = vand.u32 %v4403, 4294901760
    %4405 = vmatpush1.msra.mxu0 %v4404
    %4406 = vmatprep.subr.mxu0 0.0
    %v4407 = vand.u32 %v447, 4294901760
    %v4408 = vsub.f32 %v447, %v4407
    %v4409 = vand.u32 %v4408, 4294901760
    %v4410 = vsub.f32 %v4408, %v4409
    %v4411 = vand.u32 %v4410, 4294901760
    %4412 = vmatpush1.msra.mxu0 %v4411
    %4413 = vmatprep.subr.mxu0 0.0
    %v4414 = vand.u32 %v448, 4294901760
    %v4415 = vsub.f32 %v448, %v4414
    %v4416 = vand.u32 %v4415, 4294901760
    %v4417 = vsub.f32 %v4415, %v4416
    %v4418 = vand.u32 %v4417, 4294901760
    %4419 = vmatpush1.msra.mxu0 %v4418
    %4420 = vmatprep.subr.mxu0 0.0
    %4421 = vmatpush1.msra.mxu0 0.0
    %4422 = vmatprep.subr.mxu0 0.0
    %4423 = vmatpush1.msra.mxu0 0.0
    %4424 = vmatprep.subr.mxu0 0.0
    %4425 = vmatpush1.msra.mxu0 0.0
    %4426 = vmatprep.subr.mxu0 0.0
    %4427 = vmatpush1.msra.mxu0 0.0
    %4428 = vmatprep.subr.mxu0 0.0
    %4429 = vmatpush1.msra.mxu0 0.0
    %4430 = vmatprep.subr.mxu0 0.0
    %4431 = vmatpush1.msra.mxu0 0.0
    %4432 = vmatprep.subr.mxu0 0.0
    %4433 = vmatpush1.msra.mxu0 0.0
    %4434 = vmatprep.subr.mxu0 0.0
    %4435 = vmatpush1.msra.mxu0 0.0
    %4436 = vmatprep.subr.mxu0 0.0
    %4437 = vmatpush1.msra.mxu0 0.0
    %4438 = vmatprep.subr.mxu0 0.0
    %4439 = vmatpush1.msra.mxu0 0.0
    %v4440 = vand.u32 %v472, 4294901760
    %4441 = vmatprep.mubr.f32.mxu0 %v4440
    %v4442 = vand.u32 %v457, 4294901760
    %4443 = vmatmul.mubr.f32.gmra.mrb[0].mxu0 %v4442
    %v4444 = vpop.f32.mrb[0].mxu0
    %v4445 = vadd.f32 %v4248, %v4444
    %v4446 = vpop.f32.mrb[0].mxu0
    %v4447 = vand.u32 %v475, 4294901760
    %4448 = vmatprep.mubr.f32.mxu0 %v4447
    %v4449 = vand.u32 %v467, 4294901760
    %4450 = vmatmul.mubr.f32.gmra.mrb[0].mxu0 %v4449
    %v4451 = vpop.f32.mrb[0].mxu0
    %v4452 = vadd.f32 %v4263, %v4451
    %v4453 = vpop.f32.mrb[0].mxu0
    %4454 = vdwg.mxu0
    %4455 = vmatprep.subr.mxu0 0.0
    %v4456 = vand.u32 %v427, 4294901760
    %v4457 = vsub.f32 %v427, %v4456
    %4458 = vmatpush1.msra.mxu0 %v4457
    %4459 = vmatprep.subr.mxu0 0.0
    %v4460 = vand.u32 %v428, 4294901760
    %v4461 = vsub.f32 %v428, %v4460
    %4462 = vmatpush1.msra.mxu0 %v4461
    %4463 = vmatprep.subr.mxu0 0.0
    %v4464 = vand.u32 %v429, 4294901760
    %v4465 = vsub.f32 %v429, %v4464
    %4466 = vmatpush1.msra.mxu0 %v4465
    %4467 = vmatprep.subr.mxu0 0.0
    %v4468 = vand.u32 %v430, 4294901760
    %v4469 = vsub.f32 %v430, %v4468
    %4470 = vmatpush1.msra.mxu0 %v4469
    %4471 = vmatprep.subr.mxu0 0.0
    %v4472 = vand.u32 %v431, 4294901760
    %v4473 = vsub.f32 %v431, %v4472
    %4474 = vmatpush1.msra.mxu0 %v4473
    %4475 = vmatprep.subr.mxu0 0.0
    %v4476 = vand.u32 %v432, 4294901760
    %v4477 = vsub.f32 %v432, %v4476
    %4478 = vmatpush1.msra.mxu0 %v4477
    %4479 = vmatprep.subr.mxu0 0.0
    %v4480 = vand.u32 %v433, 4294901760
    %v4481 = vsub.f32 %v433, %v4480
    %4482 = vmatpush1.msra.mxu0 %v4481
    %4483 = vmatprep.subr.mxu0 0.0
    %v4484 = vand.u32 %v434, 4294901760
    %v4485 = vsub.f32 %v434, %v4484
    %4486 = vmatpush1.msra.mxu0 %v4485
    %4487 = vmatprep.subr.mxu0 0.0
    %v4488 = vand.u32 %v435, 4294901760
    %v4489 = vsub.f32 %v435, %v4488
    %4490 = vmatpush1.msra.mxu0 %v4489
    %4491 = vmatprep.subr.mxu0 0.0
    %v4492 = vand.u32 %v436, 4294901760
    %v4493 = vsub.f32 %v436, %v4492
    %4494 = vmatpush1.msra.mxu0 %v4493
    %4495 = vmatprep.subr.mxu0 0.0
    %v4496 = vand.u32 %v437, 4294901760
    %v4497 = vsub.f32 %v437, %v4496
    %4498 = vmatpush1.msra.mxu0 %v4497
    %4499 = vmatprep.subr.mxu0 0.0
    %v4500 = vand.u32 %v438, 4294901760
    %v4501 = vsub.f32 %v438, %v4500
    %4502 = vmatpush1.msra.mxu0 %v4501
    %4503 = vmatprep.subr.mxu0 0.0
    %v4504 = vand.u32 %v439, 4294901760
    %v4505 = vsub.f32 %v439, %v4504
    %4506 = vmatpush1.msra.mxu0 %v4505
    %4507 = vmatprep.subr.mxu0 0.0
    %v4508 = vand.u32 %v440, 4294901760
    %v4509 = vsub.f32 %v440, %v4508
    %4510 = vmatpush1.msra.mxu0 %v4509
    %4511 = vmatprep.subr.mxu0 0.0
    %v4512 = vand.u32 %v441, 4294901760
    %v4513 = vsub.f32 %v441, %v4512
    %4514 = vmatpush1.msra.mxu0 %v4513
    %4515 = vmatprep.subr.mxu0 0.0
    %v4516 = vand.u32 %v442, 4294901760
    %v4517 = vsub.f32 %v442, %v4516
    %4518 = vmatpush1.msra.mxu0 %v4517
    %4519 = vmatprep.subr.mxu0 0.0
    %v4520 = vand.u32 %v443, 4294901760
    %v4521 = vsub.f32 %v443, %v4520
    %4522 = vmatpush1.msra.mxu0 %v4521
    %4523 = vmatprep.subr.mxu0 0.0
    %v4524 = vand.u32 %v444, 4294901760
    %v4525 = vsub.f32 %v444, %v4524
    %4526 = vmatpush1.msra.mxu0 %v4525
    %4527 = vmatprep.subr.mxu0 0.0
    %v4528 = vand.u32 %v445, 4294901760
    %v4529 = vsub.f32 %v445, %v4528
    %4530 = vmatpush1.msra.mxu0 %v4529
    %4531 = vmatprep.subr.mxu0 0.0
    %v4532 = vand.u32 %v446, 4294901760
    %v4533 = vsub.f32 %v446, %v4532
    %4534 = vmatpush1.msra.mxu0 %v4533
    %4535 = vmatprep.subr.mxu0 0.0
    %v4536 = vand.u32 %v447, 4294901760
    %v4537 = vsub.f32 %v447, %v4536
    %4538 = vmatpush1.msra.mxu0 %v4537
    %4539 = vmatprep.subr.mxu0 0.0
    %v4540 = vand.u32 %v448, 4294901760
    %v4541 = vsub.f32 %v448, %v4540
    %4542 = vmatpush1.msra.mxu0 %v4541
    %4543 = vmatprep.subr.mxu0 0.0
    %4544 = vmatpush1.msra.mxu0 0.0
    %4545 = vmatprep.subr.mxu0 0.0
    %4546 = vmatpush1.msra.mxu0 0.0
    %4547 = vmatprep.subr.mxu0 0.0
    %4548 = vmatpush1.msra.mxu0 0.0
    %4549 = vmatprep.subr.mxu0 0.0
    %4550 = vmatpush1.msra.mxu0 0.0
    %4551 = vmatprep.subr.mxu0 0.0
    %4552 = vmatpush1.msra.mxu0 0.0
    %4553 = vmatprep.subr.mxu0 0.0
    %4554 = vmatpush1.msra.mxu0 0.0
    %4555 = vmatprep.subr.mxu0 0.0
    %4556 = vmatpush1.msra.mxu0 0.0
    %4557 = vmatprep.subr.mxu0 0.0
    %4558 = vmatpush1.msra.mxu0 0.0
    %4559 = vmatprep.subr.mxu0 0.0
    %4560 = vmatpush1.msra.mxu0 0.0
    %4561 = vmatprep.subr.mxu0 0.0
    %4562 = vmatpush1.msra.mxu0 0.0
    %v4563 = vand.u32 %v472, 4294901760
    %v4564 = vsub.f32 %v472, %v4563
    %4565 = vmatprep.mubr.f32.mxu0 %v4564
    %v4566 = vand.u32 %v457, 4294901760
    %v4567 = vsub.f32 %v457, %v4566
    %4568 = vmatmul.mubr.f32.gmra.mrb[0].mxu0 %v4567
    %v4569 = vpop.f32.mrb[0].mxu0
    %v4570 = vadd.f32 %v4445, %v4569
    %v4571 = vpop.f32.mrb[0].mxu0
    %v4572 = vand.u32 %v475, 4294901760
    %v4573 = vsub.f32 %v475, %v4572
    %4574 = vmatprep.mubr.f32.mxu0 %v4573
    %v4575 = vand.u32 %v467, 4294901760
    %v4576 = vsub.f32 %v467, %v4575
    %4577 = vmatmul.mubr.f32.gmra.mrb[0].mxu0 %v4576
    %v4578 = vpop.f32.mrb[0].mxu0
    %v4579 = vadd.f32 %v4452, %v4578
    %v4580 = vpop.f32.mrb[0].mxu0
    %4581 = vdwg.mxu0
    %4582 = vmatprep.subr.mxu0 0.0
    %v4583 = vand.u32 %v427, 4294901760
    %4584 = vmatpush1.msra.mxu0 %v4583
    %4585 = vmatprep.subr.mxu0 0.0
    %v4586 = vand.u32 %v428, 4294901760
    %4587 = vmatpush1.msra.mxu0 %v4586
    %4588 = vmatprep.subr.mxu0 0.0
    %v4589 = vand.u32 %v429, 4294901760
    %4590 = vmatpush1.msra.mxu0 %v4589
    %4591 = vmatprep.subr.mxu0 0.0
    %v4592 = vand.u32 %v430, 4294901760
    %4593 = vmatpush1.msra.mxu0 %v4592
    %4594 = vmatprep.subr.mxu0 0.0
    %v4595 = vand.u32 %v431, 4294901760
    %4596 = vmatpush1.msra.mxu0 %v4595
    %4597 = vmatprep.subr.mxu0 0.0
    %v4598 = vand.u32 %v432, 4294901760
    %4599 = vmatpush1.msra.mxu0 %v4598
    %4600 = vmatprep.subr.mxu0 0.0
    %v4601 = vand.u32 %v433, 4294901760
    %4602 = vmatpush1.msra.mxu0 %v4601
    %4603 = vmatprep.subr.mxu0 0.0
    %v4604 = vand.u32 %v434, 4294901760
    %4605 = vmatpush1.msra.mxu0 %v4604
    %4606 = vmatprep.subr.mxu0 0.0
    %v4607 = vand.u32 %v435, 4294901760
    %4608 = vmatpush1.msra.mxu0 %v4607
    %4609 = vmatprep.subr.mxu0 0.0
    %v4610 = vand.u32 %v436, 4294901760
    %4611 = vmatpush1.msra.mxu0 %v4610
    %4612 = vmatprep.subr.mxu0 0.0
    %v4613 = vand.u32 %v437, 4294901760
    %4614 = vmatpush1.msra.mxu0 %v4613
    %4615 = vmatprep.subr.mxu0 0.0
    %v4616 = vand.u32 %v438, 4294901760
    %4617 = vmatpush1.msra.mxu0 %v4616
    %4618 = vmatprep.subr.mxu0 0.0
    %v4619 = vand.u32 %v439, 4294901760
    %4620 = vmatpush1.msra.mxu0 %v4619
    %4621 = vmatprep.subr.mxu0 0.0
    %v4622 = vand.u32 %v440, 4294901760
    %4623 = vmatpush1.msra.mxu0 %v4622
    %4624 = vmatprep.subr.mxu0 0.0
    %v4625 = vand.u32 %v441, 4294901760
    %4626 = vmatpush1.msra.mxu0 %v4625
    %4627 = vmatprep.subr.mxu0 0.0
    %v4628 = vand.u32 %v442, 4294901760
    %4629 = vmatpush1.msra.mxu0 %v4628
    %4630 = vmatprep.subr.mxu0 0.0
    %v4631 = vand.u32 %v443, 4294901760
    %4632 = vmatpush1.msra.mxu0 %v4631
    %4633 = vmatprep.subr.mxu0 0.0
    %v4634 = vand.u32 %v444, 4294901760
    %4635 = vmatpush1.msra.mxu0 %v4634
    %4636 = vmatprep.subr.mxu0 0.0
    %v4637 = vand.u32 %v445, 4294901760
    %4638 = vmatpush1.msra.mxu0 %v4637
    %4639 = vmatprep.subr.mxu0 0.0
    %v4640 = vand.u32 %v446, 4294901760
    %4641 = vmatpush1.msra.mxu0 %v4640
    %4642 = vmatprep.subr.mxu0 0.0
    %v4643 = vand.u32 %v447, 4294901760
    %4644 = vmatpush1.msra.mxu0 %v4643
    %4645 = vmatprep.subr.mxu0 0.0
    %v4646 = vand.u32 %v448, 4294901760
    %4647 = vmatpush1.msra.mxu0 %v4646
    %4648 = vmatprep.subr.mxu0 0.0
    %4649 = vmatpush1.msra.mxu0 0.0
    %4650 = vmatprep.subr.mxu0 0.0
    %4651 = vmatpush1.msra.mxu0 0.0
    %4652 = vmatprep.subr.mxu0 0.0
    %4653 = vmatpush1.msra.mxu0 0.0
    %4654 = vmatprep.subr.mxu0 0.0
    %4655 = vmatpush1.msra.mxu0 0.0
    %4656 = vmatprep.subr.mxu0 0.0
    %4657 = vmatpush1.msra.mxu0 0.0
    %4658 = vmatprep.subr.mxu0 0.0
    %4659 = vmatpush1.msra.mxu0 0.0
    %4660 = vmatprep.subr.mxu0 0.0
    %4661 = vmatpush1.msra.mxu0 0.0
    %4662 = vmatprep.subr.mxu0 0.0
    %4663 = vmatpush1.msra.mxu0 0.0
    %4664 = vmatprep.subr.mxu0 0.0
    %4665 = vmatpush1.msra.mxu0 0.0
    %4666 = vmatprep.subr.mxu0 0.0
    %4667 = vmatpush1.msra.mxu0 0.0
    %v4668 = vand.u32 %v472, 4294901760
    %v4669 = vsub.f32 %v472, %v4668
    %v4670 = vand.u32 %v4669, 4294901760
    %4671 = vmatprep.mubr.f32.mxu0 %v4670
    %v4672 = vand.u32 %v457, 4294901760
    %v4673 = vsub.f32 %v457, %v4672
    %v4674 = vand.u32 %v4673, 4294901760
    %4675 = vmatmul.mubr.f32.gmra.mrb[0].mxu0 %v4674
    %v4676 = vpop.f32.mrb[0].mxu0
    %v4677 = vadd.f32 %v4570, %v4676
    %v4678 = vpop.f32.mrb[0].mxu0
    %v4679 = vand.u32 %v475, 4294901760
    %v4680 = vsub.f32 %v475, %v4679
    %v4681 = vand.u32 %v4680, 4294901760
    %4682 = vmatprep.mubr.f32.mxu0 %v4681
    %v4683 = vand.u32 %v467, 4294901760
    %v4684 = vsub.f32 %v467, %v4683
    %v4685 = vand.u32 %v4684, 4294901760
    %4686 = vmatmul.mubr.f32.gmra.mrb[0].mxu0 %v4685
    %v4687 = vpop.f32.mrb[0].mxu0
    %v4688 = vadd.f32 %v4579, %v4687
    %v4689 = vpop.f32.mrb[0].mxu0
    %4690 = vdwg.mxu0
    %4691 = vmatprep.subr.mxu0 0.0
    %v4692 = vand.u32 %v427, 4294901760
    %v4693 = vsub.f32 %v427, %v4692
    %v4694 = vand.u32 %v4693, 4294901760
    %4695 = vmatpush1.msra.mxu0 %v4694
    %4696 = vmatprep.subr.mxu0 0.0
    %v4697 = vand.u32 %v428, 4294901760
    %v4698 = vsub.f32 %v428, %v4697
    %v4699 = vand.u32 %v4698, 4294901760
    %4700 = vmatpush1.msra.mxu0 %v4699
    %4701 = vmatprep.subr.mxu0 0.0
    %v4702 = vand.u32 %v429, 4294901760
    %v4703 = vsub.f32 %v429, %v4702
    %v4704 = vand.u32 %v4703, 4294901760
    %4705 = vmatpush1.msra.mxu0 %v4704
    %4706 = vmatprep.subr.mxu0 0.0
    %v4707 = vand.u32 %v430, 4294901760
    %v4708 = vsub.f32 %v430, %v4707
    %v4709 = vand.u32 %v4708, 4294901760
    %4710 = vmatpush1.msra.mxu0 %v4709
    %4711 = vmatprep.subr.mxu0 0.0
    %v4712 = vand.u32 %v431, 4294901760
    %v4713 = vsub.f32 %v431, %v4712
    %v4714 = vand.u32 %v4713, 4294901760
    %4715 = vmatpush1.msra.mxu0 %v4714
    %4716 = vmatprep.subr.mxu0 0.0
    %v4717 = vand.u32 %v432, 4294901760
    %v4718 = vsub.f32 %v432, %v4717
    %v4719 = vand.u32 %v4718, 4294901760
    %4720 = vmatpush1.msra.mxu0 %v4719
    %4721 = vmatprep.subr.mxu0 0.0
    %v4722 = vand.u32 %v433, 4294901760
    %v4723 = vsub.f32 %v433, %v4722
    %v4724 = vand.u32 %v4723, 4294901760
    %4725 = vmatpush1.msra.mxu0 %v4724
    %4726 = vmatprep.subr.mxu0 0.0
    %v4727 = vand.u32 %v434, 4294901760
    %v4728 = vsub.f32 %v434, %v4727
    %v4729 = vand.u32 %v4728, 4294901760
    %4730 = vmatpush1.msra.mxu0 %v4729
    %4731 = vmatprep.subr.mxu0 0.0
    %v4732 = vand.u32 %v435, 4294901760
    %v4733 = vsub.f32 %v435, %v4732
    %v4734 = vand.u32 %v4733, 4294901760
    %4735 = vmatpush1.msra.mxu0 %v4734
    %4736 = vmatprep.subr.mxu0 0.0
    %v4737 = vand.u32 %v436, 4294901760
    %v4738 = vsub.f32 %v436, %v4737
    %v4739 = vand.u32 %v4738, 4294901760
    %4740 = vmatpush1.msra.mxu0 %v4739
    %4741 = vmatprep.subr.mxu0 0.0
    %v4742 = vand.u32 %v437, 4294901760
    %v4743 = vsub.f32 %v437, %v4742
    %v4744 = vand.u32 %v4743, 4294901760
    %4745 = vmatpush1.msra.mxu0 %v4744
    %4746 = vmatprep.subr.mxu0 0.0
    %v4747 = vand.u32 %v438, 4294901760
    %v4748 = vsub.f32 %v438, %v4747
    %v4749 = vand.u32 %v4748, 4294901760
    %4750 = vmatpush1.msra.mxu0 %v4749
    %4751 = vmatprep.subr.mxu0 0.0
    %v4752 = vand.u32 %v439, 4294901760
    %v4753 = vsub.f32 %v439, %v4752
    %v4754 = vand.u32 %v4753, 4294901760
    %4755 = vmatpush1.msra.mxu0 %v4754
    %4756 = vmatprep.subr.mxu0 0.0
    %v4757 = vand.u32 %v440, 4294901760
    %v4758 = vsub.f32 %v440, %v4757
    %v4759 = vand.u32 %v4758, 4294901760
    %4760 = vmatpush1.msra.mxu0 %v4759
    %4761 = vmatprep.subr.mxu0 0.0
    %v4762 = vand.u32 %v441, 4294901760
    %v4763 = vsub.f32 %v441, %v4762
    %v4764 = vand.u32 %v4763, 4294901760
    %4765 = vmatpush1.msra.mxu0 %v4764
    %4766 = vmatprep.subr.mxu0 0.0
    %v4767 = vand.u32 %v442, 4294901760
    %v4768 = vsub.f32 %v442, %v4767
    %v4769 = vand.u32 %v4768, 4294901760
    %4770 = vmatpush1.msra.mxu0 %v4769
    %4771 = vmatprep.subr.mxu0 0.0
    %v4772 = vand.u32 %v443, 4294901760
    %v4773 = vsub.f32 %v443, %v4772
    %v4774 = vand.u32 %v4773, 4294901760
    %4775 = vmatpush1.msra.mxu0 %v4774
    %4776 = vmatprep.subr.mxu0 0.0
    %v4777 = vand.u32 %v444, 4294901760
    %v4778 = vsub.f32 %v444, %v4777
    %v4779 = vand.u32 %v4778, 4294901760
    %4780 = vmatpush1.msra.mxu0 %v4779
    %4781 = vmatprep.subr.mxu0 0.0
    %v4782 = vand.u32 %v445, 4294901760
    %v4783 = vsub.f32 %v445, %v4782
    %v4784 = vand.u32 %v4783, 4294901760
    %4785 = vmatpush1.msra.mxu0 %v4784
    %4786 = vmatprep.subr.mxu0 0.0
    %v4787 = vand.u32 %v446, 4294901760
    %v4788 = vsub.f32 %v446, %v4787
    %v4789 = vand.u32 %v4788, 4294901760
    %4790 = vmatpush1.msra.mxu0 %v4789
    %4791 = vmatprep.subr.mxu0 0.0
    %v4792 = vand.u32 %v447, 4294901760
    %v4793 = vsub.f32 %v447, %v4792
    %v4794 = vand.u32 %v4793, 4294901760
    %4795 = vmatpush1.msra.mxu0 %v4794
    %4796 = vmatprep.subr.mxu0 0.0
    %v4797 = vand.u32 %v448, 4294901760
    %v4798 = vsub.f32 %v448, %v4797
    %v4799 = vand.u32 %v4798, 4294901760
    %4800 = vmatpush1.msra.mxu0 %v4799
    %4801 = vmatprep.subr.mxu0 0.0
    %4802 = vmatpush1.msra.mxu0 0.0
    %4803 = vmatprep.subr.mxu0 0.0
    %4804 = vmatpush1.msra.mxu0 0.0
    %4805 = vmatprep.subr.mxu0 0.0
    %4806 = vmatpush1.msra.mxu0 0.0
    %4807 = vmatprep.subr.mxu0 0.0
    %4808 = vmatpush1.msra.mxu0 0.0
    %4809 = vmatprep.subr.mxu0 0.0
    %4810 = vmatpush1.msra.mxu0 0.0
    %4811 = vmatprep.subr.mxu0 0.0
    %4812 = vmatpush1.msra.mxu0 0.0
    %4813 = vmatprep.subr.mxu0 0.0
    %4814 = vmatpush1.msra.mxu0 0.0
    %4815 = vmatprep.subr.mxu0 0.0
    %4816 = vmatpush1.msra.mxu0 0.0
    %4817 = vmatprep.subr.mxu0 0.0
    %4818 = vmatpush1.msra.mxu0 0.0
    %4819 = vmatprep.subr.mxu0 0.0
    %4820 = vmatpush1.msra.mxu0 0.0
    %v4821 = vand.u32 %v472, 4294901760
    %4822 = vmatprep.mubr.f32.mxu0 %v4821
    %v4823 = vand.u32 %v457, 4294901760
    %4824 = vmatmul.mubr.f32.gmra.mrb[0].mxu0 %v4823
    %v4825 = vpop.f32.mrb[0].mxu0
    %v4826 = vadd.f32 %v4677, %v4825
    %v4827 = vpop.f32.mrb[0].mxu0
    %v4828 = vand.u32 %v475, 4294901760
    %4829 = vmatprep.mubr.f32.mxu0 %v4828
    %v4830 = vand.u32 %v467, 4294901760
    %4831 = vmatmul.mubr.f32.gmra.mrb[0].mxu0 %v4830
    %v4832 = vpop.f32.mrb[0].mxu0
    %v4833 = vadd.f32 %v4688, %v4832
    %v4834 = vpop.f32.mrb[0].mxu0
    %4835 = vdwg.mxu0
    %4836 = vmatprep.subr.mxu0 0.0
    %v4837 = vand.u32 %v427, 4294901760
    %4838 = vmatpush1.msra.mxu0 %v4837
    %4839 = vmatprep.subr.mxu0 0.0
    %v4840 = vand.u32 %v428, 4294901760
    %4841 = vmatpush1.msra.mxu0 %v4840
    %4842 = vmatprep.subr.mxu0 0.0
    %v4843 = vand.u32 %v429, 4294901760
    %4844 = vmatpush1.msra.mxu0 %v4843
    %4845 = vmatprep.subr.mxu0 0.0
    %v4846 = vand.u32 %v430, 4294901760
    %4847 = vmatpush1.msra.mxu0 %v4846
    %4848 = vmatprep.subr.mxu0 0.0
    %v4849 = vand.u32 %v431, 4294901760
    %4850 = vmatpush1.msra.mxu0 %v4849
    %4851 = vmatprep.subr.mxu0 0.0
    %v4852 = vand.u32 %v432, 4294901760
    %4853 = vmatpush1.msra.mxu0 %v4852
    %4854 = vmatprep.subr.mxu0 0.0
    %v4855 = vand.u32 %v433, 4294901760
    %4856 = vmatpush1.msra.mxu0 %v4855
    %4857 = vmatprep.subr.mxu0 0.0
    %v4858 = vand.u32 %v434, 4294901760
    %4859 = vmatpush1.msra.mxu0 %v4858
    %4860 = vmatprep.subr.mxu0 0.0
    %v4861 = vand.u32 %v435, 4294901760
    %4862 = vmatpush1.msra.mxu0 %v4861
    %4863 = vmatprep.subr.mxu0 0.0
    %v4864 = vand.u32 %v436, 4294901760
    %4865 = vmatpush1.msra.mxu0 %v4864
    %4866 = vmatprep.subr.mxu0 0.0
    %v4867 = vand.u32 %v437, 4294901760
    %4868 = vmatpush1.msra.mxu0 %v4867
    %4869 = vmatprep.subr.mxu0 0.0
    %v4870 = vand.u32 %v438, 4294901760
    %4871 = vmatpush1.msra.mxu0 %v4870
    %4872 = vmatprep.subr.mxu0 0.0
    %v4873 = vand.u32 %v439, 4294901760
    %4874 = vmatpush1.msra.mxu0 %v4873
    %4875 = vmatprep.subr.mxu0 0.0
    %v4876 = vand.u32 %v440, 4294901760
    %4877 = vmatpush1.msra.mxu0 %v4876
    %4878 = vmatprep.subr.mxu0 0.0
    %v4879 = vand.u32 %v441, 4294901760
    %4880 = vmatpush1.msra.mxu0 %v4879
    %4881 = vmatprep.subr.mxu0 0.0
    %v4882 = vand.u32 %v442, 4294901760
    %4883 = vmatpush1.msra.mxu0 %v4882
    %4884 = vmatprep.subr.mxu0 0.0
    %v4885 = vand.u32 %v443, 4294901760
    %4886 = vmatpush1.msra.mxu0 %v4885
    %4887 = vmatprep.subr.mxu0 0.0
    %v4888 = vand.u32 %v444, 4294901760
    %4889 = vmatpush1.msra.mxu0 %v4888
    %4890 = vmatprep.subr.mxu0 0.0
    %v4891 = vand.u32 %v445, 4294901760
    %4892 = vmatpush1.msra.mxu0 %v4891
    %4893 = vmatprep.subr.mxu0 0.0
    %v4894 = vand.u32 %v446, 4294901760
    %4895 = vmatpush1.msra.mxu0 %v4894
    %4896 = vmatprep.subr.mxu0 0.0
    %v4897 = vand.u32 %v447, 4294901760
    %4898 = vmatpush1.msra.mxu0 %v4897
    %4899 = vmatprep.subr.mxu0 0.0
    %v4900 = vand.u32 %v448, 4294901760
    %4901 = vmatpush1.msra.mxu0 %v4900
    %4902 = vmatprep.subr.mxu0 0.0
    %4903 = vmatpush1.msra.mxu0 0.0
    %4904 = vmatprep.subr.mxu0 0.0
    %4905 = vmatpush1.msra.mxu0 0.0
    %4906 = vmatprep.subr.mxu0 0.0
    %4907 = vmatpush1.msra.mxu0 0.0
    %4908 = vmatprep.subr.mxu0 0.0
    %4909 = vmatpush1.msra.mxu0 0.0
    %4910 = vmatprep.subr.mxu0 0.0
    %4911 = vmatpush1.msra.mxu0 0.0
    %4912 = vmatprep.subr.mxu0 0.0
    %4913 = vmatpush1.msra.mxu0 0.0
    %4914 = vmatprep.subr.mxu0 0.0
    %4915 = vmatpush1.msra.mxu0 0.0
    %4916 = vmatprep.subr.mxu0 0.0
    %4917 = vmatpush1.msra.mxu0 0.0
    %4918 = vmatprep.subr.mxu0 0.0
    %4919 = vmatpush1.msra.mxu0 0.0
    %4920 = vmatprep.subr.mxu0 0.0
    %4921 = vmatpush1.msra.mxu0 0.0
    %v4922 = vand.u32 %v472, 4294901760
    %4923 = vmatprep.mubr.f32.mxu0 %v4922
    %v4924 = vand.u32 %v457, 4294901760
    %4925 = vmatmul.mubr.f32.gmra.mrb[0].mxu0 %v4924
    %v4926 = vpop.f32.mrb[0].mxu0
    %v4927 = vadd.f32 %v4826, %v4926
    %v4928 = vpop.f32.mrb[0].mxu0
    %v4929 = vand.u32 %v475, 4294901760
    %4930 = vmatprep.mubr.f32.mxu0 %v4929
    %v4931 = vand.u32 %v467, 4294901760
    %4932 = vmatmul.mubr.f32.gmra.mrb[0].mxu0 %v4931
    %v4933 = vpop.f32.mrb[0].mxu0
    %v4934 = vadd.f32 %v4833, %v4933
    %v4935 = vpop.f32.mrb[0].mxu0
    %4936 = vdwg.mxu0
    %v4937 = vxor.u32 %v4927, 2147483648
    %v4938 = vxor.u32 %v4934, 2147483648
    %v4939 = vmul.f32 %v4937, 1.442695
    %v4940 = vpow.pop %v4939
    %v4941 = vmul.f32 %v4938, 1.442695
    %v4942 = vpow.pop %v4941
    %v4943 = vadd.f32 %v4940, 1.0
    %v4944 = vadd.f32 %v4942, 1.0
    %v4945 = vrcp.pop %v4943
    %v4946 = vmul.f32 1.0, %v4945
    %v4947 = vrcp.pop %v4944
    %v4948 = vmul.f32 1.0, %v4947
    %s4949 = smul.u32 %s292, 16
    %s4950 = scalar_lea.vmem %s3, %s4949
    %4951 = vst.msk [vmem:[%s4950] sm:$0xff] %vm15, %v4946
    %4952 = vst.msk [vmem:[%s4950 + $0x8] sm:$0xff] %vm15, %v4948
  $region18: #{tpu_custom_call.1} parent=0 // loop_footer
    %s296 = sadd.s32 1, %s292
  $region19: #{tpu_custom_call.1} parent=0 // loop_footer_branch
    %291 = sbr.rel target = $region15
  $region20: #{tpu_custom_call.1} parent=0 // loop_exit
    _
  // Predicated region
  $region21: #{tpu_custom_call.1} parent=0 // pred_check
    _
  $region22: #{tpu_custom_call.1} parent=0 // pred_check_branch
    %4954 = sbr.rel (0) target = $region24
  $region23: #{tpu_custom_call.1} parent=0 // pred_region
    _
  $region24: #{tpu_custom_call.1} parent=0 // pred_fallthru
    _
  // Predicated region
  $region25: #{tpu_custom_call.1} parent=0 // pred_check
    _
  $region26: #{tpu_custom_call.1} parent=0 // pred_check_branch
    %4956 = sbr.rel (0) target = $region28
  $region27: #{tpu_custom_call.1} parent=0 // pred_region
    _
  $region28: #{tpu_custom_call.1} parent=0 // pred_fallthru
    _

</llo_original>
